<compile_context>
chip_gen: v5e
topology: v5e:2x2
jax: 0.10.0
libtpu: 0.0.40
codegen_flags: <defaults>
</compile_context>

<pallas_src>
import numpy as np
import jax
import jax.numpy as jnp
from jax import lax
from jax.experimental import pallas as pl
from jax.experimental.pallas import tpu as pltpu

_BN_EPS = 1e-5
_BN_FOLD = float(1.0 / np.sqrt(1.0 + _BN_EPS))   # eval-mode BN per-channel scale
_LANES = 128                                     # lane-dense padding for tiny outputs


def _point_tile(P):
    """Largest point-chunk that divides P (keeps conv3 chunk <= 2 MiB f32)."""
    for tp in (512, 256, 128):
        if P % tp == 0:
            return tp
    return P


# ----------------------------------------------------------------------------
# Kernel 1: full STN3d forward + fused torch.bmm(pos, trans), one launch.
# Grid: (B,) over graphs; every weight is VMEM-resident (constant index maps).
# ----------------------------------------------------------------------------
def _stn_kernel(pos_ref,
                w1_ref, b1_ref, w2_ref, b2_ref, w3_ref, b3_ref,
                wf1_ref, bf1_ref, wf2_ref, bf2_ref, wf3_ref, bf3_ref,
                trans_ref, posout_ref):
    f32 = jnp.float32
    bf16 = jnp.bfloat16

    P = pos_ref.shape[1]
    TP = _point_tile(P)
    nchunks = P // TP

    # Hoisted weight loads (constant index maps -> VMEM-resident, loop-invariant).
    w1 = w1_ref[...].astype(f32)                         # (3, 64): conv1 on the VPU
    b1 = b1_ref[...]
    w2, b2 = w2_ref[...], b2_ref[...]
    w3, b3 = w3_ref[...], b3_ref[...]

    def chunk_body(i, gmax):
        s = pl.multiple_of(i * TP, TP)
        pc = pos_ref[0, pl.ds(s, TP), :]                 # (TP, 3) f32 point chunk
        # conv1+bn1+relu, K=3: VPU broadcast-FMAs (MXU slot stays free, no
        # lane-sparse (TP,3) operand relayout).
        h = jnp.maximum(pc[:, 0:1] * w1[0:1, :] +
                        pc[:, 1:2] * w1[1:2, :] +
                        pc[:, 2:3] * w1[2:3, :] + b1, 0.0)            # (TP, 64)
        h = jnp.maximum(jnp.dot(h.astype(bf16), w2,
                                preferred_element_type=f32) + b2, 0.0)  # (TP, 128)
        h = jnp.maximum(jnp.dot(h.astype(bf16), w3,
                                preferred_element_type=f32) + b3, 0.0)  # (TP, 1024)
        return jnp.maximum(gmax, jnp.max(h, axis=0, keepdims=True))

    g = lax.fori_loop(0, nchunks, chunk_body,
                      jnp.full((1, 1024), -jnp.inf, dtype=f32))        # (1, 1024)

    def lin_relu(x, w_ref, b_ref):                       # relu(x @ W' + b'); BN folded
        y = jnp.dot(x.astype(bf16), w_ref[...], preferred_element_type=f32)
        return jnp.maximum(y + b_ref[...], 0.0)

    g = lin_relu(g, wf1_ref, bf1_ref)                    # (1, 512)   fc1+bn4+relu
    g = lin_relu(g, wf2_ref, bf2_ref)                    # (1, 256)   fc2+bn5+relu
    t = jnp.dot(g.astype(bf16), wf3_ref[...],
                preferred_element_type=f32) + bf3_ref[...]   # (1, 128): 9 trans
    trans_ref[0] = t                                         # entries (+iden), rest 0

    # torch.bmm(pos, trans): VPU broadcast-FMA formulation (skip the MXU; K=N=3)
    p = pos_ref[0]                                        # (P, 3)
    posout_ref[0] = (p[:, 0:1] * t[:, 0:3] +
                     p[:, 1:2] * t[:, 3:6] +
                     p[:, 2:3] * t[:, 6:9])


def stn_and_transform(pos_bp3, stn_params):
    """pos_bp3: (B, P, 3) channels-last. Returns (trans (B,3,3), pos@trans (B,P,3))."""
    B, P, _ = pos_bp3.shape
    flat = []
    for (w, b) in stn_params:
        flat += [w, b]
    trans_pad, pos_out = pl.pallas_call(
        _stn_kernel,
        out_shape=(jax.ShapeDtypeStruct((B, 1, _LANES), jnp.float32),
                   jax.ShapeDtypeStruct((B, P, 3), jnp.float32)),
        grid=(B,),
        in_specs=[pl.BlockSpec((1, P, 3), lambda b: (b, 0, 0))]
                 + [pl.BlockSpec(a.shape, lambda b: (0, 0)) for a in flat],
        out_specs=(pl.BlockSpec((1, 1, _LANES), lambda b: (b, 0, 0)),
                   pl.BlockSpec((1, P, 3), lambda b: (b, 0, 0))),
        compiler_params=pltpu.CompilerParams(dimension_semantics=("parallel",)),
    )(pos_bp3, *flat)
    trans = trans_pad[:, 0, :9].reshape(B, 3, 3)
    return trans, pos_out


# ----------------------------------------------------------------------------
# Kernel 2: lin1 (encode) + lin2/head MLP/final Linear (decode), one launch.
# Grid: large row tiles (>=2 steps for v7x); weights VMEM-resident; concat
# folded into two dot accumulations; f32 inputs cast to bf16 IN-kernel; bf16
# lane-dense (128-wide) outputs, sliced outside.
# ----------------------------------------------------------------------------
def _point_mlp_kernel(x1_ref, x2_ref, d1_ref, d2_ref,
                      wl1a_ref, wl1b_ref, bl1_ref,
                      wl2a_ref, wl2b_ref, bl2_ref,
                      wh1_ref, bh1_ref, wh2_ref, bh2_ref,
                      wout_ref, bout_ref,
                      enc_ref, out_ref):
    f32 = jnp.float32
    bf16 = jnp.bfloat16

    # Cast under the DMA: inputs arrive f32, MXU operands are bf16, accum f32.
    x1 = x1_ref[...].astype(bf16)
    x2 = x2_ref[...].astype(bf16)
    d1 = d1_ref[...].astype(bf16)
    d2 = d2_ref[...].astype(bf16)

    # lin1 = MLP([128+64, 128]) on cat([x1, x2]) -> split-weight accumulation
    e = jnp.dot(x1, wl1a_ref[...], preferred_element_type=f32)
    e = e + jnp.dot(x2, wl1b_ref[...], preferred_element_type=f32)
    e = jnp.maximum(e + bl1_ref[...], 0.0)
    enc_ref[...] = e.astype(bf16)

    # lin2 = MLP([128+64, 128]) on cat([dec1, dec2])
    o = jnp.dot(d1, wl2a_ref[...], preferred_element_type=f32)
    o = o + jnp.dot(d2, wl2b_ref[...], preferred_element_type=f32)
    o = jnp.maximum(o + bl2_ref[...], 0.0)

    # head: MLP([128,256]) -> Dropout(id) -> MLP([256,64]) -> Dropout(id) -> Lin
    o = jnp.maximum(jnp.dot(o.astype(bf16), wh1_ref[...],
                            preferred_element_type=f32) + bh1_ref[...], 0.0)
    o = jnp.maximum(jnp.dot(o.astype(bf16), wh2_ref[...],
                            preferred_element_type=f32) + bh2_ref[...], 0.0)
    out_ref[...] = (jnp.dot(o.astype(bf16), wout_ref[...],
                            preferred_element_type=f32) + bout_ref[...]).astype(bf16)


def point_mlp(x1, x2, d1, d2, mlp_params, out_channels):
    N = x1.shape[0]
    # Row tile: as large as practical (per-grid-step overhead / HBM roofline),
    # but capped so the grid keeps >= 2 steps for v7x's two TensorCores.
    tm = max(128, min(1024, (N // 2 // 128) * 128))
    npad = pl.cdiv(N, tm) * tm

    def pad_rows(a):                       # row-tail padding only; no dtype cast here
        return a if npad == N else jnp.pad(a, ((0, npad - N), (0, 0)))

    x1, x2, d1, d2 = pad_rows(x1), pad_rows(x2), pad_rows(d1), pad_rows(d2)
    flat = list(mlp_params)
    enc, outp = pl.pallas_call(
        _point_mlp_kernel,
        out_shape=(jax.ShapeDtypeStruct((npad, 128), jnp.bfloat16),
                   jax.ShapeDtypeStruct((npad, _LANES), jnp.bfloat16)),
        grid=(npad // tm,),
        in_specs=[pl.BlockSpec((tm, 64), lambda i: (i, 0)),
                  pl.BlockSpec((tm, 128), lambda i: (i, 0)),
                  pl.BlockSpec((tm, 64), lambda i: (i, 0)),
                  pl.BlockSpec((tm, 128), lambda i: (i, 0))]
                 + [pl.BlockSpec(a.shape, lambda i: (0, 0)) for a in flat],
        out_specs=(pl.BlockSpec((tm, 128), lambda i: (i, 0)),
                   pl.BlockSpec((tm, _LANES), lambda i: (i, 0))),
        compiler_params=pltpu.CompilerParams(dimension_semantics=("parallel",)),
    )(x1, x2, d1, d2, *flat)
    return enc[:N], outp[:N, :out_channels]


# ----------------------------------------------------------------------------
# Parameter construction (deterministic, PyTorch-default-style uniform init)
# with eval-mode BN and the STN identity folded into W / b at init time.
# ----------------------------------------------------------------------------
def _init_linear(key, in_f, out_f, *, bn_fold, pad_to=None, bias_extra=None):
    k1, k2 = jax.random.split(key)
    bound = 1.0 / np.sqrt(in_f)
    w = jax.random.uniform(k1, (in_f, out_f), jnp.float32, -bound, bound)
    b = jax.random.uniform(k2, (1, out_f), jnp.float32, -bound, bound)
    if bn_fold:
        # BN(relu(xW+b)) and relu(BN(xW+b)) with default running stats both
        # reduce to relu(x (s W) + s b),  s = 1/sqrt(1+eps) > 0, shift = 0.
        w = w * _BN_FOLD
        b = b * _BN_FOLD
    if bias_extra is not None:
        b = b + bias_extra
    if pad_to is not None and pad_to > out_f:          # lane-densify tiny outputs
        w = jnp.pad(w, ((0, 0), (0, pad_to - out_f)))
        b = jnp.pad(b, ((0, 0), (0, pad_to - out_f)))
    return w.astype(jnp.bfloat16), b                    # bf16 weights, f32 bias


def init_stn(key):
    ks = jax.random.split(key, 6)
    iden = jnp.eye(3, dtype=jnp.float32).reshape(1, 9)   # folded into fc3 bias
    return [
        _init_linear(ks[0], 3, 64, bn_fold=True),        # conv1 + bn1
        _init_linear(ks[1], 64, 128, bn_fold=True),       # conv2 + bn2
        _init_linear(ks[2], 128, 1024, bn_fold=True),     # conv3 + bn3
        _init_linear(ks[3], 1024, 512, bn_fold=True),     # fc1 + bn4
        _init_linear(ks[4], 512, 256, bn_fold=True),      # fc2 + bn5
        _init_linear(ks[5], 256, 9, bn_fold=False,
                     pad_to=_LANES, bias_extra=iden),     # fc3 (+ identity)
    ]


def init_point_mlp(key, out_channels):
    ks = jax.random.split(key, 5)
    wl1, bl1 = _init_linear(ks[0], 192, 128, bn_fold=True)   # lin1 = MLP([192,128])
    wl2, bl2 = _init_linear(ks[1], 192, 128, bn_fold=True)   # lin2 = MLP([192,128])
    wh1, bh1 = _init_linear(ks[2], 128, 256, bn_fold=True)   # MLP([128,256])
    wh2, bh2 = _init_linear(ks[3], 256, 64, bn_fold=True)    # MLP([256,64])
    wout, bout = _init_linear(ks[4], 64, out_channels,
                              bn_fold=False, pad_to=_LANES)  # Lin(64, out)
    # cat([x1(64), x2(128)]) @ W  ==  x1 @ W[:64] + x2 @ W[64:]
    return [wl1[:64], wl1[64:], bl1,
            wl2[:64], wl2[64:], bl2,
            wh1, bh1, wh2, bh2, wout, bout]


def init_net(key, out_channels):
    k_stn, k_mlp = jax.random.split(key)
    return {"stn": init_stn(k_stn), "mlp": init_point_mlp(k_mlp, out_channels)}


# ----------------------------------------------------------------------------
# Net (translatable subset)
# ----------------------------------------------------------------------------
def net_forward(data_x, batch_size, params, out_channels,
                x1_feat, x2_feat, dec1_feat, dec2_feat):
    """Translatable subset of Net.forward.

    data_x: (N, 4) with column 0 = sequence number, columns 1:4 = positions.
    x*_feat / dec*_feat: stand-ins for the undefined edge-conv outputs.
    """
    pos = data_x[:, 1:].reshape(batch_size, -1, 3)          # (B, P, 3) channels-last

    # encode: STN transform + torch.bmm, one fused Pallas kernel
    trans, pos_t = stn_and_transform(pos, params["stn"])    # (B,3,3), (B,P,3)
    pos_t = pos_t.reshape(-1, 3)

    # TODO(synk): self.conv1/self.conv2/self.deconv1-3
    # (TemporalSelfAttentionDynamicEdgeConv / TemporalDecoder) are undefined in
    # the reference source; x*_feat / dec*_feat stand in for their outputs.
    encoded, out = point_mlp(x1_feat, x2_feat, dec1_feat, dec2_feat,
                             params["mlp"], out_channels)
    return pos_t, trans, encoded, out


# ----------------------------------------------------------------------------
if __name__ == "__main__":
    key = jax.random.PRNGKey(0)
    B = 2            # graphs in the batch
    P = 128          # points per graph (decode() assumes 128-point frames)
    N = B * P
    OUT_CHANNELS = 3

    k_pos, k_x1, k_x2, k_d1, k_d2, k_params = jax.random.split(key, 6)

    seq_numbers = jnp.tile(jnp.arange(P, dtype=jnp.float32) % 10, (B,)).reshape(N, 1)
    positions = jax.random.normal(k_pos, (N, 3), jnp.float32)
    data_x = jnp.concatenate([seq_numbers, positions], axis=-1)   # (N, 4)

    # deterministic stand-in features for the undefined edge-conv layers
    x1_feat = jax.random.normal(k_x1, (N, 64), jnp.float32)
    x2_feat = jax.random.normal(k_x2, (N, 128), jnp.float32)
    dec1_feat = jax.random.normal(k_d1, (N, 64), jnp.float32)
    dec2_feat = jax.random.normal(k_d2, (N, 128), jnp.float32)

    params = init_net(k_params, OUT_CHANNELS)

    pos_t, trans, encoded, out = net_forward(
        data_x, B, params, OUT_CHANNELS, x1_feat, x2_feat, dec1_feat, dec2_feat)

    jax.block_until_ready((pos_t, trans, encoded, out))
    assert trans.shape == (B, 3, 3)
    assert pos_t.shape == (N, 3)
    assert encoded.shape == (N, 128)
    assert out.shape == (N, OUT_CHANNELS)
    print("KERNEL_OK")
</pallas_src>

<mosaic_0001>
module attributes {stable_mosaic.version = 11 : i64} {
  func.func @_stn_kernel(%arg0: i32, %arg1: memref<1x128x3xf32, #tpu.memory_space<vmem>>, %arg2: memref<3x64xbf16, #tpu.memory_space<vmem>>, %arg3: memref<1x64xf32, #tpu.memory_space<vmem>>, %arg4: memref<64x128xbf16, #tpu.memory_space<vmem>>, %arg5: memref<1x128xf32, #tpu.memory_space<vmem>>, %arg6: memref<128x1024xbf16, #tpu.memory_space<vmem>>, %arg7: memref<1x1024xf32, #tpu.memory_space<vmem>>, %arg8: memref<1024x512xbf16, #tpu.memory_space<vmem>>, %arg9: memref<1x512xf32, #tpu.memory_space<vmem>>, %arg10: memref<512x256xbf16, #tpu.memory_space<vmem>>, %arg11: memref<1x256xf32, #tpu.memory_space<vmem>>, %arg12: memref<256x128xbf16, #tpu.memory_space<vmem>>, %arg13: memref<1x128xf32, #tpu.memory_space<vmem>>, %arg14: memref<1x1x128xf32, #tpu.memory_space<vmem>>, %arg15: memref<1x128x3xf32, #tpu.memory_space<vmem>>) attributes {dimension_semantics = [#tpu.dimension_semantics<parallel>], iteration_bounds = array<i64: 2>, scalar_prefetch = 0 : i64, scratch_operands = 0 : i64, tpu.core_type = #tpu.core_type<tc>, window_params = [{transform_indices = @transform_0, window_bounds = array<i64: 1, 128, 3>}, {pipeline_mode = #tpu.pipeline_mode<synchronous>, transform_indices = @transform_1, window_bounds = array<i64: 3, 64>}, {pipeline_mode = #tpu.pipeline_mode<synchronous>, transform_indices = @transform_2, window_bounds = array<i64: 1, 64>}, {pipeline_mode = #tpu.pipeline_mode<synchronous>, transform_indices = @transform_3, window_bounds = array<i64: 64, 128>}, {pipeline_mode = #tpu.pipeline_mode<synchronous>, transform_indices = @transform_4, window_bounds = array<i64: 1, 128>}, {pipeline_mode = #tpu.pipeline_mode<synchronous>, transform_indices = @transform_5, window_bounds = array<i64: 128, 1024>}, {pipeline_mode = #tpu.pipeline_mode<synchronous>, transform_indices = @transform_6, window_bounds = array<i64: 1, 1024>}, {pipeline_mode = #tpu.pipeline_mode<synchronous>, transform_indices = @transform_7, window_bounds = array<i64: 1024, 512>}, {pipeline_mode = #tpu.pipeline_mode<synchronous>, transform_indices = @transform_8, window_bounds = array<i64: 1, 512>}, {pipeline_mode = #tpu.pipeline_mode<synchronous>, transform_indices = @transform_9, window_bounds = array<i64: 512, 256>}, {pipeline_mode = #tpu.pipeline_mode<synchronous>, transform_indices = @transform_10, window_bounds = array<i64: 1, 256>}, {pipeline_mode = #tpu.pipeline_mode<synchronous>, transform_indices = @transform_11, window_bounds = array<i64: 256, 128>}, {pipeline_mode = #tpu.pipeline_mode<synchronous>, transform_indices = @transform_12, window_bounds = array<i64: 1, 128>}, {transform_indices = @transform_13, window_bounds = array<i64: 1, 1, 128>}, {transform_indices = @transform_14, window_bounds = array<i64: 1, 128, 3>}]} {
    %c0 = arith.constant 0 : index
    %c0_0 = arith.constant 0 : index
    %0 = vector.load %arg2[%c0, %c0_0] : memref<3x64xbf16, #tpu.memory_space<vmem>>, vector<3x64xbf16>
    %1 = arith.extf %0 : vector<3x64xbf16> to vector<3x64xf32>
    %c0_1 = arith.constant 0 : index
    %c0_2 = arith.constant 0 : index
    %2 = vector.load %arg3[%c0_1, %c0_2] : memref<1x64xf32, #tpu.memory_space<vmem>>, vector<1x64xf32>
    %c0_3 = arith.constant 0 : index
    %c0_4 = arith.constant 0 : index
    %3 = vector.load %arg4[%c0_3, %c0_4] : memref<64x128xbf16, #tpu.memory_space<vmem>>, vector<64x128xbf16>
    %c0_5 = arith.constant 0 : index
    %c0_6 = arith.constant 0 : index
    %4 = vector.load %arg5[%c0_5, %c0_6] : memref<1x128xf32, #tpu.memory_space<vmem>>, vector<1x128xf32>
    %c0_7 = arith.constant 0 : index
    %c0_8 = arith.constant 0 : index
    %5 = vector.load %arg6[%c0_7, %c0_8] : memref<128x1024xbf16, #tpu.memory_space<vmem>>, vector<128x1024xbf16>
    %c0_9 = arith.constant 0 : index
    %c0_10 = arith.constant 0 : index
    %6 = vector.load %arg7[%c0_9, %c0_10] : memref<1x1024xf32, #tpu.memory_space<vmem>>, vector<1x1024xf32>
    %cst = arith.constant 0xFF800000 : f32
    %7 = vector.broadcast %cst : f32 to vector<1x1024xf32>
    %c0_i32 = arith.constant 0 : i32
    %c128_i32 = arith.constant 128 : i32
    %8 = arith.muli %c0_i32, %c128_i32 : i32
    %9 = tpu.assume_multiple %8, 128 : i32
    %c0_11 = arith.constant 0 : index
    %10 = arith.index_cast %9 : i32 to index
    %c0_12 = arith.constant 0 : index
    %11 = vector.load %arg1[%c0_11, %10, %c0_12] : memref<1x128x3xf32, #tpu.memory_space<vmem>>, vector<1x128x3xf32>
    %12 = vector.shape_cast %11 : vector<1x128x3xf32> to vector<128x3xf32>
    %13 = vector.extract_strided_slice %12 {offsets = [0, 0], sizes = [128, 1], strides = [1, 1]} : vector<128x3xf32> to vector<128x1xf32>
    %14 = vector.extract_strided_slice %1 {offsets = [0, 0], sizes = [1, 64], strides = [1, 1]} : vector<3x64xf32> to vector<1x64xf32>
    %15 = vector.broadcast %13 : vector<128x1xf32> to vector<128x64xf32>
    %16 = vector.broadcast %14 : vector<1x64xf32> to vector<128x64xf32>
    %17 = arith.mulf %15, %16 : vector<128x64xf32>
    %18 = vector.extract_strided_slice %12 {offsets = [0, 1], sizes = [128, 1], strides = [1, 1]} : vector<128x3xf32> to vector<128x1xf32>
    %19 = vector.extract_strided_slice %1 {offsets = [1, 0], sizes = [1, 64], strides = [1, 1]} : vector<3x64xf32> to vector<1x64xf32>
    %20 = vector.broadcast %18 : vector<128x1xf32> to vector<128x64xf32>
    %21 = vector.broadcast %19 : vector<1x64xf32> to vector<128x64xf32>
    %22 = arith.mulf %20, %21 : vector<128x64xf32>
    %23 = arith.addf %17, %22 : vector<128x64xf32>
    %24 = vector.extract_strided_slice %12 {offsets = [0, 2], sizes = [128, 1], strides = [1, 1]} : vector<128x3xf32> to vector<128x1xf32>
    %25 = vector.extract_strided_slice %1 {offsets = [2, 0], sizes = [1, 64], strides = [1, 1]} : vector<3x64xf32> to vector<1x64xf32>
    %26 = vector.broadcast %24 : vector<128x1xf32> to vector<128x64xf32>
    %27 = vector.broadcast %25 : vector<1x64xf32> to vector<128x64xf32>
    %28 = arith.mulf %26, %27 : vector<128x64xf32>
    %29 = arith.addf %23, %28 : vector<128x64xf32>
    %30 = vector.broadcast %2 : vector<1x64xf32> to vector<128x64xf32>
    %31 = arith.addf %29, %30 : vector<128x64xf32>
    %cst_13 = arith.constant 0.000000e+00 : f32
    %32 = vector.broadcast %cst_13 : f32 to vector<128x64xf32>
    %33 = arith.maximumf %31, %32 : vector<128x64xf32>
    %34 = arith.truncf %33 : vector<128x64xf32> to vector<128x64xbf16>
    %cst_14 = arith.constant dense<0.000000e+00> : vector<128x128xf32>
    %35 = tpu.matmul %34, %3, %cst_14 {dimension_numbers = #tpu.dot_dimension_numbers<[1], [0], [0], [1], [0, 0, 1, 1], [], []>} : vector<128x64xbf16>, vector<64x128xbf16>, vector<128x128xf32> -> vector<128x128xf32>
    %36 = vector.broadcast %4 : vector<1x128xf32> to vector<128x128xf32>
    %37 = arith.addf %35, %36 : vector<128x128xf32>
    %cst_15 = arith.constant 0.000000e+00 : f32
    %38 = vector.broadcast %cst_15 : f32 to vector<128x128xf32>
    %39 = arith.maximumf %37, %38 : vector<128x128xf32>
    %40 = arith.truncf %39 : vector<128x128xf32> to vector<128x128xbf16>
    %cst_16 = arith.constant dense<0.000000e+00> : vector<128x1024xf32>
    %41 = tpu.matmul %40, %5, %cst_16 {dimension_numbers = #tpu.dot_dimension_numbers<[1], [0], [0], [1], [0, 0, 1, 1], [], []>} : vector<128x128xbf16>, vector<128x1024xbf16>, vector<128x1024xf32> -> vector<128x1024xf32>
    %42 = vector.broadcast %6 : vector<1x1024xf32> to vector<128x1024xf32>
    %43 = arith.addf %41, %42 : vector<128x1024xf32>
    %cst_17 = arith.constant 0.000000e+00 : f32
    %44 = vector.broadcast %cst_17 : f32 to vector<128x1024xf32>
    %45 = arith.maximumf %43, %44 : vector<128x1024xf32>
    %cst_18 = arith.constant dense<0xFF800000> : vector<1024xf32>
    %46 = vector.multi_reduction <maximumf>, %45, %cst_18 [0] : vector<128x1024xf32> to vector<1024xf32>
    %47 = vector.shape_cast %46 : vector<1024xf32> to vector<1x1024xf32>
    %48 = arith.maximumf %7, %47 : vector<1x1024xf32>
    %c1_i32 = arith.constant 1 : i32
    %49 = arith.truncf %48 : vector<1x1024xf32> to vector<1x1024xbf16>
    %c0_19 = arith.constant 0 : index
    %c0_20 = arith.constant 0 : index
    %50 = vector.load %arg8[%c0_19, %c0_20] : memref<1024x512xbf16, #tpu.memory_space<vmem>>, vector<1024x512xbf16>
    %cst_21 = arith.constant dense<0.000000e+00> : vector<1x512xf32>
    %51 = tpu.matmul %49, %50, %cst_21 {dimension_numbers = #tpu.dot_dimension_numbers<[1], [0], [0], [1], [0, 0, 1, 1], [], []>} : vector<1x1024xbf16>, vector<1024x512xbf16>, vector<1x512xf32> -> vector<1x512xf32>
    %c0_22 = arith.constant 0 : index
    %c0_23 = arith.constant 0 : index
    %52 = vector.load %arg9[%c0_22, %c0_23] : memref<1x512xf32, #tpu.memory_space<vmem>>, vector<1x512xf32>
    %53 = arith.addf %51, %52 : vector<1x512xf32>
    %cst_24 = arith.constant 0.000000e+00 : f32
    %54 = vector.broadcast %cst_24 : f32 to vector<1x512xf32>
    %55 = arith.maximumf %53, %54 : vector<1x512xf32>
    %56 = arith.truncf %55 : vector<1x512xf32> to vector<1x512xbf16>
    %c0_25 = arith.constant 0 : index
    %c0_26 = arith.constant 0 : index
    %57 = vector.load %arg10[%c0_25, %c0_26] : memref<512x256xbf16, #tpu.memory_space<vmem>>, vector<512x256xbf16>
    %cst_27 = arith.constant dense<0.000000e+00> : vector<1x256xf32>
    %58 = tpu.matmul %56, %57, %cst_27 {dimension_numbers = #tpu.dot_dimension_numbers<[1], [0], [0], [1], [0, 0, 1, 1], [], []>} : vector<1x512xbf16>, vector<512x256xbf16>, vector<1x256xf32> -> vector<1x256xf32>
    %c0_28 = arith.constant 0 : index
    %c0_29 = arith.constant 0 : index
    %59 = vector.load %arg11[%c0_28, %c0_29] : memref<1x256xf32, #tpu.memory_space<vmem>>, vector<1x256xf32>
    %60 = arith.addf %58, %59 : vector<1x256xf32>
    %cst_30 = arith.constant 0.000000e+00 : f32
    %61 = vector.broadcast %cst_30 : f32 to vector<1x256xf32>
    %62 = arith.maximumf %60, %61 : vector<1x256xf32>
    %63 = arith.truncf %62 : vector<1x256xf32> to vector<1x256xbf16>
    %c0_31 = arith.constant 0 : index
    %c0_32 = arith.constant 0 : index
    %64 = vector.load %arg12[%c0_31, %c0_32] : memref<256x128xbf16, #tpu.memory_space<vmem>>, vector<256x128xbf16>
    %cst_33 = arith.constant dense<0.000000e+00> : vector<1x128xf32>
    %65 = tpu.matmul %63, %64, %cst_33 {dimension_numbers = #tpu.dot_dimension_numbers<[1], [0], [0], [1], [0, 0, 1, 1], [], []>} : vector<1x256xbf16>, vector<256x128xbf16>, vector<1x128xf32> -> vector<1x128xf32>
    %c0_34 = arith.constant 0 : index
    %c0_35 = arith.constant 0 : index
    %66 = vector.load %arg13[%c0_34, %c0_35] : memref<1x128xf32, #tpu.memory_space<vmem>>, vector<1x128xf32>
    %67 = arith.addf %65, %66 : vector<1x128xf32>
    %c0_36 = arith.constant 0 : index
    %c0_37 = arith.constant 0 : index
    %c0_38 = arith.constant 0 : index
    %68 = vector.load %arg14[%c0_36, %c0_37, %c0_38] : memref<1x1x128xf32, #tpu.memory_space<vmem>>, vector<1x1x128xf32>
    %69 = vector.shape_cast %68 : vector<1x1x128xf32> to vector<1x128xf32>
    %70 = vector.shape_cast %67 : vector<1x128xf32> to vector<1x1x128xf32>
    tpu.vector_store %arg14[%c0_36, %c0_37, %c0_38], %70 {strides = array<i32>} : memref<1x1x128xf32, #tpu.memory_space<vmem>>, vector<1x1x128xf32>,
    %c0_39 = arith.constant 0 : index
    %c0_40 = arith.constant 0 : index
    %c0_41 = arith.constant 0 : index
    %71 = vector.load %arg1[%c0_39, %c0_40, %c0_41] : memref<1x128x3xf32, #tpu.memory_space<vmem>>, vector<1x128x3xf32>
    %72 = vector.shape_cast %71 : vector<1x128x3xf32> to vector<128x3xf32>
    %73 = vector.extract_strided_slice %72 {offsets = [0, 0], sizes = [128, 1], strides = [1, 1]} : vector<128x3xf32> to vector<128x1xf32>
    %74 = vector.extract_strided_slice %67 {offsets = [0, 0], sizes = [1, 3], strides = [1, 1]} : vector<1x128xf32> to vector<1x3xf32>
    %75 = vector.broadcast %73 : vector<128x1xf32> to vector<128x3xf32>
    %76 = vector.broadcast %74 : vector<1x3xf32> to vector<128x3xf32>
    %77 = arith.mulf %75, %76 : vector<128x3xf32>
    %78 = vector.extract_strided_slice %72 {offsets = [0, 1], sizes = [128, 1], strides = [1, 1]} : vector<128x3xf32> to vector<128x1xf32>
    %79 = vector.extract_strided_slice %67 {offsets = [0, 3], sizes = [1, 3], strides = [1, 1]} : vector<1x128xf32> to vector<1x3xf32>
    %80 = vector.broadcast %78 : vector<128x1xf32> to vector<128x3xf32>
    %81 = vector.broadcast %79 : vector<1x3xf32> to vector<128x3xf32>
    %82 = arith.mulf %80, %81 : vector<128x3xf32>
    %83 = arith.addf %77, %82 : vector<128x3xf32>
    %84 = vector.extract_strided_slice %72 {offsets = [0, 2], sizes = [128, 1], strides = [1, 1]} : vector<128x3xf32> to vector<128x1xf32>
    %85 = vector.extract_strided_slice %67 {offsets = [0, 6], sizes = [1, 3], strides = [1, 1]} : vector<1x128xf32> to vector<1x3xf32>
    %86 = vector.broadcast %84 : vector<128x1xf32> to vector<128x3xf32>
    %87 = vector.broadcast %85 : vector<1x3xf32> to vector<128x3xf32>
    %88 = arith.mulf %86, %87 : vector<128x3xf32>
    %89 = arith.addf %83, %88 : vector<128x3xf32>
    %c0_42 = arith.constant 0 : index
    %c0_43 = arith.constant 0 : index
    %c0_44 = arith.constant 0 : index
    %90 = vector.load %arg15[%c0_42, %c0_43, %c0_44] : memref<1x128x3xf32, #tpu.memory_space<vmem>>, vector<1x128x3xf32>
    %91 = vector.shape_cast %90 : vector<1x128x3xf32> to vector<128x3xf32>
    %92 = vector.shape_cast %89 : vector<128x3xf32> to vector<1x128x3xf32>
    tpu.vector_store %arg15[%c0_42, %c0_43, %c0_44], %92 {strides = array<i32>} : memref<1x128x3xf32, #tpu.memory_space<vmem>>, vector<1x128x3xf32>,
    return
  }
  func.func @transform_0(%arg0: i32) -> (i32, i32, i32) {
    %c0_i32 = arith.constant 0 : i32
    %c0_i32_0 = arith.constant 0 : i32
    %c0_i32_1 = arith.constant 0 : i32
    return %arg0, %c0_i32, %c0_i32_0 : i32, i32, i32
  }
  func.func @transform_1(%arg0: i32) -> (i32, i32) {
    %c0_i32 = arith.constant 0 : i32
    %c0_i32_0 = arith.constant 0 : i32
    %c0_i32_1 = arith.constant 0 : i32
    return %c0_i32, %c0_i32_0 : i32, i32
  }
  func.func @transform_2(%arg0: i32) -> (i32, i32) {
    %c0_i32 = arith.constant 0 : i32
    %c0_i32_0 = arith.constant 0 : i32
    %c0_i32_1 = arith.constant 0 : i32
    return %c0_i32, %c0_i32_0 : i32, i32
  }
  func.func @transform_3(%arg0: i32) -> (i32, i32) {
    %c0_i32 = arith.constant 0 : i32
    %c0_i32_0 = arith.constant 0 : i32
    %c0_i32_1 = arith.constant 0 : i32
    return %c0_i32, %c0_i32_0 : i32, i32
  }
  func.func @transform_4(%arg0: i32) -> (i32, i32) {
    %c0_i32 = arith.constant 0 : i32
    %c0_i32_0 = arith.constant 0 : i32
    %c0_i32_1 = arith.constant 0 : i32
    return %c0_i32, %c0_i32_0 : i32, i32
  }
  func.func @transform_5(%arg0: i32) -> (i32, i32) {
    %c0_i32 = arith.constant 0 : i32
    %c0_i32_0 = arith.constant 0 : i32
    %c0_i32_1 = arith.constant 0 : i32
    return %c0_i32, %c0_i32_0 : i32, i32
  }
  func.func @transform_6(%arg0: i32) -> (i32, i32) {
    %c0_i32 = arith.constant 0 : i32
    %c0_i32_0 = arith.constant 0 : i32
    %c0_i32_1 = arith.constant 0 : i32
    return %c0_i32, %c0_i32_0 : i32, i32
  }
  func.func @transform_7(%arg0: i32) -> (i32, i32) {
    %c0_i32 = arith.constant 0 : i32
    %c0_i32_0 = arith.constant 0 : i32
    %c0_i32_1 = arith.constant 0 : i32
    return %c0_i32, %c0_i32_0 : i32, i32
  }
  func.func @transform_8(%arg0: i32) -> (i32, i32) {
    %c0_i32 = arith.constant 0 : i32
    %c0_i32_0 = arith.constant 0 : i32
    %c0_i32_1 = arith.constant 0 : i32
    return %c0_i32, %c0_i32_0 : i32, i32
  }
  func.func @transform_9(%arg0: i32) -> (i32, i32) {
    %c0_i32 = arith.constant 0 : i32
    %c0_i32_0 = arith.constant 0 : i32
    %c0_i32_1 = arith.constant 0 : i32
    return %c0_i32, %c0_i32_0 : i32, i32
  }
  func.func @transform_10(%arg0: i32) -> (i32, i32) {
    %c0_i32 = arith.constant 0 : i32
    %c0_i32_0 = arith.constant 0 : i32
    %c0_i32_1 = arith.constant 0 : i32
    return %c0_i32, %c0_i32_0 : i32, i32
  }
  func.func @transform_11(%arg0: i32) -> (i32, i32) {
    %c0_i32 = arith.constant 0 : i32
    %c0_i32_0 = arith.constant 0 : i32
    %c0_i32_1 = arith.constant 0 : i32
    return %c0_i32, %c0_i32_0 : i32, i32
  }
  func.func @transform_12(%arg0: i32) -> (i32, i32) {
    %c0_i32 = arith.constant 0 : i32
    %c0_i32_0 = arith.constant 0 : i32
    %c0_i32_1 = arith.constant 0 : i32
    return %c0_i32, %c0_i32_0 : i32, i32
  }
  func.func @transform_13(%arg0: i32) -> (i32, i32, i32) {
    %c0_i32 = arith.constant 0 : i32
    %c0_i32_0 = arith.constant 0 : i32
    %c0_i32_1 = arith.constant 0 : i32
    return %arg0, %c0_i32, %c0_i32_0 : i32, i32, i32
  }
  func.func @transform_14(%arg0: i32) -> (i32, i32, i32) {
    %c0_i32 = arith.constant 0 : i32
    %c0_i32_0 = arith.constant 0 : i32
    %c0_i32_1 = arith.constant 0 : i32
    return %arg0, %c0_i32, %c0_i32_0 : i32, i32, i32
  }
}

</mosaic_0001>

<llo_original>
// kernel: tpu_custom_call.1
$region0: #{tpu_custom_call.1}
  #allocation0 [shape = 'u32[]', space=smem, size = 0x4, offset = 0x4, fixed_abs, tag = 'smem constant byte address 0x4 - core index']
  #allocation1 [shape = 'u32[72,128]{1,0:T(1,128)}', space=vmem, size = 0x9000, scoped, tag = 'internal scratch']
  %s0 = inlined_call_operand.vmem [shape: f32[2,128,3], index: 0, kind: input, shape index: {}]
  %s1 = inlined_call_operand.vmem [shape: bf16[3,64], index: 1, kind: input, shape index: {}]
  %s2 = inlined_call_operand.vmem [shape: f32[1,64], index: 2, kind: input, shape index: {}]
  %s3 = inlined_call_operand.vmem [shape: bf16[64,128], index: 3, kind: input, shape index: {}]
  %s4 = inlined_call_operand.vmem [shape: f32[1,128], index: 4, kind: input, shape index: {}]
  %s5 = inlined_call_operand.hbm [shape: bf16[128,1024], index: 5, kind: input, shape index: {}]
  %s6 = inlined_call_operand.vmem [shape: f32[1,1024], index: 6, kind: input, shape index: {}]
  %s7 = inlined_call_operand.hbm [shape: bf16[1024,512], index: 7, kind: input, shape index: {}]
  %s8 = inlined_call_operand.vmem [shape: f32[1,512], index: 8, kind: input, shape index: {}]
  %s9 = inlined_call_operand.hbm [shape: bf16[512,256], index: 9, kind: input, shape index: {}]
  %s10 = inlined_call_operand.vmem [shape: f32[1,256], index: 10, kind: input, shape index: {}]
  %s11 = inlined_call_operand.vmem [shape: bf16[256,128], index: 11, kind: input, shape index: {}]
  %s12 = inlined_call_operand.vmem [shape: f32[1,128], index: 12, kind: input, shape index: {}]
  %s13 = inlined_call_operand.hbm [shape: f32[2,1,128], index: 13, kind: output, shape index: {0}]
  %s14 = inlined_call_operand.vmem [shape: f32[2,128,3], index: 14, kind: output, shape index: {1}]
  %15 = xla_tuple %s13, %s14
  %s16 = sld [smem:[#allocation0]]
  $region105: #{tpu_custom_call.1} parent=0
    _
  %s18 = ssub.s32 1, %s16
  %s19 = scalar_select 0, %s18, %s16
  $region1: #{tpu_custom_call.1} parent=0
    #allocation2 [shape = 'u8[262144]{0}', space=vmem, size = 0x40000, scoped, tag = 'input window, operand 5, single buffered']
    #allocation3 [shape = 's32[2]{0}', space=sflag, size = 0x8, scoped, tag = 'scoped memory for tpu_custom_call.1']
    #allocation4 [shape = 's32[2]{0}', space=sflag, size = 0x8, scoped, tag = 'scoped memory for tpu_custom_call.1']
    #allocation5 [shape = 'u8[1048576]{0}', space=vmem, size = 0x100000, scoped, tag = 'input window, operand 7, single buffered']
    #allocation6 [shape = 's32[1]{0}', space=sflag, size = 0x4, scoped, tag = 'scoped memory for tpu_custom_call.1']
    #allocation7 [shape = 'u8[262144]{0}', space=vmem, size = 0x40000, scoped, tag = 'input window, operand 9, single buffered']
    #allocation8 [shape = 'u8[1024]{0}', space=vmem, size = 0x400, scoped, tag = 'output window, operand 0']
    %20 = vsyncpa [#allocation3], 0
    %21 = vsyncpa [#allocation6], 0
    %22 = vsyncpa [#allocation4], 0
    %s23 = scalar_lea.sflag [#allocation4], 1
    %24 = vsyncpa %s23, 0
    loop: start=0, step=1, limit=4
    $region2: #{tpu_custom_call.1} parent=1 // loop_pre_header
      _
    $region3: #{tpu_custom_call.1} parent=1 // loop_header
      %s26 = sphi 0, %s30
      %p27 = scmp.ge.s32.totalorder %s26, 4
      %s36 = sphi 0, %s38
      %s39 = sphi 0, %s36
      %s40 = sphi 0, %s39
      %s56 = sphi 0, %s40
      %s60 = sphi 0, %s60
      %s62 = sphi 0, %s60
      %s63 = sphi 0, %s62
      %s77 = sphi 0, %s63
      %s81 = sphi 0, %s81
      %s83 = sphi 0, %s81
      %s84 = sphi 0, %s83
      %s98 = sphi 0, %s84
      %s102 = sphi 0, %s102
      %s104 = sphi 0, %s102
      %s105 = sphi 0, %s104
      %s119 = sphi 0, %s105
      %s123 = sphi 0, %s123
      %s125 = sphi 0, %s123
      %s126 = sphi 0, %s125
      %s140 = sphi 0, %s126
      %s144 = sphi 0, %s144
      %s146 = sphi 0, %s144
      %s147 = sphi 0, %s146
      %s161 = sphi 0, %s147
      %s165 = sphi 0, %s165
      %s167 = sphi 0, %s165
      %s168 = sphi 0, %s167
      %s182 = sphi 0, %s168
      %s186 = sphi 0, %s186
      %s188 = sphi 0, %s186
      %s189 = sphi 0, %s188
      %s203 = sphi 0, %s189
      %s207 = sphi 0, %s207
      %s209 = sphi 0, %s207
      %s210 = sphi 0, %s209
      %s224 = sphi 0, %s210
      %s228 = sphi 0, %s228
      %s230 = sphi 0, %s228
      %s231 = sphi 0, %s230
      %s245 = sphi 0, %s231
      %s249 = sphi 0, %s249
      %s251 = sphi 0, %s249
      %s252 = sphi 0, %s251
      %s266 = sphi 0, %s252
      %s270 = sphi 0, %s270
      %s272 = sphi 0, %s270
      %s273 = sphi 0, %s272
      %s287 = sphi 0, %s273
      %s291 = sphi 0, %s291
      %s293 = sphi 0, %s291
      %s294 = sphi 0, %s293
      %s308 = sphi 0, %s294
      %s314 = sphi 0, %s316
      %s317 = sphi 0, %s314
      %s318 = sphi 0, %s317
      %s334 = sphi 0, %s318
      %s340 = sphi 0, %s342
      %s343 = sphi 0, %s340
      %s344 = sphi 0, %s343
      %s360 = sphi 0, %s344
    $region4: #{tpu_custom_call.1} parent=1 // loop_header_branch
      %29 = sbr.rel (%p27) target = $region8
    $region5: #{tpu_custom_call.1} parent=1 // loop_body
      %s31 = ssub.s32 %s26, 1
      %s32 = ssub.s32 %s26, 2
      %s33 = sadd.s32 %s26, 1
      %s34 = ssub.s32 %s26, %s33
      %p35 = scmp.eq.s32.totalorder %s34, 0
      %s37 = sadd.s32 %s36, 1
      %s38 = scalar_select %p35, %s36, %s37
      %p41 = pneg %p35
      %p42 = scmp.eq.s32.totalorder %s26, 1
      %p43 = por %p41, %p42
      %p44 = scmp.ne.s32.totalorder %s36, %s39
      %p45 = scmp.eq.s32.totalorder %s26, 0
      %p46 = por %p44, %p45
      %p47 = scmp.ne.s32.totalorder %s36, %s39
      %p48 = scmp.eq.s32.totalorder %s31, 1
      %p49 = por %p47, %p48
      %p50 = scmp.ne.s32.totalorder %s39, %s40
      %p51 = scmp.eq.s32.totalorder %s31, 0
      %p52 = por %p50, %p51
      %p53 = scmp.ne.s32.totalorder %s39, %s40
      %p54 = scmp.eq.s32.totalorder %s32, 1
      %p55 = por %p53, %p54
      %p57 = scmp.ne.s32.totalorder %s40, %s56
      %p58 = scmp.eq.s32.totalorder %s32, 0
      %p59 = por %p57, %p58
      %s61 = sadd.s32 %s60, 1
      %p64 = scmp.eq.s32.totalorder %s26, 1
      %p65 = scmp.ne.s32.totalorder %s60, %s62
      %p66 = scmp.eq.s32.totalorder %s26, 0
      %p67 = por %p65, %p66
      %p68 = scmp.ne.s32.totalorder %s60, %s62
      %p69 = scmp.eq.s32.totalorder %s31, 1
      %p70 = por %p68, %p69
      %p71 = scmp.ne.s32.totalorder %s62, %s63
      %p72 = scmp.eq.s32.totalorder %s31, 0
      %p73 = por %p71, %p72
      %p74 = scmp.ne.s32.totalorder %s62, %s63
      %p75 = scmp.eq.s32.totalorder %s32, 1
      %p76 = por %p74, %p75
      %p78 = scmp.ne.s32.totalorder %s63, %s77
      %p79 = scmp.eq.s32.totalorder %s32, 0
      %p80 = por %p78, %p79
      %s82 = sadd.s32 %s81, 1
      %p85 = scmp.eq.s32.totalorder %s26, 1
      %p86 = scmp.ne.s32.totalorder %s81, %s83
      %p87 = scmp.eq.s32.totalorder %s26, 0
      %p88 = por %p86, %p87
      %p89 = scmp.ne.s32.totalorder %s81, %s83
      %p90 = scmp.eq.s32.totalorder %s31, 1
      %p91 = por %p89, %p90
      %p92 = scmp.ne.s32.totalorder %s83, %s84
      %p93 = scmp.eq.s32.totalorder %s31, 0
      %p94 = por %p92, %p93
      %p95 = scmp.ne.s32.totalorder %s83, %s84
      %p96 = scmp.eq.s32.totalorder %s32, 1
      %p97 = por %p95, %p96
      %p99 = scmp.ne.s32.totalorder %s84, %s98
      %p100 = scmp.eq.s32.totalorder %s32, 0
      %p101 = por %p99, %p100
      %s103 = sadd.s32 %s102, 1
      %p106 = scmp.eq.s32.totalorder %s26, 1
      %p107 = scmp.ne.s32.totalorder %s102, %s104
      %p108 = scmp.eq.s32.totalorder %s26, 0
      %p109 = por %p107, %p108
      %p110 = scmp.ne.s32.totalorder %s102, %s104
      %p111 = scmp.eq.s32.totalorder %s31, 1
      %p112 = por %p110, %p111
      %p113 = scmp.ne.s32.totalorder %s104, %s105
      %p114 = scmp.eq.s32.totalorder %s31, 0
      %p115 = por %p113, %p114
      %p116 = scmp.ne.s32.totalorder %s104, %s105
      %p117 = scmp.eq.s32.totalorder %s32, 1
      %p118 = por %p116, %p117
      %p120 = scmp.ne.s32.totalorder %s105, %s119
      %p121 = scmp.eq.s32.totalorder %s32, 0
      %p122 = por %p120, %p121
      %s124 = sadd.s32 %s123, 1
      %p127 = scmp.eq.s32.totalorder %s26, 1
      %p128 = scmp.ne.s32.totalorder %s123, %s125
      %p129 = scmp.eq.s32.totalorder %s26, 0
      %p130 = por %p128, %p129
      %p131 = scmp.ne.s32.totalorder %s123, %s125
      %p132 = scmp.eq.s32.totalorder %s31, 1
      %p133 = por %p131, %p132
      %p134 = scmp.ne.s32.totalorder %s125, %s126
      %p135 = scmp.eq.s32.totalorder %s31, 0
      %p136 = por %p134, %p135
      %p137 = scmp.ne.s32.totalorder %s125, %s126
      %p138 = scmp.eq.s32.totalorder %s32, 1
      %p139 = por %p137, %p138
      %p141 = scmp.ne.s32.totalorder %s126, %s140
      %p142 = scmp.eq.s32.totalorder %s32, 0
      %p143 = por %p141, %p142
      %s145 = sadd.s32 %s144, 1
      %p148 = scmp.eq.s32.totalorder %s26, 1
      %p149 = scmp.ne.s32.totalorder %s144, %s146
      %p150 = scmp.eq.s32.totalorder %s26, 0
      %p151 = por %p149, %p150
      %p152 = scmp.ne.s32.totalorder %s144, %s146
      %p153 = scmp.eq.s32.totalorder %s31, 1
      %p154 = por %p152, %p153
      %p155 = scmp.ne.s32.totalorder %s146, %s147
      %p156 = scmp.eq.s32.totalorder %s31, 0
      %p157 = por %p155, %p156
      %p158 = scmp.ne.s32.totalorder %s146, %s147
      %p159 = scmp.eq.s32.totalorder %s32, 1
      %p160 = por %p158, %p159
      %p162 = scmp.ne.s32.totalorder %s147, %s161
      %p163 = scmp.eq.s32.totalorder %s32, 0
      %p164 = por %p162, %p163
      %s166 = sadd.s32 %s165, 1
      %p169 = scmp.eq.s32.totalorder %s26, 1
      %p170 = scmp.ne.s32.totalorder %s165, %s167
      %p171 = scmp.eq.s32.totalorder %s26, 0
      %p172 = por %p170, %p171
      %p173 = scmp.ne.s32.totalorder %s165, %s167
      %p174 = scmp.eq.s32.totalorder %s31, 1
      %p175 = por %p173, %p174
      %p176 = scmp.ne.s32.totalorder %s167, %s168
      %p177 = scmp.eq.s32.totalorder %s31, 0
      %p178 = por %p176, %p177
      %p179 = scmp.ne.s32.totalorder %s167, %s168
      %p180 = scmp.eq.s32.totalorder %s32, 1
      %p181 = por %p179, %p180
      %p183 = scmp.ne.s32.totalorder %s168, %s182
      %p184 = scmp.eq.s32.totalorder %s32, 0
      %p185 = por %p183, %p184
      %s187 = sadd.s32 %s186, 1
      %p190 = scmp.eq.s32.totalorder %s26, 1
      %p191 = scmp.ne.s32.totalorder %s186, %s188
      %p192 = scmp.eq.s32.totalorder %s26, 0
      %p193 = por %p191, %p192
      %p194 = scmp.ne.s32.totalorder %s186, %s188
      %p195 = scmp.eq.s32.totalorder %s31, 1
      %p196 = por %p194, %p195
      %p197 = scmp.ne.s32.totalorder %s188, %s189
      %p198 = scmp.eq.s32.totalorder %s31, 0
      %p199 = por %p197, %p198
      %p200 = scmp.ne.s32.totalorder %s188, %s189
      %p201 = scmp.eq.s32.totalorder %s32, 1
      %p202 = por %p200, %p201
      %p204 = scmp.ne.s32.totalorder %s189, %s203
      %p205 = scmp.eq.s32.totalorder %s32, 0
      %p206 = por %p204, %p205
      %s208 = sadd.s32 %s207, 1
      %p211 = scmp.eq.s32.totalorder %s26, 1
      %p212 = scmp.ne.s32.totalorder %s207, %s209
      %p213 = scmp.eq.s32.totalorder %s26, 0
      %p214 = por %p212, %p213
      %p215 = scmp.ne.s32.totalorder %s207, %s209
      %p216 = scmp.eq.s32.totalorder %s31, 1
      %p217 = por %p215, %p216
      %p218 = scmp.ne.s32.totalorder %s209, %s210
      %p219 = scmp.eq.s32.totalorder %s31, 0
      %p220 = por %p218, %p219
      %p221 = scmp.ne.s32.totalorder %s209, %s210
      %p222 = scmp.eq.s32.totalorder %s32, 1
      %p223 = por %p221, %p222
      %p225 = scmp.ne.s32.totalorder %s210, %s224
      %p226 = scmp.eq.s32.totalorder %s32, 0
      %p227 = por %p225, %p226
      %s229 = sadd.s32 %s228, 1
      %p232 = scmp.eq.s32.totalorder %s26, 1
      %p233 = scmp.ne.s32.totalorder %s228, %s230
      %p234 = scmp.eq.s32.totalorder %s26, 0
      %p235 = por %p233, %p234
      %p236 = scmp.ne.s32.totalorder %s228, %s230
      %p237 = scmp.eq.s32.totalorder %s31, 1
      %p238 = por %p236, %p237
      %p239 = scmp.ne.s32.totalorder %s230, %s231
      %p240 = scmp.eq.s32.totalorder %s31, 0
      %p241 = por %p239, %p240
      %p242 = scmp.ne.s32.totalorder %s230, %s231
      %p243 = scmp.eq.s32.totalorder %s32, 1
      %p244 = por %p242, %p243
      %p246 = scmp.ne.s32.totalorder %s231, %s245
      %p247 = scmp.eq.s32.totalorder %s32, 0
      %p248 = por %p246, %p247
      %s250 = sadd.s32 %s249, 1
      %p253 = scmp.eq.s32.totalorder %s26, 1
      %p254 = scmp.ne.s32.totalorder %s249, %s251
      %p255 = scmp.eq.s32.totalorder %s26, 0
      %p256 = por %p254, %p255
      %p257 = scmp.ne.s32.totalorder %s249, %s251
      %p258 = scmp.eq.s32.totalorder %s31, 1
      %p259 = por %p257, %p258
      %p260 = scmp.ne.s32.totalorder %s251, %s252
      %p261 = scmp.eq.s32.totalorder %s31, 0
      %p262 = por %p260, %p261
      %p263 = scmp.ne.s32.totalorder %s251, %s252
      %p264 = scmp.eq.s32.totalorder %s32, 1
      %p265 = por %p263, %p264
      %p267 = scmp.ne.s32.totalorder %s252, %s266
      %p268 = scmp.eq.s32.totalorder %s32, 0
      %p269 = por %p267, %p268
      %s271 = sadd.s32 %s270, 1
      %p274 = scmp.eq.s32.totalorder %s26, 1
      %p275 = scmp.ne.s32.totalorder %s270, %s272
      %p276 = scmp.eq.s32.totalorder %s26, 0
      %p277 = por %p275, %p276
      %p278 = scmp.ne.s32.totalorder %s270, %s272
      %p279 = scmp.eq.s32.totalorder %s31, 1
      %p280 = por %p278, %p279
      %p281 = scmp.ne.s32.totalorder %s272, %s273
      %p282 = scmp.eq.s32.totalorder %s31, 0
      %p283 = por %p281, %p282
      %p284 = scmp.ne.s32.totalorder %s272, %s273
      %p285 = scmp.eq.s32.totalorder %s32, 1
      %p286 = por %p284, %p285
      %p288 = scmp.ne.s32.totalorder %s273, %s287
      %p289 = scmp.eq.s32.totalorder %s32, 0
      %p290 = por %p288, %p289
      %s292 = sadd.s32 %s291, 1
      %p295 = scmp.eq.s32.totalorder %s26, 1
      %p296 = scmp.ne.s32.totalorder %s291, %s293
      %p297 = scmp.eq.s32.totalorder %s26, 0
      %p298 = por %p296, %p297
      %p299 = scmp.ne.s32.totalorder %s291, %s293
      %p300 = scmp.eq.s32.totalorder %s31, 1
      %p301 = por %p299, %p300
      %p302 = scmp.ne.s32.totalorder %s293, %s294
      %p303 = scmp.eq.s32.totalorder %s31, 0
      %p304 = por %p302, %p303
      %p305 = scmp.ne.s32.totalorder %s293, %s294
      %p306 = scmp.eq.s32.totalorder %s32, 1
      %p307 = por %p305, %p306
      %p309 = scmp.ne.s32.totalorder %s294, %s308
      %p310 = scmp.eq.s32.totalorder %s32, 0
      %p311 = por %p309, %p310
      %s312 = ssub.s32 %s26, %s33
      %p313 = scmp.eq.s32.totalorder %s312, 0
      %s315 = sadd.s32 %s314, 1
      %s316 = scalar_select %p313, %s314, %s315
      %p319 = pneg %p313
      %p320 = scmp.eq.s32.totalorder %s26, 1
      %p321 = por %p319, %p320
      %p322 = scmp.ne.s32.totalorder %s314, %s317
      %p323 = scmp.eq.s32.totalorder %s26, 0
      %p324 = por %p322, %p323
      %p325 = scmp.ne.s32.totalorder %s314, %s317
      %p326 = scmp.eq.s32.totalorder %s31, 1
      %p327 = por %p325, %p326
      %p328 = scmp.ne.s32.totalorder %s317, %s318
      %p329 = scmp.eq.s32.totalorder %s31, 0
      %p330 = por %p328, %p329
      %p331 = scmp.ne.s32.totalorder %s317, %s318
      %p332 = scmp.eq.s32.totalorder %s32, 1
      %p333 = por %p331, %p332
      %p335 = scmp.ne.s32.totalorder %s318, %s334
      %p336 = scmp.eq.s32.totalorder %s32, 0
      %p337 = por %p335, %p336
      %s338 = ssub.s32 %s26, %s33
      %p339 = scmp.eq.s32.totalorder %s338, 0
      %s341 = sadd.s32 %s340, 1
      %s342 = scalar_select %p339, %s340, %s341
      %p345 = pneg %p339
      %p346 = scmp.eq.s32.totalorder %s26, 1
      %p347 = por %p345, %p346
      %p348 = scmp.ne.s32.totalorder %s340, %s343
      %p349 = scmp.eq.s32.totalorder %s26, 0
      %p350 = por %p348, %p349
      %p351 = scmp.ne.s32.totalorder %s340, %s343
      %p352 = scmp.eq.s32.totalorder %s31, 1
      %p353 = por %p351, %p352
      %p354 = scmp.ne.s32.totalorder %s343, %s344
      %p355 = scmp.eq.s32.totalorder %s31, 0
      %p356 = por %p354, %p355
      %p357 = scmp.ne.s32.totalorder %s343, %s344
      %p358 = scmp.eq.s32.totalorder %s32, 1
      %p359 = por %p357, %p358
      %p361 = scmp.ne.s32.totalorder %s344, %s360
      %p362 = scmp.eq.s32.totalorder %s32, 0
      %p363 = por %p361, %p362
      %p364 = scmp.le.s32.totalorder 1, %s26
      %p365 = scmp.lt.s32.totalorder %s26, 3
      %p366 = pnand %p364, %p365
      %p367 = pneg %p366
      // Predicated region
      $region9: #{tpu_custom_call.1} parent=5 // pred_check
        _
      $region10: #{tpu_custom_call.1} parent=5 // pred_check_branch
        %369 = sbr.rel (%p366) target = $region12
      $region11: #{tpu_custom_call.1} parent=5 // pred_region
        %s370 = ssub.s32 %s26, 1
        // Predicated region
        $region13: #{tpu_custom_call.1} parent=11 // pred_check
          %p371 = pneg %p73
        $region14: #{tpu_custom_call.1} parent=11 // pred_check_branch
          %373 = sbr.rel (%p371) target = $region16
        $region15: #{tpu_custom_call.1} parent=11 // pred_region
          _
        $region16: #{tpu_custom_call.1} parent=11 // pred_fallthru
          _
        // Predicated region
        $region17: #{tpu_custom_call.1} parent=11 // pred_check
          %p374 = pneg %p94
        $region18: #{tpu_custom_call.1} parent=11 // pred_check_branch
          %376 = sbr.rel (%p374) target = $region20
        $region19: #{tpu_custom_call.1} parent=11 // pred_region
          _
        $region20: #{tpu_custom_call.1} parent=11 // pred_fallthru
          _
        // Predicated region
        $region21: #{tpu_custom_call.1} parent=11 // pred_check
          %p377 = pneg %p115
        $region22: #{tpu_custom_call.1} parent=11 // pred_check_branch
          %379 = sbr.rel (%p377) target = $region24
        $region23: #{tpu_custom_call.1} parent=11 // pred_region
          _
        $region24: #{tpu_custom_call.1} parent=11 // pred_fallthru
          _
        // Predicated region
        $region25: #{tpu_custom_call.1} parent=11 // pred_check
          %p380 = pneg %p136
        $region26: #{tpu_custom_call.1} parent=11 // pred_check_branch
          %382 = sbr.rel (%p380) target = $region28
        $region27: #{tpu_custom_call.1} parent=11 // pred_region
          _
        $region28: #{tpu_custom_call.1} parent=11 // pred_fallthru
          _
        // Predicated region
        $region29: #{tpu_custom_call.1} parent=11 // pred_check
          %p383 = pneg %p157
        $region30: #{tpu_custom_call.1} parent=11 // pred_check_branch
          %385 = sbr.rel (%p383) target = $region32
        $region31: #{tpu_custom_call.1} parent=11 // pred_region
          %387 = vsyncadd [#allocation3], 0
          %s388 = sshll.u32 %s5, 4
          %s389 = int_to_ptr.hbm [resolvable:$true] %s388
          %s390 = sshll.u32 [#allocation2], 4
          %s391 = int_to_ptr.vmem [resolvable:$true] %s390
          %396 = dma.hbm_to_vmem [thread:$0]  %s389, 8192, %s391, [#allocation3], 512, 512, 32
        $region32: #{tpu_custom_call.1} parent=11 // pred_fallthru
          _
        // Predicated region
        $region33: #{tpu_custom_call.1} parent=11 // pred_check
          %p397 = pneg %p178
        $region34: #{tpu_custom_call.1} parent=11 // pred_check_branch
          %399 = sbr.rel (%p397) target = $region36
        $region35: #{tpu_custom_call.1} parent=11 // pred_region
          _
        $region36: #{tpu_custom_call.1} parent=11 // pred_fallthru
          _
        // Predicated region
        $region37: #{tpu_custom_call.1} parent=11 // pred_check
          %p400 = pneg %p199
        $region38: #{tpu_custom_call.1} parent=11 // pred_check_branch
          %402 = sbr.rel (%p400) target = $region40
        $region39: #{tpu_custom_call.1} parent=11 // pred_region
          %404 = vsyncadd [#allocation6], 0
          %s405 = sshll.u32 %s7, 4
          %s406 = int_to_ptr.hbm [resolvable:$true] %s405
          %s407 = sshll.u32 [#allocation5], 4
          %s408 = int_to_ptr.vmem [resolvable:$true] %s407
          %413 = dma.hbm_to_vmem [thread:$0]  %s406, 32768, %s408, [#allocation6], 256, 256, 16
        $region40: #{tpu_custom_call.1} parent=11 // pred_fallthru
          _
        // Predicated region
        $region41: #{tpu_custom_call.1} parent=11 // pred_check
          %p414 = pneg %p220
        $region42: #{tpu_custom_call.1} parent=11 // pred_check_branch
          %416 = sbr.rel (%p414) target = $region44
        $region43: #{tpu_custom_call.1} parent=11 // pred_region
          _
        $region44: #{tpu_custom_call.1} parent=11 // pred_fallthru
          _
        // Predicated region
        $region45: #{tpu_custom_call.1} parent=11 // pred_check
          %p417 = pneg %p241
        $region46: #{tpu_custom_call.1} parent=11 // pred_check_branch
          %419 = sbr.rel (%p417) target = $region48
        $region47: #{tpu_custom_call.1} parent=11 // pred_region
          %421 = vsyncadd [#allocation6], 0
          %s422 = sshll.u32 %s9, 4
          %s423 = int_to_ptr.hbm [resolvable:$true] %s422
          %s424 = sshll.u32 [#allocation7], 4
          %s425 = int_to_ptr.vmem [resolvable:$true] %s424
          %430 = dma.hbm_to_vmem [thread:$0]  %s423, 8192, %s425, [#allocation6], 128, 128, 8
        $region48: #{tpu_custom_call.1} parent=11 // pred_fallthru
          _
        // Predicated region
        $region49: #{tpu_custom_call.1} parent=11 // pred_check
          %p431 = pneg %p262
        $region50: #{tpu_custom_call.1} parent=11 // pred_check_branch
          %433 = sbr.rel (%p431) target = $region52
        $region51: #{tpu_custom_call.1} parent=11 // pred_region
          _
        $region52: #{tpu_custom_call.1} parent=11 // pred_fallthru
          _
        // Predicated region
        $region53: #{tpu_custom_call.1} parent=11 // pred_check
          %p434 = pneg %p283
        $region54: #{tpu_custom_call.1} parent=11 // pred_check_branch
          %436 = sbr.rel (%p434) target = $region56
        $region55: #{tpu_custom_call.1} parent=11 // pred_region
          _
        $region56: #{tpu_custom_call.1} parent=11 // pred_fallthru
          _
        // Predicated region
        $region57: #{tpu_custom_call.1} parent=11 // pred_check
          %p437 = pneg %p304
        $region58: #{tpu_custom_call.1} parent=11 // pred_check_branch
          %439 = sbr.rel (%p437) target = $region60
        $region59: #{tpu_custom_call.1} parent=11 // pred_region
          _
        $region60: #{tpu_custom_call.1} parent=11 // pred_fallthru
          _
      $region12: #{tpu_custom_call.1} parent=5 // pred_fallthru
        _
      %p440 = scmp.lt.s32.totalorder %s26, 2
      // Predicated region
      $region61: #{tpu_custom_call.1} parent=5 // pred_check
        %p441 = pneg %p440
      $region62: #{tpu_custom_call.1} parent=5 // pred_check_branch
        %443 = sbr.rel (%p441) target = $region64
      $region63: #{tpu_custom_call.1} parent=5 // pred_region
        // Predicated region
        $region65: #{tpu_custom_call.1} parent=63 // pred_check
          %p444 = pneg %p46
        $region66: #{tpu_custom_call.1} parent=63 // pred_check_branch
          %446 = sbr.rel (%p444) target = $region68
        $region67: #{tpu_custom_call.1} parent=63 // pred_region
          %p447 = scmp.lt.s32.totalorder %s26, 1
          %s448 = scalar_select %p447, %s26, 1
          %s449 = smul.addr %s448, 16
          %s450 = smul.addr %s449, 8
          %s451 = scalar_lea.vmem %s0, %s450
        $region68: #{tpu_custom_call.1} parent=63 // pred_fallthru
          _
      $region64: #{tpu_custom_call.1} parent=5 // pred_fallthru
        _
      %p452 = scmp.le.s32.totalorder 1, %s26
      %p453 = scmp.lt.s32.totalorder %s26, 3
      %p454 = pnand %p452, %p453
      %p455 = pneg %p454
      // Predicated region
      $region69: #{tpu_custom_call.1} parent=5 // pred_check
        _
      $region70: #{tpu_custom_call.1} parent=5 // pred_check_branch
        %457 = sbr.rel (%p454) target = $region72
      $region71: #{tpu_custom_call.1} parent=5 // pred_region
        %s458 = ssub.s32 %s26, 1
        // Predicated region
        $region73: #{tpu_custom_call.1} parent=71 // pred_check
          %p459 = pneg %p157
        $region74: #{tpu_custom_call.1} parent=71 // pred_check_branch
          %461 = sbr.rel (%p459) target = $region76
        $region75: #{tpu_custom_call.1} parent=71 // pred_region
          %463 = dma.done [#allocation3], 8192
        $region76: #{tpu_custom_call.1} parent=71 // pred_fallthru
          _
        // Predicated region
        $region77: #{tpu_custom_call.1} parent=71 // pred_check
          %p464 = pneg %p199
        $region78: #{tpu_custom_call.1} parent=71 // pred_check_branch
          %466 = sbr.rel (%p464) target = $region80
        $region79: #{tpu_custom_call.1} parent=71 // pred_region
          %468 = dma.done [#allocation6], 32768
        $region80: #{tpu_custom_call.1} parent=71 // pred_fallthru
          _
        // Predicated region
        $region81: #{tpu_custom_call.1} parent=71 // pred_check
          %p469 = pneg %p241
        $region82: #{tpu_custom_call.1} parent=71 // pred_check_branch
          %471 = sbr.rel (%p469) target = $region84
        $region83: #{tpu_custom_call.1} parent=71 // pred_region
          %473 = dma.done [#allocation6], 8192
        $region84: #{tpu_custom_call.1} parent=71 // pred_fallthru
          _
        %p474 = scmp.lt.s32.totalorder %s31, 1
        %s475 = scalar_select %p474, %s31, 1
        %s476 = smul.addr %s475, 16
        %s477 = smul.addr %s476, 8
        %s478 = scalar_lea.vmem %s0, %s477
        %p479 = pneg %p52
        %p480 = pneg %p49
        %p481 = pneg %p73
        %p482 = pneg %p70
        %p483 = pneg %p94
        %p484 = pneg %p91
        %p485 = pneg %p115
        %p486 = pneg %p112
        %p487 = pneg %p136
        %p488 = pneg %p133
        %p489 = pneg %p157
        %p490 = pneg %p154
        %p491 = pneg %p178
        %p492 = pneg %p175
        %p493 = pneg %p199
        %p494 = pneg %p196
        %p495 = pneg %p220
        %p496 = pneg %p217
        %p497 = pneg %p241
        %p498 = pneg %p238
        %p499 = pneg %p262
        %p500 = pneg %p259
        %p501 = pneg %p283
        %p502 = pneg %p280
        %p503 = pneg %p304
        %p504 = pneg %p301
        %p505 = pneg %p330
        %p506 = pneg %p327
        %s507 = sand.u32 %s317, 1
        %s508 = scalar_lea.sflag [#allocation4], %s507
        %s509 = sand.u32 %s317, 1
        %s510 = scalar_lea.vmem [#allocation8], %s509
        %p511 = pneg %p356
        %p512 = pneg %p353
        %p513 = scmp.lt.s32.totalorder %s31, 1
        %s514 = scalar_select %p513, %s31, 1
        %s515 = smul.addr %s514, 16
        %s516 = smul.addr %s515, 8
        %s517 = scalar_lea.vmem %s14, %s516
        %p518 = scmp.lt.s32.totalorder %s31, 1
        %s519 = scalar_select %p518, %s31, 1
        %s520 = smul.addr %s519, 16
        %s521 = smul.addr %s520, 8
        %s522 = scalar_lea.vmem %s0, %s521
        %p523 = scmp.lt.s32.totalorder %s31, 1
        %s524 = scalar_select %p523, %s31, 1
        %s525 = smul.addr %s524, 16
        %s526 = smul.addr %s525, 8
        %s527 = scalar_lea.vmem %s14, %s526
        %v529 = vld [vmem:[%s1] sm:$0x3]
        %v530 = vunpack.c.l.bf16 %v529
        %v531 = vld [vmem:[%s2] sm:$0x1]
        %v532 = vld [vmem:[%s3] sm:$0xf]
        %v533 = vld [vmem:[%s3 + $0x4] sm:$0xf]
        %v534 = vld [vmem:[%s3 + $0x8] sm:$0xf]
        %v535 = vld [vmem:[%s3 + $0xc] sm:$0xf]
        %v536 = vld [vmem:[%s3 + $0x10] sm:$0xf]
        %v537 = vld [vmem:[%s3 + $0x14] sm:$0xf]
        %v538 = vld [vmem:[%s3 + $0x18] sm:$0xf]
        %v539 = vld [vmem:[%s3 + $0x1c] sm:$0xf]
        %v540 = vld [vmem:[%s4] sm:$0x1]
        %v541 = vld [vmem:[#allocation2] sm:$0xff]
        %v542 = vld [vmem:[#allocation2 + $0x8] sm:$0xff]
        %v543 = vld [vmem:[#allocation2 + $0x10] sm:$0xff]
        %v544 = vld [vmem:[#allocation2 + $0x18] sm:$0xff]
        %v545 = vld [vmem:[#allocation2 + $0x20] sm:$0xff]
        %v546 = vld [vmem:[#allocation2 + $0x28] sm:$0xff]
        %v547 = vld [vmem:[#allocation2 + $0x30] sm:$0xff]
        %v548 = vld [vmem:[#allocation2 + $0x38] sm:$0xff]
        %v549 = vld [vmem:[#allocation2 + $0x40] sm:$0xff]
        %v550 = vld [vmem:[#allocation2 + $0x48] sm:$0xff]
        %v551 = vld [vmem:[#allocation2 + $0x50] sm:$0xff]
        %v552 = vld [vmem:[#allocation2 + $0x58] sm:$0xff]
        %v553 = vld [vmem:[#allocation2 + $0x60] sm:$0xff]
        %v554 = vld [vmem:[#allocation2 + $0x68] sm:$0xff]
        %v555 = vld [vmem:[#allocation2 + $0x70] sm:$0xff]
        %v556 = vld [vmem:[#allocation2 + $0x78] sm:$0xff]
        %v557 = vld [vmem:[#allocation2 + $0x80] sm:$0xff]
        %v558 = vld [vmem:[#allocation2 + $0x88] sm:$0xff]
        %v559 = vld [vmem:[#allocation2 + $0x90] sm:$0xff]
        %v560 = vld [vmem:[#allocation2 + $0x98] sm:$0xff]
        %v561 = vld [vmem:[#allocation2 + $0xa0] sm:$0xff]
        %v562 = vld [vmem:[#allocation2 + $0xa8] sm:$0xff]
        %v563 = vld [vmem:[#allocation2 + $0xb0] sm:$0xff]
        %v564 = vld [vmem:[#allocation2 + $0xb8] sm:$0xff]
        %v565 = vld [vmem:[#allocation2 + $0xc0] sm:$0xff]
        %v566 = vld [vmem:[#allocation2 + $0xc8] sm:$0xff]
        %v567 = vld [vmem:[#allocation2 + $0xd0] sm:$0xff]
        %v568 = vld [vmem:[#allocation2 + $0xd8] sm:$0xff]
        %v569 = vld [vmem:[#allocation2 + $0xe0] sm:$0xff]
        %v570 = vld [vmem:[#allocation2 + $0xe8] sm:$0xff]
        %v571 = vld [vmem:[#allocation2 + $0xf0] sm:$0xff]
        %v572 = vld [vmem:[#allocation2 + $0xf8] sm:$0xff]
        %v573 = vld [vmem:[#allocation2 + $0x100] sm:$0xff]
        %v574 = vld [vmem:[#allocation2 + $0x108] sm:$0xff]
        %v575 = vld [vmem:[#allocation2 + $0x110] sm:$0xff]
        %v576 = vld [vmem:[#allocation2 + $0x118] sm:$0xff]
        %v577 = vld [vmem:[#allocation2 + $0x120] sm:$0xff]
        %v578 = vld [vmem:[#allocation2 + $0x128] sm:$0xff]
        %v579 = vld [vmem:[#allocation2 + $0x130] sm:$0xff]
        %v580 = vld [vmem:[#allocation2 + $0x138] sm:$0xff]
        %v581 = vld [vmem:[#allocation2 + $0x140] sm:$0xff]
        %v582 = vld [vmem:[#allocation2 + $0x148] sm:$0xff]
        %v583 = vld [vmem:[#allocation2 + $0x150] sm:$0xff]
        %v584 = vld [vmem:[#allocation2 + $0x158] sm:$0xff]
        %v585 = vld [vmem:[#allocation2 + $0x160] sm:$0xff]
        %v586 = vld [vmem:[#allocation2 + $0x168] sm:$0xff]
        %v587 = vld [vmem:[#allocation2 + $0x170] sm:$0xff]
        %v588 = vld [vmem:[#allocation2 + $0x178] sm:$0xff]
        %v589 = vld [vmem:[#allocation2 + $0x180] sm:$0xff]
        %v590 = vld [vmem:[#allocation2 + $0x188] sm:$0xff]
        %v591 = vld [vmem:[#allocation2 + $0x190] sm:$0xff]
        %v592 = vld [vmem:[#allocation2 + $0x198] sm:$0xff]
        %v593 = vld [vmem:[#allocation2 + $0x1a0] sm:$0xff]
        %v594 = vld [vmem:[#allocation2 + $0x1a8] sm:$0xff]
        %v595 = vld [vmem:[#allocation2 + $0x1b0] sm:$0xff]
        %v596 = vld [vmem:[#allocation2 + $0x1b8] sm:$0xff]
        %v597 = vld [vmem:[#allocation2 + $0x1c0] sm:$0xff]
        %v598 = vld [vmem:[#allocation2 + $0x1c8] sm:$0xff]
        %v599 = vld [vmem:[#allocation2 + $0x1d0] sm:$0xff]
        %v600 = vld [vmem:[#allocation2 + $0x1d8] sm:$0xff]
        %v601 = vld [vmem:[#allocation2 + $0x1e0] sm:$0xff]
        %v602 = vld [vmem:[#allocation2 + $0x1e8] sm:$0xff]
        %v603 = vld [vmem:[#allocation2 + $0x1f0] sm:$0xff]
        %v604 = vld [vmem:[#allocation2 + $0x1f8] sm:$0xff]
        %v605 = vld [vmem:[%s6] sm:$0xff]
        %v606 = vld [vmem:[%s522] sm:$0xff]
        %v607 = vld [vmem:[%s522 + $0x8] sm:$0xff]
        %v608 = vld [vmem:[%s522 + $0x10] sm:$0xff]
        %v609 = vld [vmem:[%s522 + $0x18] sm:$0xff]
        %v610 = vld [vmem:[%s522 + $0x20] sm:$0xff]
        %v611 = vld [vmem:[%s522 + $0x28] sm:$0xff]
        %v612 = vld [vmem:[%s522 + $0x30] sm:$0xff]
        %v613 = vld [vmem:[%s522 + $0x38] sm:$0xff]
        %v614 = vld [vmem:[%s522 + $0x40] sm:$0xff]
        %v615 = vld [vmem:[%s522 + $0x48] sm:$0xff]
        %v616 = vld [vmem:[%s522 + $0x50] sm:$0xff]
        %v617 = vld [vmem:[%s522 + $0x58] sm:$0xff]
        %v618 = vld [vmem:[%s522 + $0x60] sm:$0xff]
        %v619 = vld [vmem:[%s522 + $0x68] sm:$0xff]
        %v620 = vld [vmem:[%s522 + $0x70] sm:$0xff]
        %v621 = vld [vmem:[%s522 + $0x78] sm:$0xff]
        %623 = vset.pattern.permute.xlu0 0
        %624 = vperm.xlu0 %623, %v606
        %v625 = vpop.permute.xlu0 %624
        %628 = vset.pattern.permute.xlu0 0
        %629 = vperm.xlu0 %628, %v607
        %v630 = vpop.permute.xlu0 %629
        %633 = vset.pattern.permute.xlu0 0
        %634 = vperm.xlu0 %633, %v608
        %v635 = vpop.permute.xlu0 %634
        %638 = vset.pattern.permute.xlu0 0
        %639 = vperm.xlu0 %638, %v609
        %v640 = vpop.permute.xlu0 %639
        %643 = vset.pattern.permute.xlu0 0
        %644 = vperm.xlu0 %643, %v610
        %v645 = vpop.permute.xlu0 %644
        %648 = vset.pattern.permute.xlu0 0
        %649 = vperm.xlu0 %648, %v611
        %v650 = vpop.permute.xlu0 %649
        %653 = vset.pattern.permute.xlu0 0
        %654 = vperm.xlu0 %653, %v612
        %v655 = vpop.permute.xlu0 %654
        %658 = vset.pattern.permute.xlu0 0
        %659 = vperm.xlu0 %658, %v613
        %v660 = vpop.permute.xlu0 %659
        %663 = vset.pattern.permute.xlu0 0
        %664 = vperm.xlu0 %663, %v614
        %v665 = vpop.permute.xlu0 %664
        %668 = vset.pattern.permute.xlu0 0
        %669 = vperm.xlu0 %668, %v615
        %v670 = vpop.permute.xlu0 %669
        %673 = vset.pattern.permute.xlu0 0
        %674 = vperm.xlu0 %673, %v616
        %v675 = vpop.permute.xlu0 %674
        %678 = vset.pattern.permute.xlu0 0
        %679 = vperm.xlu0 %678, %v617
        %v680 = vpop.permute.xlu0 %679
        %683 = vset.pattern.permute.xlu0 0
        %684 = vperm.xlu0 %683, %v618
        %v685 = vpop.permute.xlu0 %684
        %688 = vset.pattern.permute.xlu0 0
        %689 = vperm.xlu0 %688, %v619
        %v690 = vpop.permute.xlu0 %689
        %693 = vset.pattern.permute.xlu0 0
        %694 = vperm.xlu0 %693, %v620
        %v695 = vpop.permute.xlu0 %694
        %698 = vset.pattern.permute.xlu0 0
        %699 = vperm.xlu0 %698, %v621
        %v700 = vpop.permute.xlu0 %699
        %v702 = vperm.slane %v530, 0
        %v703 = vmul.f32 %v625, %v702
        %v704 = vmul.f32 %v630, %v702
        %v705 = vmul.f32 %v635, %v702
        %v706 = vmul.f32 %v640, %v702
        %v707 = vmul.f32 %v645, %v702
        %v708 = vmul.f32 %v650, %v702
        %v709 = vmul.f32 %v655, %v702
        %v710 = vmul.f32 %v660, %v702
        %v711 = vmul.f32 %v665, %v702
        %v712 = vmul.f32 %v670, %v702
        %v713 = vmul.f32 %v675, %v702
        %v714 = vmul.f32 %v680, %v702
        %v715 = vmul.f32 %v685, %v702
        %v716 = vmul.f32 %v690, %v702
        %v717 = vmul.f32 %v695, %v702
        %v718 = vmul.f32 %v700, %v702
        %719 = vset.pattern.permute.xlu0 1
        %720 = vperm.xlu0 %719, %v606
        %v721 = vpop.permute.xlu0 %720
        %723 = vset.pattern.permute.xlu0 1
        %724 = vperm.xlu0 %723, %v607
        %v725 = vpop.permute.xlu0 %724
        %727 = vset.pattern.permute.xlu0 1
        %728 = vperm.xlu0 %727, %v608
        %v729 = vpop.permute.xlu0 %728
        %731 = vset.pattern.permute.xlu0 1
        %732 = vperm.xlu0 %731, %v609
        %v733 = vpop.permute.xlu0 %732
        %735 = vset.pattern.permute.xlu0 1
        %736 = vperm.xlu0 %735, %v610
        %v737 = vpop.permute.xlu0 %736
        %739 = vset.pattern.permute.xlu0 1
        %740 = vperm.xlu0 %739, %v611
        %v741 = vpop.permute.xlu0 %740
        %743 = vset.pattern.permute.xlu0 1
        %744 = vperm.xlu0 %743, %v612
        %v745 = vpop.permute.xlu0 %744
        %747 = vset.pattern.permute.xlu0 1
        %748 = vperm.xlu0 %747, %v613
        %v749 = vpop.permute.xlu0 %748
        %751 = vset.pattern.permute.xlu0 1
        %752 = vperm.xlu0 %751, %v614
        %v753 = vpop.permute.xlu0 %752
        %755 = vset.pattern.permute.xlu0 1
        %756 = vperm.xlu0 %755, %v615
        %v757 = vpop.permute.xlu0 %756
        %759 = vset.pattern.permute.xlu0 1
        %760 = vperm.xlu0 %759, %v616
        %v761 = vpop.permute.xlu0 %760
        %763 = vset.pattern.permute.xlu0 1
        %764 = vperm.xlu0 %763, %v617
        %v765 = vpop.permute.xlu0 %764
        %767 = vset.pattern.permute.xlu0 1
        %768 = vperm.xlu0 %767, %v618
        %v769 = vpop.permute.xlu0 %768
        %771 = vset.pattern.permute.xlu0 1
        %772 = vperm.xlu0 %771, %v619
        %v773 = vpop.permute.xlu0 %772
        %775 = vset.pattern.permute.xlu0 1
        %776 = vperm.xlu0 %775, %v620
        %v777 = vpop.permute.xlu0 %776
        %779 = vset.pattern.permute.xlu0 1
        %780 = vperm.xlu0 %779, %v621
        %v781 = vpop.permute.xlu0 %780
        %v783 = vperm.slane %v530, 1
        %v784 = vmul.f32 %v721, %v783
        %v785 = vmul.f32 %v725, %v783
        %v786 = vmul.f32 %v729, %v783
        %v787 = vmul.f32 %v733, %v783
        %v788 = vmul.f32 %v737, %v783
        %v789 = vmul.f32 %v741, %v783
        %v790 = vmul.f32 %v745, %v783
        %v791 = vmul.f32 %v749, %v783
        %v792 = vmul.f32 %v753, %v783
        %v793 = vmul.f32 %v757, %v783
        %v794 = vmul.f32 %v761, %v783
        %v795 = vmul.f32 %v765, %v783
        %v796 = vmul.f32 %v769, %v783
        %v797 = vmul.f32 %v773, %v783
        %v798 = vmul.f32 %v777, %v783
        %v799 = vmul.f32 %v781, %v783
        %v800 = vadd.f32 %v703, %v784
        %v801 = vadd.f32 %v704, %v785
        %v802 = vadd.f32 %v705, %v786
        %v803 = vadd.f32 %v706, %v787
        %v804 = vadd.f32 %v707, %v788
        %v805 = vadd.f32 %v708, %v789
        %v806 = vadd.f32 %v709, %v790
        %v807 = vadd.f32 %v710, %v791
        %v808 = vadd.f32 %v711, %v792
        %v809 = vadd.f32 %v712, %v793
        %v810 = vadd.f32 %v713, %v794
        %v811 = vadd.f32 %v714, %v795
        %v812 = vadd.f32 %v715, %v796
        %v813 = vadd.f32 %v716, %v797
        %v814 = vadd.f32 %v717, %v798
        %v815 = vadd.f32 %v718, %v799
        %816 = vset.pattern.permute.xlu0 2
        %817 = vperm.xlu0 %816, %v606
        %v818 = vpop.permute.xlu0 %817
        %820 = vset.pattern.permute.xlu0 2
        %821 = vperm.xlu0 %820, %v607
        %v822 = vpop.permute.xlu0 %821
        %824 = vset.pattern.permute.xlu0 2
        %825 = vperm.xlu0 %824, %v608
        %v826 = vpop.permute.xlu0 %825
        %828 = vset.pattern.permute.xlu0 2
        %829 = vperm.xlu0 %828, %v609
        %v830 = vpop.permute.xlu0 %829
        %832 = vset.pattern.permute.xlu0 2
        %833 = vperm.xlu0 %832, %v610
        %v834 = vpop.permute.xlu0 %833
        %836 = vset.pattern.permute.xlu0 2
        %837 = vperm.xlu0 %836, %v611
        %v838 = vpop.permute.xlu0 %837
        %840 = vset.pattern.permute.xlu0 2
        %841 = vperm.xlu0 %840, %v612
        %v842 = vpop.permute.xlu0 %841
        %844 = vset.pattern.permute.xlu0 2
        %845 = vperm.xlu0 %844, %v613
        %v846 = vpop.permute.xlu0 %845
        %848 = vset.pattern.permute.xlu0 2
        %849 = vperm.xlu0 %848, %v614
        %v850 = vpop.permute.xlu0 %849
        %852 = vset.pattern.permute.xlu0 2
        %853 = vperm.xlu0 %852, %v615
        %v854 = vpop.permute.xlu0 %853
        %856 = vset.pattern.permute.xlu0 2
        %857 = vperm.xlu0 %856, %v616
        %v858 = vpop.permute.xlu0 %857
        %860 = vset.pattern.permute.xlu0 2
        %861 = vperm.xlu0 %860, %v617
        %v862 = vpop.permute.xlu0 %861
        %864 = vset.pattern.permute.xlu0 2
        %865 = vperm.xlu0 %864, %v618
        %v866 = vpop.permute.xlu0 %865
        %868 = vset.pattern.permute.xlu0 2
        %869 = vperm.xlu0 %868, %v619
        %v870 = vpop.permute.xlu0 %869
        %872 = vset.pattern.permute.xlu0 2
        %873 = vperm.xlu0 %872, %v620
        %v874 = vpop.permute.xlu0 %873
        %876 = vset.pattern.permute.xlu0 2
        %877 = vperm.xlu0 %876, %v621
        %v878 = vpop.permute.xlu0 %877
        %v880 = vperm.slane %v530, 2
        %v881 = vmul.f32 %v818, %v880
        %v882 = vmul.f32 %v822, %v880
        %v883 = vmul.f32 %v826, %v880
        %v884 = vmul.f32 %v830, %v880
        %v885 = vmul.f32 %v834, %v880
        %v886 = vmul.f32 %v838, %v880
        %v887 = vmul.f32 %v842, %v880
        %v888 = vmul.f32 %v846, %v880
        %v889 = vmul.f32 %v850, %v880
        %v890 = vmul.f32 %v854, %v880
        %v891 = vmul.f32 %v858, %v880
        %v892 = vmul.f32 %v862, %v880
        %v893 = vmul.f32 %v866, %v880
        %v894 = vmul.f32 %v870, %v880
        %v895 = vmul.f32 %v874, %v880
        %v896 = vmul.f32 %v878, %v880
        %v897 = vadd.f32 %v800, %v881
        %v898 = vadd.f32 %v801, %v882
        %v899 = vadd.f32 %v802, %v883
        %v900 = vadd.f32 %v803, %v884
        %v901 = vadd.f32 %v804, %v885
        %v902 = vadd.f32 %v805, %v886
        %v903 = vadd.f32 %v806, %v887
        %v904 = vadd.f32 %v807, %v888
        %v905 = vadd.f32 %v808, %v889
        %v906 = vadd.f32 %v809, %v890
        %v907 = vadd.f32 %v810, %v891
        %v908 = vadd.f32 %v811, %v892
        %v909 = vadd.f32 %v812, %v893
        %v910 = vadd.f32 %v813, %v894
        %v911 = vadd.f32 %v814, %v895
        %v912 = vadd.f32 %v815, %v896
        %v914 = vperm.slane %v531, 0
        %v916 = vadd.f32 %v897, %v914
        %v917 = vadd.f32 %v898, %v914
        %v918 = vadd.f32 %v899, %v914
        %v919 = vadd.f32 %v900, %v914
        %v920 = vadd.f32 %v901, %v914
        %v921 = vadd.f32 %v902, %v914
        %v922 = vadd.f32 %v903, %v914
        %v923 = vadd.f32 %v904, %v914
        %v924 = vadd.f32 %v905, %v914
        %v925 = vadd.f32 %v906, %v914
        %v926 = vadd.f32 %v907, %v914
        %v927 = vadd.f32 %v908, %v914
        %v928 = vadd.f32 %v909, %v914
        %v929 = vadd.f32 %v910, %v914
        %v930 = vadd.f32 %v911, %v914
        %v931 = vadd.f32 %v912, %v914
        %v932 = vmax.f32 %v916, 0.0
        %v933 = vmax.f32 %v917, 0.0
        %v934 = vmax.f32 %v918, 0.0
        %v935 = vmax.f32 %v919, 0.0
        %v936 = vmax.f32 %v920, 0.0
        %v937 = vmax.f32 %v921, 0.0
        %v938 = vmax.f32 %v922, 0.0
        %v939 = vmax.f32 %v923, 0.0
        %v940 = vmax.f32 %v924, 0.0
        %v941 = vmax.f32 %v925, 0.0
        %v942 = vmax.f32 %v926, 0.0
        %v943 = vmax.f32 %v927, 0.0
        %v944 = vmax.f32 %v928, 0.0
        %v945 = vmax.f32 %v929, 0.0
        %v946 = vmax.f32 %v930, 0.0
        %v947 = vmax.f32 %v931, 0.0
        %v948 = vpack.c.bf16 %v933, %v932
        %v949 = vpack.c.bf16 %v935, %v934
        %v950 = vpack.c.bf16 %v937, %v936
        %v951 = vpack.c.bf16 %v939, %v938
        %v952 = vpack.c.bf16 %v941, %v940
        %v953 = vpack.c.bf16 %v943, %v942
        %v954 = vpack.c.bf16 %v945, %v944
        %v955 = vpack.c.bf16 %v947, %v946
        %v957 = vperm.slane %v540, 0
        %v967 = vunpack.c.l.b16 %v532
        %v968 = vunpack.c.l.b16 %v533
        %v969 = vunpack.c.l.b16 %v534
        %v970 = vunpack.c.l.b16 %v535
        %v971 = vunpack.c.l.b16 %v536
        %v972 = vunpack.c.l.b16 %v537
        %v973 = vunpack.c.l.b16 %v538
        %v974 = vunpack.c.l.b16 %v539
        %v975 = vpack.c.b16 %v968, %v967
        %v976 = vpack.c.b16 %v970, %v969
        %v977 = vpack.c.b16 %v972, %v971
        %v978 = vpack.c.b16 %v974, %v973
        %vm983 = vcmask 523264
        %v985 = vsel %vm983, %v948, 0
        %v988 = vsel %vm983, %v949, 0
        %v991 = vsel %vm983, %v950, 0
        %v994 = vsel %vm983, %v951, 0
        %v997 = vsel %vm983, %v952, 0
        %v1000 = vsel %vm983, %v953, 0
        %v1003 = vsel %vm983, %v954, 0
        %v1006 = vsel %vm983, %v955, 0
        %1008 = vmatpush.bf16.msra.mxu0 0
        %1009 = vmatpush.bf16.msra.mxu0 0
        %1010 = vmatpush.bf16.msra.mxu0 0
        %1011 = vmatpush.bf16.msra.mxu0 0
        %1012 = vmatpush.bf16.msra.mxu0 %v978
        %1013 = vmatpush.bf16.msra.mxu0 %v977
        %1014 = vmatpush.bf16.msra.mxu0 %v976
        %1015 = vmatpush.bf16.msra.mxu0 %v975
        %1016 = vmatmul.bf16.gmra.mxu0 %v985
        %v1017 = vpop.f32.mrf.mxu0
        %v1018 = vadd.f32 %v957, %v1017
        %v1019 = vpop.f32.mrf.mxu0
        %v1020 = vadd.f32 %v957, %v1019
        %1021 = vmatmul.bf16.gmra.mxu0 %v988
        %v1022 = vpop.f32.mrf.mxu0
        %v1023 = vadd.f32 %v957, %v1022
        %v1024 = vpop.f32.mrf.mxu0
        %v1025 = vadd.f32 %v957, %v1024
        %1026 = vmatmul.bf16.gmra.mxu0 %v991
        %v1027 = vpop.f32.mrf.mxu0
        %v1028 = vadd.f32 %v957, %v1027
        %v1029 = vpop.f32.mrf.mxu0
        %v1030 = vadd.f32 %v957, %v1029
        %1031 = vmatmul.bf16.gmra.mxu0 %v994
        %v1032 = vpop.f32.mrf.mxu0
        %v1033 = vadd.f32 %v957, %v1032
        %v1034 = vpop.f32.mrf.mxu0
        %v1035 = vadd.f32 %v957, %v1034
        %1036 = vmatmul.bf16.gmra.mxu0 %v997
        %v1037 = vpop.f32.mrf.mxu0
        %v1038 = vadd.f32 %v957, %v1037
        %v1039 = vpop.f32.mrf.mxu0
        %v1040 = vadd.f32 %v957, %v1039
        %1041 = vmatmul.bf16.gmra.mxu0 %v1000
        %v1042 = vpop.f32.mrf.mxu0
        %v1043 = vadd.f32 %v957, %v1042
        %v1044 = vpop.f32.mrf.mxu0
        %v1045 = vadd.f32 %v957, %v1044
        %1046 = vmatmul.bf16.gmra.mxu0 %v1003
        %v1047 = vpop.f32.mrf.mxu0
        %v1048 = vadd.f32 %v957, %v1047
        %v1049 = vpop.f32.mrf.mxu0
        %v1050 = vadd.f32 %v957, %v1049
        %1051 = vmatmul.bf16.gmra.mxu0 %v1006
        %v1052 = vpop.f32.mrf.mxu0
        %v1053 = vadd.f32 %v957, %v1052
        %v1054 = vpop.f32.mrf.mxu0
        %v1055 = vadd.f32 %v957, %v1054
        %1056 = vdwg.mxu0
        %v1057 = vmax.f32 %v1018, 0.0
        %v1058 = vmax.f32 %v1020, 0.0
        %v1059 = vmax.f32 %v1023, 0.0
        %v1060 = vmax.f32 %v1025, 0.0
        %v1061 = vmax.f32 %v1028, 0.0
        %v1062 = vmax.f32 %v1030, 0.0
        %v1063 = vmax.f32 %v1033, 0.0
        %v1064 = vmax.f32 %v1035, 0.0
        %v1065 = vmax.f32 %v1038, 0.0
        %v1066 = vmax.f32 %v1040, 0.0
        %v1067 = vmax.f32 %v1043, 0.0
        %v1068 = vmax.f32 %v1045, 0.0
        %v1069 = vmax.f32 %v1048, 0.0
        %v1070 = vmax.f32 %v1050, 0.0
        %v1071 = vmax.f32 %v1053, 0.0
        %v1072 = vmax.f32 %v1055, 0.0
        %v1073 = vpack.c.bf16 %v1058, %v1057
        %v1074 = vpack.c.bf16 %v1060, %v1059
        %v1075 = vpack.c.bf16 %v1062, %v1061
        %v1076 = vpack.c.bf16 %v1064, %v1063
        %v1077 = vpack.c.bf16 %v1066, %v1065
        %v1078 = vpack.c.bf16 %v1068, %v1067
        %v1079 = vpack.c.bf16 %v1070, %v1069
        %v1080 = vpack.c.bf16 %v1072, %v1071
        %v1082 = vperm.slane %v605, 0
        %v1083 = vperm.slane %v605, 1
        %v1084 = vperm.slane %v605, 2
        %v1085 = vperm.slane %v605, 3
        %v1086 = vperm.slane %v605, 4
        %v1087 = vperm.slane %v605, 5
        %v1088 = vperm.slane %v605, 6
        %v1089 = vperm.slane %v605, 7
        %v1162 = vunpack.c.l.b16 %v541
        %v1163 = vunpack.c.h.b16 %v541
        %v1164 = vunpack.c.l.b16 %v542
        %v1165 = vunpack.c.h.b16 %v542
        %v1166 = vunpack.c.l.b16 %v543
        %v1167 = vunpack.c.h.b16 %v543
        %v1168 = vunpack.c.l.b16 %v544
        %v1169 = vunpack.c.h.b16 %v544
        %v1170 = vunpack.c.l.b16 %v545
        %v1171 = vunpack.c.h.b16 %v545
        %v1172 = vunpack.c.l.b16 %v546
        %v1173 = vunpack.c.h.b16 %v546
        %v1174 = vunpack.c.l.b16 %v547
        %v1175 = vunpack.c.h.b16 %v547
        %v1176 = vunpack.c.l.b16 %v548
        %v1177 = vunpack.c.h.b16 %v548
        %v1178 = vunpack.c.l.b16 %v549
        %v1179 = vunpack.c.h.b16 %v549
        %v1180 = vunpack.c.l.b16 %v550
        %v1181 = vunpack.c.h.b16 %v550
        %v1182 = vunpack.c.l.b16 %v551
        %v1183 = vunpack.c.h.b16 %v551
        %v1184 = vunpack.c.l.b16 %v552
        %v1185 = vunpack.c.h.b16 %v552
        %v1186 = vunpack.c.l.b16 %v553
        %v1187 = vunpack.c.h.b16 %v553
        %v1188 = vunpack.c.l.b16 %v554
        %v1189 = vunpack.c.h.b16 %v554
        %v1190 = vunpack.c.l.b16 %v555
        %v1191 = vunpack.c.h.b16 %v555
        %v1192 = vunpack.c.l.b16 %v556
        %v1193 = vunpack.c.h.b16 %v556
        %v1194 = vunpack.c.l.b16 %v557
        %v1195 = vunpack.c.h.b16 %v557
        %v1196 = vunpack.c.l.b16 %v558
        %v1197 = vunpack.c.h.b16 %v558
        %v1198 = vunpack.c.l.b16 %v559
        %v1199 = vunpack.c.h.b16 %v559
        %v1200 = vunpack.c.l.b16 %v560
        %v1201 = vunpack.c.h.b16 %v560
        %v1202 = vunpack.c.l.b16 %v561
        %v1203 = vunpack.c.h.b16 %v561
        %v1204 = vunpack.c.l.b16 %v562
        %v1205 = vunpack.c.h.b16 %v562
        %v1206 = vunpack.c.l.b16 %v563
        %v1207 = vunpack.c.h.b16 %v563
        %v1208 = vunpack.c.l.b16 %v564
        %v1209 = vunpack.c.h.b16 %v564
        %v1210 = vunpack.c.l.b16 %v565
        %v1211 = vunpack.c.h.b16 %v565
        %v1212 = vunpack.c.l.b16 %v566
        %v1213 = vunpack.c.h.b16 %v566
        %v1214 = vunpack.c.l.b16 %v567
        %v1215 = vunpack.c.h.b16 %v567
        %v1216 = vunpack.c.l.b16 %v568
        %v1217 = vunpack.c.h.b16 %v568
        %v1218 = vunpack.c.l.b16 %v569
        %v1219 = vunpack.c.h.b16 %v569
        %v1220 = vunpack.c.l.b16 %v570
        %v1221 = vunpack.c.h.b16 %v570
        %v1222 = vunpack.c.l.b16 %v571
        %v1223 = vunpack.c.h.b16 %v571
        %v1224 = vunpack.c.l.b16 %v572
        %v1225 = vunpack.c.h.b16 %v572
        %v1226 = vunpack.c.l.b16 %v573
        %v1227 = vunpack.c.h.b16 %v573
        %v1228 = vunpack.c.l.b16 %v574
        %v1229 = vunpack.c.h.b16 %v574
        %v1230 = vunpack.c.l.b16 %v575
        %v1231 = vunpack.c.h.b16 %v575
        %v1232 = vunpack.c.l.b16 %v576
        %v1233 = vunpack.c.h.b16 %v576
        %v1234 = vunpack.c.l.b16 %v577
        %v1235 = vunpack.c.h.b16 %v577
        %v1236 = vunpack.c.l.b16 %v578
        %v1237 = vunpack.c.h.b16 %v578
        %v1238 = vunpack.c.l.b16 %v579
        %v1239 = vunpack.c.h.b16 %v579
        %v1240 = vunpack.c.l.b16 %v580
        %v1241 = vunpack.c.h.b16 %v580
        %v1242 = vunpack.c.l.b16 %v581
        %v1243 = vunpack.c.h.b16 %v581
        %v1244 = vunpack.c.l.b16 %v582
        %v1245 = vunpack.c.h.b16 %v582
        %v1246 = vunpack.c.l.b16 %v583
        %v1247 = vunpack.c.h.b16 %v583
        %v1248 = vunpack.c.l.b16 %v584
        %v1249 = vunpack.c.h.b16 %v584
        %v1250 = vunpack.c.l.b16 %v585
        %v1251 = vunpack.c.h.b16 %v585
        %v1252 = vunpack.c.l.b16 %v586
        %v1253 = vunpack.c.h.b16 %v586
        %v1254 = vunpack.c.l.b16 %v587
        %v1255 = vunpack.c.h.b16 %v587
        %v1256 = vunpack.c.l.b16 %v588
        %v1257 = vunpack.c.h.b16 %v588
        %v1258 = vunpack.c.l.b16 %v589
        %v1259 = vunpack.c.h.b16 %v589
        %v1260 = vunpack.c.l.b16 %v590
        %v1261 = vunpack.c.h.b16 %v590
        %v1262 = vunpack.c.l.b16 %v591
        %v1263 = vunpack.c.h.b16 %v591
        %v1264 = vunpack.c.l.b16 %v592
        %v1265 = vunpack.c.h.b16 %v592
        %v1266 = vunpack.c.l.b16 %v593
        %v1267 = vunpack.c.h.b16 %v593
        %v1268 = vunpack.c.l.b16 %v594
        %v1269 = vunpack.c.h.b16 %v594
        %v1270 = vunpack.c.l.b16 %v595
        %v1271 = vunpack.c.h.b16 %v595
        %v1272 = vunpack.c.l.b16 %v596
        %v1273 = vunpack.c.h.b16 %v596
        %v1274 = vunpack.c.l.b16 %v597
        %v1275 = vunpack.c.h.b16 %v597
        %v1276 = vunpack.c.l.b16 %v598
        %v1277 = vunpack.c.h.b16 %v598
        %v1278 = vunpack.c.l.b16 %v599
        %v1279 = vunpack.c.h.b16 %v599
        %v1280 = vunpack.c.l.b16 %v600
        %v1281 = vunpack.c.h.b16 %v600
        %v1282 = vunpack.c.l.b16 %v601
        %v1283 = vunpack.c.h.b16 %v601
        %v1284 = vunpack.c.l.b16 %v602
        %v1285 = vunpack.c.h.b16 %v602
        %v1286 = vunpack.c.l.b16 %v603
        %v1287 = vunpack.c.h.b16 %v603
        %v1288 = vunpack.c.l.b16 %v604
        %v1289 = vunpack.c.h.b16 %v604
        %v1290 = vpack.c.b16 %v1170, %v1162
        %v1291 = vpack.c.b16 %v1171, %v1163
        %v1292 = vpack.c.b16 %v1172, %v1164
        %v1293 = vpack.c.b16 %v1173, %v1165
        %v1294 = vpack.c.b16 %v1174, %v1166
        %v1295 = vpack.c.b16 %v1175, %v1167
        %v1296 = vpack.c.b16 %v1176, %v1168
        %v1297 = vpack.c.b16 %v1177, %v1169
        %v1298 = vpack.c.b16 %v1186, %v1178
        %v1299 = vpack.c.b16 %v1187, %v1179
        %v1300 = vpack.c.b16 %v1188, %v1180
        %v1301 = vpack.c.b16 %v1189, %v1181
        %v1302 = vpack.c.b16 %v1190, %v1182
        %v1303 = vpack.c.b16 %v1191, %v1183
        %v1304 = vpack.c.b16 %v1192, %v1184
        %v1305 = vpack.c.b16 %v1193, %v1185
        %v1306 = vpack.c.b16 %v1202, %v1194
        %v1307 = vpack.c.b16 %v1203, %v1195
        %v1308 = vpack.c.b16 %v1204, %v1196
        %v1309 = vpack.c.b16 %v1205, %v1197
        %v1310 = vpack.c.b16 %v1206, %v1198
        %v1311 = vpack.c.b16 %v1207, %v1199
        %v1312 = vpack.c.b16 %v1208, %v1200
        %v1313 = vpack.c.b16 %v1209, %v1201
        %v1314 = vpack.c.b16 %v1218, %v1210
        %v1315 = vpack.c.b16 %v1219, %v1211
        %v1316 = vpack.c.b16 %v1220, %v1212
        %v1317 = vpack.c.b16 %v1221, %v1213
        %v1318 = vpack.c.b16 %v1222, %v1214
        %v1319 = vpack.c.b16 %v1223, %v1215
        %v1320 = vpack.c.b16 %v1224, %v1216
        %v1321 = vpack.c.b16 %v1225, %v1217
        %v1322 = vpack.c.b16 %v1234, %v1226
        %v1323 = vpack.c.b16 %v1235, %v1227
        %v1324 = vpack.c.b16 %v1236, %v1228
        %v1325 = vpack.c.b16 %v1237, %v1229
        %v1326 = vpack.c.b16 %v1238, %v1230
        %v1327 = vpack.c.b16 %v1239, %v1231
        %v1328 = vpack.c.b16 %v1240, %v1232
        %v1329 = vpack.c.b16 %v1241, %v1233
        %v1330 = vpack.c.b16 %v1250, %v1242
        %v1331 = vpack.c.b16 %v1251, %v1243
        %v1332 = vpack.c.b16 %v1252, %v1244
        %v1333 = vpack.c.b16 %v1253, %v1245
        %v1334 = vpack.c.b16 %v1254, %v1246
        %v1335 = vpack.c.b16 %v1255, %v1247
        %v1336 = vpack.c.b16 %v1256, %v1248
        %v1337 = vpack.c.b16 %v1257, %v1249
        %v1338 = vpack.c.b16 %v1266, %v1258
        %v1339 = vpack.c.b16 %v1267, %v1259
        %v1340 = vpack.c.b16 %v1268, %v1260
        %v1341 = vpack.c.b16 %v1269, %v1261
        %v1342 = vpack.c.b16 %v1270, %v1262
        %v1343 = vpack.c.b16 %v1271, %v1263
        %v1344 = vpack.c.b16 %v1272, %v1264
        %v1345 = vpack.c.b16 %v1273, %v1265
        %v1346 = vpack.c.b16 %v1282, %v1274
        %v1347 = vpack.c.b16 %v1283, %v1275
        %v1348 = vpack.c.b16 %v1284, %v1276
        %v1349 = vpack.c.b16 %v1285, %v1277
        %v1350 = vpack.c.b16 %v1286, %v1278
        %v1351 = vpack.c.b16 %v1287, %v1279
        %v1352 = vpack.c.b16 %v1288, %v1280
        %v1353 = vpack.c.b16 %v1289, %v1281
        %1418 = vmatpush.bf16.msra.mxu0 %v1346
        %1419 = vmatpush.bf16.msra.mxu0 %v1338
        %1420 = vmatpush.bf16.msra.mxu0 %v1330
        %1421 = vmatpush.bf16.msra.mxu0 %v1322
        %1422 = vmatpush.bf16.msra.mxu0 %v1314
        %1423 = vmatpush.bf16.msra.mxu0 %v1306
        %1424 = vmatpush.bf16.msra.mxu0 %v1298
        %1425 = vmatpush.bf16.msra.mxu0 %v1290
        %1426 = vmatmul.bf16.gmra.mxu0 %v1073
        %v1427 = vpop.f32.mrf.mxu0
        %v1428 = vadd.f32 %v1082, %v1427
        %v1429 = vpop.f32.mrf.mxu0
        %v1430 = vadd.f32 %v1082, %v1429
        %1431 = vmatmul.bf16.gmra.mxu0 %v1074
        %v1432 = vpop.f32.mrf.mxu0
        %v1433 = vadd.f32 %v1082, %v1432
        %v1434 = vpop.f32.mrf.mxu0
        %v1435 = vadd.f32 %v1082, %v1434
        %1436 = vmatmul.bf16.gmra.mxu0 %v1075
        %v1437 = vpop.f32.mrf.mxu0
        %v1438 = vadd.f32 %v1082, %v1437
        %v1439 = vpop.f32.mrf.mxu0
        %v1440 = vadd.f32 %v1082, %v1439
        %1441 = vmatmul.bf16.gmra.mxu0 %v1076
        %v1442 = vpop.f32.mrf.mxu0
        %v1443 = vadd.f32 %v1082, %v1442
        %v1444 = vpop.f32.mrf.mxu0
        %v1445 = vadd.f32 %v1082, %v1444
        %1446 = vmatmul.bf16.gmra.mxu0 %v1077
        %v1447 = vpop.f32.mrf.mxu0
        %v1448 = vadd.f32 %v1082, %v1447
        %v1449 = vpop.f32.mrf.mxu0
        %v1450 = vadd.f32 %v1082, %v1449
        %1451 = vmatmul.bf16.gmra.mxu0 %v1078
        %v1452 = vpop.f32.mrf.mxu0
        %v1453 = vadd.f32 %v1082, %v1452
        %v1454 = vpop.f32.mrf.mxu0
        %v1455 = vadd.f32 %v1082, %v1454
        %1456 = vmatmul.bf16.gmra.mxu0 %v1079
        %v1457 = vpop.f32.mrf.mxu0
        %v1458 = vadd.f32 %v1082, %v1457
        %v1459 = vpop.f32.mrf.mxu0
        %v1460 = vadd.f32 %v1082, %v1459
        %1461 = vmatmul.bf16.gmra.mxu0 %v1080
        %v1462 = vpop.f32.mrf.mxu0
        %v1463 = vadd.f32 %v1082, %v1462
        %v1464 = vpop.f32.mrf.mxu0
        %v1465 = vadd.f32 %v1082, %v1464
        %1466 = vdwg.mxu0
        %1467 = vmatpush.bf16.msra.mxu0 %v1347
        %1468 = vmatpush.bf16.msra.mxu0 %v1339
        %1469 = vmatpush.bf16.msra.mxu0 %v1331
        %1470 = vmatpush.bf16.msra.mxu0 %v1323
        %1471 = vmatpush.bf16.msra.mxu0 %v1315
        %1472 = vmatpush.bf16.msra.mxu0 %v1307
        %1473 = vmatpush.bf16.msra.mxu0 %v1299
        %1474 = vmatpush.bf16.msra.mxu0 %v1291
        %1475 = vmatmul.bf16.gmra.mxu0 %v1073
        %v1476 = vpop.f32.mrf.mxu0
        %v1477 = vadd.f32 %v1083, %v1476
        %v1478 = vpop.f32.mrf.mxu0
        %v1479 = vadd.f32 %v1083, %v1478
        %1480 = vmatmul.bf16.gmra.mxu0 %v1074
        %v1481 = vpop.f32.mrf.mxu0
        %v1482 = vadd.f32 %v1083, %v1481
        %v1483 = vpop.f32.mrf.mxu0
        %v1484 = vadd.f32 %v1083, %v1483
        %1485 = vmatmul.bf16.gmra.mxu0 %v1075
        %v1486 = vpop.f32.mrf.mxu0
        %v1487 = vadd.f32 %v1083, %v1486
        %v1488 = vpop.f32.mrf.mxu0
        %v1489 = vadd.f32 %v1083, %v1488
        %1490 = vmatmul.bf16.gmra.mxu0 %v1076
        %v1491 = vpop.f32.mrf.mxu0
        %v1492 = vadd.f32 %v1083, %v1491
        %v1493 = vpop.f32.mrf.mxu0
        %v1494 = vadd.f32 %v1083, %v1493
        %1495 = vmatmul.bf16.gmra.mxu0 %v1077
        %v1496 = vpop.f32.mrf.mxu0
        %v1497 = vadd.f32 %v1083, %v1496
        %v1498 = vpop.f32.mrf.mxu0
        %v1499 = vadd.f32 %v1083, %v1498
        %1500 = vmatmul.bf16.gmra.mxu0 %v1078
        %v1501 = vpop.f32.mrf.mxu0
        %v1502 = vadd.f32 %v1083, %v1501
        %v1503 = vpop.f32.mrf.mxu0
        %v1504 = vadd.f32 %v1083, %v1503
        %1505 = vmatmul.bf16.gmra.mxu0 %v1079
        %v1506 = vpop.f32.mrf.mxu0
        %v1507 = vadd.f32 %v1083, %v1506
        %v1508 = vpop.f32.mrf.mxu0
        %v1509 = vadd.f32 %v1083, %v1508
        %1510 = vmatmul.bf16.gmra.mxu0 %v1080
        %v1511 = vpop.f32.mrf.mxu0
        %v1512 = vadd.f32 %v1083, %v1511
        %v1513 = vpop.f32.mrf.mxu0
        %v1514 = vadd.f32 %v1083, %v1513
        %1515 = vdwg.mxu0
        %1516 = vmatpush.bf16.msra.mxu0 %v1348
        %1517 = vmatpush.bf16.msra.mxu0 %v1340
        %1518 = vmatpush.bf16.msra.mxu0 %v1332
        %1519 = vmatpush.bf16.msra.mxu0 %v1324
        %1520 = vmatpush.bf16.msra.mxu0 %v1316
        %1521 = vmatpush.bf16.msra.mxu0 %v1308
        %1522 = vmatpush.bf16.msra.mxu0 %v1300
        %1523 = vmatpush.bf16.msra.mxu0 %v1292
        %1524 = vmatmul.bf16.gmra.mxu0 %v1073
        %v1525 = vpop.f32.mrf.mxu0
        %v1526 = vadd.f32 %v1084, %v1525
        %v1527 = vpop.f32.mrf.mxu0
        %v1528 = vadd.f32 %v1084, %v1527
        %1529 = vmatmul.bf16.gmra.mxu0 %v1074
        %v1530 = vpop.f32.mrf.mxu0
        %v1531 = vadd.f32 %v1084, %v1530
        %v1532 = vpop.f32.mrf.mxu0
        %v1533 = vadd.f32 %v1084, %v1532
        %1534 = vmatmul.bf16.gmra.mxu0 %v1075
        %v1535 = vpop.f32.mrf.mxu0
        %v1536 = vadd.f32 %v1084, %v1535
        %v1537 = vpop.f32.mrf.mxu0
        %v1538 = vadd.f32 %v1084, %v1537
        %1539 = vmatmul.bf16.gmra.mxu0 %v1076
        %v1540 = vpop.f32.mrf.mxu0
        %v1541 = vadd.f32 %v1084, %v1540
        %v1542 = vpop.f32.mrf.mxu0
        %v1543 = vadd.f32 %v1084, %v1542
        %1544 = vmatmul.bf16.gmra.mxu0 %v1077
        %v1545 = vpop.f32.mrf.mxu0
        %v1546 = vadd.f32 %v1084, %v1545
        %v1547 = vpop.f32.mrf.mxu0
        %v1548 = vadd.f32 %v1084, %v1547
        %1549 = vmatmul.bf16.gmra.mxu0 %v1078
        %v1550 = vpop.f32.mrf.mxu0
        %v1551 = vadd.f32 %v1084, %v1550
        %v1552 = vpop.f32.mrf.mxu0
        %v1553 = vadd.f32 %v1084, %v1552
        %1554 = vmatmul.bf16.gmra.mxu0 %v1079
        %v1555 = vpop.f32.mrf.mxu0
        %v1556 = vadd.f32 %v1084, %v1555
        %v1557 = vpop.f32.mrf.mxu0
        %v1558 = vadd.f32 %v1084, %v1557
        %1559 = vmatmul.bf16.gmra.mxu0 %v1080
        %v1560 = vpop.f32.mrf.mxu0
        %v1561 = vadd.f32 %v1084, %v1560
        %v1562 = vpop.f32.mrf.mxu0
        %v1563 = vadd.f32 %v1084, %v1562
        %1564 = vdwg.mxu0
        %1565 = vmatpush.bf16.msra.mxu0 %v1349
        %1566 = vmatpush.bf16.msra.mxu0 %v1341
        %1567 = vmatpush.bf16.msra.mxu0 %v1333
        %1568 = vmatpush.bf16.msra.mxu0 %v1325
        %1569 = vmatpush.bf16.msra.mxu0 %v1317
        %1570 = vmatpush.bf16.msra.mxu0 %v1309
        %1571 = vmatpush.bf16.msra.mxu0 %v1301
        %1572 = vmatpush.bf16.msra.mxu0 %v1293
        %1573 = vmatmul.bf16.gmra.mxu0 %v1073
        %v1574 = vpop.f32.mrf.mxu0
        %v1575 = vadd.f32 %v1085, %v1574
        %v1576 = vpop.f32.mrf.mxu0
        %v1577 = vadd.f32 %v1085, %v1576
        %1578 = vmatmul.bf16.gmra.mxu0 %v1074
        %v1579 = vpop.f32.mrf.mxu0
        %v1580 = vadd.f32 %v1085, %v1579
        %v1581 = vpop.f32.mrf.mxu0
        %v1582 = vadd.f32 %v1085, %v1581
        %1583 = vmatmul.bf16.gmra.mxu0 %v1075
        %v1584 = vpop.f32.mrf.mxu0
        %v1585 = vadd.f32 %v1085, %v1584
        %v1586 = vpop.f32.mrf.mxu0
        %v1587 = vadd.f32 %v1085, %v1586
        %1588 = vmatmul.bf16.gmra.mxu0 %v1076
        %v1589 = vpop.f32.mrf.mxu0
        %v1590 = vadd.f32 %v1085, %v1589
        %v1591 = vpop.f32.mrf.mxu0
        %v1592 = vadd.f32 %v1085, %v1591
        %1593 = vmatmul.bf16.gmra.mxu0 %v1077
        %v1594 = vpop.f32.mrf.mxu0
        %v1595 = vadd.f32 %v1085, %v1594
        %v1596 = vpop.f32.mrf.mxu0
        %v1597 = vadd.f32 %v1085, %v1596
        %1598 = vmatmul.bf16.gmra.mxu0 %v1078
        %v1599 = vpop.f32.mrf.mxu0
        %v1600 = vadd.f32 %v1085, %v1599
        %v1601 = vpop.f32.mrf.mxu0
        %v1602 = vadd.f32 %v1085, %v1601
        %1603 = vmatmul.bf16.gmra.mxu0 %v1079
        %v1604 = vpop.f32.mrf.mxu0
        %v1605 = vadd.f32 %v1085, %v1604
        %v1606 = vpop.f32.mrf.mxu0
        %v1607 = vadd.f32 %v1085, %v1606
        %1608 = vmatmul.bf16.gmra.mxu0 %v1080
        %v1609 = vpop.f32.mrf.mxu0
        %v1610 = vadd.f32 %v1085, %v1609
        %v1611 = vpop.f32.mrf.mxu0
        %v1612 = vadd.f32 %v1085, %v1611
        %1613 = vdwg.mxu0
        %1614 = vmatpush.bf16.msra.mxu0 %v1350
        %1615 = vmatpush.bf16.msra.mxu0 %v1342
        %1616 = vmatpush.bf16.msra.mxu0 %v1334
        %1617 = vmatpush.bf16.msra.mxu0 %v1326
        %1618 = vmatpush.bf16.msra.mxu0 %v1318
        %1619 = vmatpush.bf16.msra.mxu0 %v1310
        %1620 = vmatpush.bf16.msra.mxu0 %v1302
        %1621 = vmatpush.bf16.msra.mxu0 %v1294
        %1622 = vmatmul.bf16.gmra.mxu0 %v1073
        %v1623 = vpop.f32.mrf.mxu0
        %v1624 = vadd.f32 %v1086, %v1623
        %v1625 = vpop.f32.mrf.mxu0
        %v1626 = vadd.f32 %v1086, %v1625
        %1627 = vmatmul.bf16.gmra.mxu0 %v1074
        %v1628 = vpop.f32.mrf.mxu0
        %v1629 = vadd.f32 %v1086, %v1628
        %v1630 = vpop.f32.mrf.mxu0
        %v1631 = vadd.f32 %v1086, %v1630
        %1632 = vmatmul.bf16.gmra.mxu0 %v1075
        %v1633 = vpop.f32.mrf.mxu0
        %v1634 = vadd.f32 %v1086, %v1633
        %v1635 = vpop.f32.mrf.mxu0
        %v1636 = vadd.f32 %v1086, %v1635
        %1637 = vmatmul.bf16.gmra.mxu0 %v1076
        %v1638 = vpop.f32.mrf.mxu0
        %v1639 = vadd.f32 %v1086, %v1638
        %v1640 = vpop.f32.mrf.mxu0
        %v1641 = vadd.f32 %v1086, %v1640
        %1642 = vmatmul.bf16.gmra.mxu0 %v1077
        %v1643 = vpop.f32.mrf.mxu0
        %v1644 = vadd.f32 %v1086, %v1643
        %v1645 = vpop.f32.mrf.mxu0
        %v1646 = vadd.f32 %v1086, %v1645
        %1647 = vmatmul.bf16.gmra.mxu0 %v1078
        %v1648 = vpop.f32.mrf.mxu0
        %v1649 = vadd.f32 %v1086, %v1648
        %v1650 = vpop.f32.mrf.mxu0
        %v1651 = vadd.f32 %v1086, %v1650
        %1652 = vmatmul.bf16.gmra.mxu0 %v1079
        %v1653 = vpop.f32.mrf.mxu0
        %v1654 = vadd.f32 %v1086, %v1653
        %v1655 = vpop.f32.mrf.mxu0
        %v1656 = vadd.f32 %v1086, %v1655
        %1657 = vmatmul.bf16.gmra.mxu0 %v1080
        %v1658 = vpop.f32.mrf.mxu0
        %v1659 = vadd.f32 %v1086, %v1658
        %v1660 = vpop.f32.mrf.mxu0
        %v1661 = vadd.f32 %v1086, %v1660
        %1662 = vdwg.mxu0
        %1663 = vmatpush.bf16.msra.mxu0 %v1351
        %1664 = vmatpush.bf16.msra.mxu0 %v1343
        %1665 = vmatpush.bf16.msra.mxu0 %v1335
        %1666 = vmatpush.bf16.msra.mxu0 %v1327
        %1667 = vmatpush.bf16.msra.mxu0 %v1319
        %1668 = vmatpush.bf16.msra.mxu0 %v1311
        %1669 = vmatpush.bf16.msra.mxu0 %v1303
        %1670 = vmatpush.bf16.msra.mxu0 %v1295
        %1671 = vmatmul.bf16.gmra.mxu0 %v1073
        %v1672 = vpop.f32.mrf.mxu0
        %v1673 = vadd.f32 %v1087, %v1672
        %v1674 = vpop.f32.mrf.mxu0
        %v1675 = vadd.f32 %v1087, %v1674
        %1676 = vmatmul.bf16.gmra.mxu0 %v1074
        %v1677 = vpop.f32.mrf.mxu0
        %v1678 = vadd.f32 %v1087, %v1677
        %v1679 = vpop.f32.mrf.mxu0
        %v1680 = vadd.f32 %v1087, %v1679
        %1681 = vmatmul.bf16.gmra.mxu0 %v1075
        %v1682 = vpop.f32.mrf.mxu0
        %v1683 = vadd.f32 %v1087, %v1682
        %v1684 = vpop.f32.mrf.mxu0
        %v1685 = vadd.f32 %v1087, %v1684
        %1686 = vmatmul.bf16.gmra.mxu0 %v1076
        %v1687 = vpop.f32.mrf.mxu0
        %v1688 = vadd.f32 %v1087, %v1687
        %v1689 = vpop.f32.mrf.mxu0
        %v1690 = vadd.f32 %v1087, %v1689
        %1691 = vmatmul.bf16.gmra.mxu0 %v1077
        %v1692 = vpop.f32.mrf.mxu0
        %v1693 = vadd.f32 %v1087, %v1692
        %v1694 = vpop.f32.mrf.mxu0
        %v1695 = vadd.f32 %v1087, %v1694
        %1696 = vmatmul.bf16.gmra.mxu0 %v1078
        %v1697 = vpop.f32.mrf.mxu0
        %v1698 = vadd.f32 %v1087, %v1697
        %v1699 = vpop.f32.mrf.mxu0
        %v1700 = vadd.f32 %v1087, %v1699
        %1701 = vmatmul.bf16.gmra.mxu0 %v1079
        %v1702 = vpop.f32.mrf.mxu0
        %v1703 = vadd.f32 %v1087, %v1702
        %v1704 = vpop.f32.mrf.mxu0
        %v1705 = vadd.f32 %v1087, %v1704
        %1706 = vmatmul.bf16.gmra.mxu0 %v1080
        %v1707 = vpop.f32.mrf.mxu0
        %v1708 = vadd.f32 %v1087, %v1707
        %v1709 = vpop.f32.mrf.mxu0
        %v1710 = vadd.f32 %v1087, %v1709
        %1711 = vdwg.mxu0
        %1712 = vmatpush.bf16.msra.mxu0 %v1352
        %1713 = vmatpush.bf16.msra.mxu0 %v1344
        %1714 = vmatpush.bf16.msra.mxu0 %v1336
        %1715 = vmatpush.bf16.msra.mxu0 %v1328
        %1716 = vmatpush.bf16.msra.mxu0 %v1320
        %1717 = vmatpush.bf16.msra.mxu0 %v1312
        %1718 = vmatpush.bf16.msra.mxu0 %v1304
        %1719 = vmatpush.bf16.msra.mxu0 %v1296
        %1720 = vmatmul.bf16.gmra.mxu0 %v1073
        %v1721 = vpop.f32.mrf.mxu0
        %v1722 = vadd.f32 %v1088, %v1721
        %v1723 = vpop.f32.mrf.mxu0
        %v1724 = vadd.f32 %v1088, %v1723
        %1725 = vmatmul.bf16.gmra.mxu0 %v1074
        %v1726 = vpop.f32.mrf.mxu0
        %v1727 = vadd.f32 %v1088, %v1726
        %v1728 = vpop.f32.mrf.mxu0
        %v1729 = vadd.f32 %v1088, %v1728
        %1730 = vmatmul.bf16.gmra.mxu0 %v1075
        %v1731 = vpop.f32.mrf.mxu0
        %v1732 = vadd.f32 %v1088, %v1731
        %v1733 = vpop.f32.mrf.mxu0
        %v1734 = vadd.f32 %v1088, %v1733
        %1735 = vmatmul.bf16.gmra.mxu0 %v1076
        %v1736 = vpop.f32.mrf.mxu0
        %v1737 = vadd.f32 %v1088, %v1736
        %v1738 = vpop.f32.mrf.mxu0
        %v1739 = vadd.f32 %v1088, %v1738
        %1740 = vmatmul.bf16.gmra.mxu0 %v1077
        %v1741 = vpop.f32.mrf.mxu0
        %v1742 = vadd.f32 %v1088, %v1741
        %v1743 = vpop.f32.mrf.mxu0
        %v1744 = vadd.f32 %v1088, %v1743
        %1745 = vmatmul.bf16.gmra.mxu0 %v1078
        %v1746 = vpop.f32.mrf.mxu0
        %v1747 = vadd.f32 %v1088, %v1746
        %v1748 = vpop.f32.mrf.mxu0
        %v1749 = vadd.f32 %v1088, %v1748
        %1750 = vmatmul.bf16.gmra.mxu0 %v1079
        %v1751 = vpop.f32.mrf.mxu0
        %v1752 = vadd.f32 %v1088, %v1751
        %v1753 = vpop.f32.mrf.mxu0
        %v1754 = vadd.f32 %v1088, %v1753
        %1755 = vmatmul.bf16.gmra.mxu0 %v1080
        %v1756 = vpop.f32.mrf.mxu0
        %v1757 = vadd.f32 %v1088, %v1756
        %v1758 = vpop.f32.mrf.mxu0
        %v1759 = vadd.f32 %v1088, %v1758
        %1760 = vdwg.mxu0
        %1761 = vmatpush.bf16.msra.mxu0 %v1353
        %1762 = vmatpush.bf16.msra.mxu0 %v1345
        %1763 = vmatpush.bf16.msra.mxu0 %v1337
        %1764 = vmatpush.bf16.msra.mxu0 %v1329
        %1765 = vmatpush.bf16.msra.mxu0 %v1321
        %1766 = vmatpush.bf16.msra.mxu0 %v1313
        %1767 = vmatpush.bf16.msra.mxu0 %v1305
        %1768 = vmatpush.bf16.msra.mxu0 %v1297
        %1769 = vmatmul.bf16.gmra.mxu0 %v1073
        %v1770 = vpop.f32.mrf.mxu0
        %v1771 = vadd.f32 %v1089, %v1770
        %v1772 = vpop.f32.mrf.mxu0
        %v1773 = vadd.f32 %v1089, %v1772
        %1774 = vmatmul.bf16.gmra.mxu0 %v1074
        %v1775 = vpop.f32.mrf.mxu0
        %v1776 = vadd.f32 %v1089, %v1775
        %v1777 = vpop.f32.mrf.mxu0
        %v1778 = vadd.f32 %v1089, %v1777
        %1779 = vmatmul.bf16.gmra.mxu0 %v1075
        %v1780 = vpop.f32.mrf.mxu0
        %v1781 = vadd.f32 %v1089, %v1780
        %v1782 = vpop.f32.mrf.mxu0
        %v1783 = vadd.f32 %v1089, %v1782
        %1784 = vmatmul.bf16.gmra.mxu0 %v1076
        %v1785 = vpop.f32.mrf.mxu0
        %v1786 = vadd.f32 %v1089, %v1785
        %v1787 = vpop.f32.mrf.mxu0
        %v1788 = vadd.f32 %v1089, %v1787
        %1789 = vmatmul.bf16.gmra.mxu0 %v1077
        %v1790 = vpop.f32.mrf.mxu0
        %v1791 = vadd.f32 %v1089, %v1790
        %v1792 = vpop.f32.mrf.mxu0
        %v1793 = vadd.f32 %v1089, %v1792
        %1794 = vmatmul.bf16.gmra.mxu0 %v1078
        %v1795 = vpop.f32.mrf.mxu0
        %v1796 = vadd.f32 %v1089, %v1795
        %v1797 = vpop.f32.mrf.mxu0
        %v1798 = vadd.f32 %v1089, %v1797
        %1799 = vmatmul.bf16.gmra.mxu0 %v1079
        %v1800 = vpop.f32.mrf.mxu0
        %v1801 = vadd.f32 %v1089, %v1800
        %v1802 = vpop.f32.mrf.mxu0
        %v1803 = vadd.f32 %v1089, %v1802
        %1804 = vmatmul.bf16.gmra.mxu0 %v1080
        %v1805 = vpop.f32.mrf.mxu0
        %v1806 = vadd.f32 %v1089, %v1805
        %v1807 = vpop.f32.mrf.mxu0
        %v1808 = vadd.f32 %v1089, %v1807
        %1809 = vdwg.mxu0
        %v1810 = vmax.f32 %v1428, 0.0
        %v1811 = vmax.f32 %v1477, 0.0
        %v1812 = vmax.f32 %v1526, 0.0
        %v1813 = vmax.f32 %v1575, 0.0
        %v1814 = vmax.f32 %v1624, 0.0
        %v1815 = vmax.f32 %v1673, 0.0
        %v1816 = vmax.f32 %v1722, 0.0
        %v1817 = vmax.f32 %v1771, 0.0
        %v1818 = vmax.f32 %v1430, 0.0
        %v1819 = vmax.f32 %v1479, 0.0
        %v1820 = vmax.f32 %v1528, 0.0
        %v1821 = vmax.f32 %v1577, 0.0
        %v1822 = vmax.f32 %v1626, 0.0
        %v1823 = vmax.f32 %v1675, 0.0
        %v1824 = vmax.f32 %v1724, 0.0
        %v1825 = vmax.f32 %v1773, 0.0
        %v1826 = vmax.f32 %v1433, 0.0
        %v1827 = vmax.f32 %v1482, 0.0
        %v1828 = vmax.f32 %v1531, 0.0
        %v1829 = vmax.f32 %v1580, 0.0
        %v1830 = vmax.f32 %v1629, 0.0
        %v1831 = vmax.f32 %v1678, 0.0
        %v1832 = vmax.f32 %v1727, 0.0
        %v1833 = vmax.f32 %v1776, 0.0
        %v1834 = vmax.f32 %v1435, 0.0
        %v1835 = vmax.f32 %v1484, 0.0
        %v1836 = vmax.f32 %v1533, 0.0
        %v1837 = vmax.f32 %v1582, 0.0
        %v1838 = vmax.f32 %v1631, 0.0
        %v1839 = vmax.f32 %v1680, 0.0
        %v1840 = vmax.f32 %v1729, 0.0
        %v1841 = vmax.f32 %v1778, 0.0
        %v1842 = vmax.f32 %v1438, 0.0
        %v1843 = vmax.f32 %v1487, 0.0
        %v1844 = vmax.f32 %v1536, 0.0
        %v1845 = vmax.f32 %v1585, 0.0
        %v1846 = vmax.f32 %v1634, 0.0
        %v1847 = vmax.f32 %v1683, 0.0
        %v1848 = vmax.f32 %v1732, 0.0
        %v1849 = vmax.f32 %v1781, 0.0
        %v1850 = vmax.f32 %v1440, 0.0
        %v1851 = vmax.f32 %v1489, 0.0
        %v1852 = vmax.f32 %v1538, 0.0
        %v1853 = vmax.f32 %v1587, 0.0
        %v1854 = vmax.f32 %v1636, 0.0
        %v1855 = vmax.f32 %v1685, 0.0
        %v1856 = vmax.f32 %v1734, 0.0
        %v1857 = vmax.f32 %v1783, 0.0
        %v1858 = vmax.f32 %v1443, 0.0
        %v1859 = vmax.f32 %v1492, 0.0
        %v1860 = vmax.f32 %v1541, 0.0
        %v1861 = vmax.f32 %v1590, 0.0
        %v1862 = vmax.f32 %v1639, 0.0
        %v1863 = vmax.f32 %v1688, 0.0
        %v1864 = vmax.f32 %v1737, 0.0
        %v1865 = vmax.f32 %v1786, 0.0
        %v1866 = vmax.f32 %v1445, 0.0
        %v1867 = vmax.f32 %v1494, 0.0
        %v1868 = vmax.f32 %v1543, 0.0
        %v1869 = vmax.f32 %v1592, 0.0
        %v1870 = vmax.f32 %v1641, 0.0
        %v1871 = vmax.f32 %v1690, 0.0
        %v1872 = vmax.f32 %v1739, 0.0
        %v1873 = vmax.f32 %v1788, 0.0
        %v1874 = vmax.f32 %v1448, 0.0
        %v1875 = vmax.f32 %v1497, 0.0
        %v1876 = vmax.f32 %v1546, 0.0
        %v1877 = vmax.f32 %v1595, 0.0
        %v1878 = vmax.f32 %v1644, 0.0
        %v1879 = vmax.f32 %v1693, 0.0
        %v1880 = vmax.f32 %v1742, 0.0
        %v1881 = vmax.f32 %v1791, 0.0
        %v1882 = vmax.f32 %v1450, 0.0
        %v1883 = vmax.f32 %v1499, 0.0
        %v1884 = vmax.f32 %v1548, 0.0
        %v1885 = vmax.f32 %v1597, 0.0
        %v1886 = vmax.f32 %v1646, 0.0
        %v1887 = vmax.f32 %v1695, 0.0
        %v1888 = vmax.f32 %v1744, 0.0
        %v1889 = vmax.f32 %v1793, 0.0
        %v1890 = vmax.f32 %v1453, 0.0
        %v1891 = vmax.f32 %v1502, 0.0
        %v1892 = vmax.f32 %v1551, 0.0
        %v1893 = vmax.f32 %v1600, 0.0
        %v1894 = vmax.f32 %v1649, 0.0
        %v1895 = vmax.f32 %v1698, 0.0
        %v1896 = vmax.f32 %v1747, 0.0
        %v1897 = vmax.f32 %v1796, 0.0
        %v1898 = vmax.f32 %v1455, 0.0
        %v1899 = vmax.f32 %v1504, 0.0
        %v1900 = vmax.f32 %v1553, 0.0
        %v1901 = vmax.f32 %v1602, 0.0
        %v1902 = vmax.f32 %v1651, 0.0
        %v1903 = vmax.f32 %v1700, 0.0
        %v1904 = vmax.f32 %v1749, 0.0
        %v1905 = vmax.f32 %v1798, 0.0
        %v1906 = vmax.f32 %v1458, 0.0
        %v1907 = vmax.f32 %v1507, 0.0
        %v1908 = vmax.f32 %v1556, 0.0
        %v1909 = vmax.f32 %v1605, 0.0
        %v1910 = vmax.f32 %v1654, 0.0
        %v1911 = vmax.f32 %v1703, 0.0
        %v1912 = vmax.f32 %v1752, 0.0
        %v1913 = vmax.f32 %v1801, 0.0
        %v1914 = vmax.f32 %v1460, 0.0
        %v1915 = vmax.f32 %v1509, 0.0
        %v1916 = vmax.f32 %v1558, 0.0
        %v1917 = vmax.f32 %v1607, 0.0
        %v1918 = vmax.f32 %v1656, 0.0
        %v1919 = vmax.f32 %v1705, 0.0
        %v1920 = vmax.f32 %v1754, 0.0
        %v1921 = vmax.f32 %v1803, 0.0
        %v1922 = vmax.f32 %v1463, 0.0
        %v1923 = vmax.f32 %v1512, 0.0
        %v1924 = vmax.f32 %v1561, 0.0
        %v1925 = vmax.f32 %v1610, 0.0
        %v1926 = vmax.f32 %v1659, 0.0
        %v1927 = vmax.f32 %v1708, 0.0
        %v1928 = vmax.f32 %v1757, 0.0
        %v1929 = vmax.f32 %v1806, 0.0
        %v1930 = vmax.f32 %v1465, 0.0
        %v1931 = vmax.f32 %v1514, 0.0
        %v1932 = vmax.f32 %v1563, 0.0
        %v1933 = vmax.f32 %v1612, 0.0
        %v1934 = vmax.f32 %v1661, 0.0
        %v1935 = vmax.f32 %v1710, 0.0
        %v1936 = vmax.f32 %v1759, 0.0
        %v1937 = vmax.f32 %v1808, 0.0
        %v1938 = vmax.f32 %v1810, %v1818
        %v1939 = vmax.f32 %v1938, %v1826
        %v1940 = vmax.f32 %v1939, %v1834
        %v1941 = vmax.f32 %v1940, %v1842
        %v1942 = vmax.f32 %v1941, %v1850
        %v1943 = vmax.f32 %v1942, %v1858
        %v1944 = vmax.f32 %v1943, %v1866
        %v1945 = vmax.f32 %v1944, %v1874
        %v1946 = vmax.f32 %v1945, %v1882
        %v1947 = vmax.f32 %v1946, %v1890
        %v1948 = vmax.f32 %v1947, %v1898
        %v1949 = vmax.f32 %v1948, %v1906
        %v1950 = vmax.f32 %v1949, %v1914
        %v1951 = vmax.f32 %v1950, %v1922
        %v1952 = vmax.f32 %v1951, %v1930
        %v1953 = vrot.slane %v1952, 4
        %v1954 = vmax.f32 %v1952, %v1953
        %v1955 = vrot.slane %v1954, 2
        %v1956 = vmax.f32 %v1954, %v1955
        %v1957 = vrot.slane %v1956, 1
        %v1958 = vmax.f32 %v1956, %v1957
        %v1959 = vmax.f32 %v1811, %v1819
        %v1960 = vmax.f32 %v1959, %v1827
        %v1961 = vmax.f32 %v1960, %v1835
        %v1962 = vmax.f32 %v1961, %v1843
        %v1963 = vmax.f32 %v1962, %v1851
        %v1964 = vmax.f32 %v1963, %v1859
        %v1965 = vmax.f32 %v1964, %v1867
        %v1966 = vmax.f32 %v1965, %v1875
        %v1967 = vmax.f32 %v1966, %v1883
        %v1968 = vmax.f32 %v1967, %v1891
        %v1969 = vmax.f32 %v1968, %v1899
        %v1970 = vmax.f32 %v1969, %v1907
        %v1971 = vmax.f32 %v1970, %v1915
        %v1972 = vmax.f32 %v1971, %v1923
        %v1973 = vmax.f32 %v1972, %v1931
        %v1974 = vrot.slane %v1973, 4
        %v1975 = vmax.f32 %v1973, %v1974
        %v1976 = vrot.slane %v1975, 2
        %v1977 = vmax.f32 %v1975, %v1976
        %v1978 = vrot.slane %v1977, 1
        %v1979 = vmax.f32 %v1977, %v1978
        %v1980 = vmax.f32 %v1812, %v1820
        %v1981 = vmax.f32 %v1980, %v1828
        %v1982 = vmax.f32 %v1981, %v1836
        %v1983 = vmax.f32 %v1982, %v1844
        %v1984 = vmax.f32 %v1983, %v1852
        %v1985 = vmax.f32 %v1984, %v1860
        %v1986 = vmax.f32 %v1985, %v1868
        %v1987 = vmax.f32 %v1986, %v1876
        %v1988 = vmax.f32 %v1987, %v1884
        %v1989 = vmax.f32 %v1988, %v1892
        %v1990 = vmax.f32 %v1989, %v1900
        %v1991 = vmax.f32 %v1990, %v1908
        %v1992 = vmax.f32 %v1991, %v1916
        %v1993 = vmax.f32 %v1992, %v1924
        %v1994 = vmax.f32 %v1993, %v1932
        %v1995 = vrot.slane %v1994, 4
        %v1996 = vmax.f32 %v1994, %v1995
        %v1997 = vrot.slane %v1996, 2
        %v1998 = vmax.f32 %v1996, %v1997
        %v1999 = vrot.slane %v1998, 1
        %v2000 = vmax.f32 %v1998, %v1999
        %v2001 = vmax.f32 %v1813, %v1821
        %v2002 = vmax.f32 %v2001, %v1829
        %v2003 = vmax.f32 %v2002, %v1837
        %v2004 = vmax.f32 %v2003, %v1845
        %v2005 = vmax.f32 %v2004, %v1853
        %v2006 = vmax.f32 %v2005, %v1861
        %v2007 = vmax.f32 %v2006, %v1869
        %v2008 = vmax.f32 %v2007, %v1877
        %v2009 = vmax.f32 %v2008, %v1885
        %v2010 = vmax.f32 %v2009, %v1893
        %v2011 = vmax.f32 %v2010, %v1901
        %v2012 = vmax.f32 %v2011, %v1909
        %v2013 = vmax.f32 %v2012, %v1917
        %v2014 = vmax.f32 %v2013, %v1925
        %v2015 = vmax.f32 %v2014, %v1933
        %v2016 = vrot.slane %v2015, 4
        %v2017 = vmax.f32 %v2015, %v2016
        %v2018 = vrot.slane %v2017, 2
        %v2019 = vmax.f32 %v2017, %v2018
        %v2020 = vrot.slane %v2019, 1
        %v2021 = vmax.f32 %v2019, %v2020
        %v2022 = vmax.f32 %v1814, %v1822
        %v2023 = vmax.f32 %v2022, %v1830
        %v2024 = vmax.f32 %v2023, %v1838
        %v2025 = vmax.f32 %v2024, %v1846
        %v2026 = vmax.f32 %v2025, %v1854
        %v2027 = vmax.f32 %v2026, %v1862
        %v2028 = vmax.f32 %v2027, %v1870
        %v2029 = vmax.f32 %v2028, %v1878
        %v2030 = vmax.f32 %v2029, %v1886
        %v2031 = vmax.f32 %v2030, %v1894
        %v2032 = vmax.f32 %v2031, %v1902
        %v2033 = vmax.f32 %v2032, %v1910
        %v2034 = vmax.f32 %v2033, %v1918
        %v2035 = vmax.f32 %v2034, %v1926
        %v2036 = vmax.f32 %v2035, %v1934
        %v2037 = vrot.slane %v2036, 4
        %v2038 = vmax.f32 %v2036, %v2037
        %v2039 = vrot.slane %v2038, 2
        %v2040 = vmax.f32 %v2038, %v2039
        %v2041 = vrot.slane %v2040, 1
        %v2042 = vmax.f32 %v2040, %v2041
        %v2043 = vmax.f32 %v1815, %v1823
        %v2044 = vmax.f32 %v2043, %v1831
        %v2045 = vmax.f32 %v2044, %v1839
        %v2046 = vmax.f32 %v2045, %v1847
        %v2047 = vmax.f32 %v2046, %v1855
        %v2048 = vmax.f32 %v2047, %v1863
        %v2049 = vmax.f32 %v2048, %v1871
        %v2050 = vmax.f32 %v2049, %v1879
        %v2051 = vmax.f32 %v2050, %v1887
        %v2052 = vmax.f32 %v2051, %v1895
        %v2053 = vmax.f32 %v2052, %v1903
        %v2054 = vmax.f32 %v2053, %v1911
        %v2055 = vmax.f32 %v2054, %v1919
        %v2056 = vmax.f32 %v2055, %v1927
        %v2057 = vmax.f32 %v2056, %v1935
        %v2058 = vrot.slane %v2057, 4
        %v2059 = vmax.f32 %v2057, %v2058
        %v2060 = vrot.slane %v2059, 2
        %v2061 = vmax.f32 %v2059, %v2060
        %v2062 = vrot.slane %v2061, 1
        %v2063 = vmax.f32 %v2061, %v2062
        %v2064 = vmax.f32 %v1816, %v1824
        %v2065 = vmax.f32 %v2064, %v1832
        %v2066 = vmax.f32 %v2065, %v1840
        %v2067 = vmax.f32 %v2066, %v1848
        %v2068 = vmax.f32 %v2067, %v1856
        %v2069 = vmax.f32 %v2068, %v1864
        %v2070 = vmax.f32 %v2069, %v1872
        %v2071 = vmax.f32 %v2070, %v1880
        %v2072 = vmax.f32 %v2071, %v1888
        %v2073 = vmax.f32 %v2072, %v1896
        %v2074 = vmax.f32 %v2073, %v1904
        %v2075 = vmax.f32 %v2074, %v1912
        %v2076 = vmax.f32 %v2075, %v1920
        %v2077 = vmax.f32 %v2076, %v1928
        %v2078 = vmax.f32 %v2077, %v1936
        %v2079 = vrot.slane %v2078, 4
        %v2080 = vmax.f32 %v2078, %v2079
        %v2081 = vrot.slane %v2080, 2
        %v2082 = vmax.f32 %v2080, %v2081
        %v2083 = vrot.slane %v2082, 1
        %v2084 = vmax.f32 %v2082, %v2083
        %v2085 = vmax.f32 %v1817, %v1825
        %v2086 = vmax.f32 %v2085, %v1833
        %v2087 = vmax.f32 %v2086, %v1841
        %v2088 = vmax.f32 %v2087, %v1849
        %v2089 = vmax.f32 %v2088, %v1857
        %v2090 = vmax.f32 %v2089, %v1865
        %v2091 = vmax.f32 %v2090, %v1873
        %v2092 = vmax.f32 %v2091, %v1881
        %v2093 = vmax.f32 %v2092, %v1889
        %v2094 = vmax.f32 %v2093, %v1897
        %v2095 = vmax.f32 %v2094, %v1905
        %v2096 = vmax.f32 %v2095, %v1913
        %v2097 = vmax.f32 %v2096, %v1921
        %v2098 = vmax.f32 %v2097, %v1929
        %v2099 = vmax.f32 %v2098, %v1937
        %v2100 = vrot.slane %v2099, 4
        %v2101 = vmax.f32 %v2099, %v2100
        %v2102 = vrot.slane %v2101, 2
        %v2103 = vmax.f32 %v2101, %v2102
        %v2104 = vrot.slane %v2103, 1
        %v2105 = vmax.f32 %v2103, %v2104
        %v2106 = vpack.c.bf16 %v1958, %v1958
        %v2107 = vpack.c.bf16 %v1979, %v1979
        %v2108 = vpack.c.bf16 %v2000, %v2000
        %v2109 = vpack.c.bf16 %v2021, %v2021
        %v2110 = vpack.c.bf16 %v2042, %v2042
        %v2111 = vpack.c.bf16 %v2063, %v2063
        %v2112 = vpack.c.bf16 %v2084, %v2084
        %v2113 = vpack.c.bf16 %v2105, %v2105
        %v2114 = vld [vmem:[#allocation5] sm:$0xff]
        %v2115 = vld [vmem:[#allocation5 + $0x8] sm:$0xff]
        %v2116 = vld [vmem:[#allocation5 + $0x10] sm:$0xff]
        %v2117 = vld [vmem:[#allocation5 + $0x18] sm:$0xff]
        %v2118 = vld [vmem:[#allocation5 + $0x20] sm:$0xff]
        %v2119 = vld [vmem:[#allocation5 + $0x28] sm:$0xff]
        %v2120 = vld [vmem:[#allocation5 + $0x30] sm:$0xff]
        %v2121 = vld [vmem:[#allocation5 + $0x38] sm:$0xff]
        %v2122 = vld [vmem:[#allocation5 + $0x40] sm:$0xff]
        %v2123 = vld [vmem:[#allocation5 + $0x48] sm:$0xff]
        %v2124 = vld [vmem:[#allocation5 + $0x50] sm:$0xff]
        %v2125 = vld [vmem:[#allocation5 + $0x58] sm:$0xff]
        %v2126 = vld [vmem:[#allocation5 + $0x60] sm:$0xff]
        %v2127 = vld [vmem:[#allocation5 + $0x68] sm:$0xff]
        %v2128 = vld [vmem:[#allocation5 + $0x70] sm:$0xff]
        %v2129 = vld [vmem:[#allocation5 + $0x78] sm:$0xff]
        %v2130 = vld [vmem:[#allocation5 + $0x80] sm:$0xff]
        %v2131 = vld [vmem:[#allocation5 + $0x88] sm:$0xff]
        %v2132 = vld [vmem:[#allocation5 + $0x90] sm:$0xff]
        %v2133 = vld [vmem:[#allocation5 + $0x98] sm:$0xff]
        %v2134 = vld [vmem:[#allocation5 + $0xa0] sm:$0xff]
        %v2135 = vld [vmem:[#allocation5 + $0xa8] sm:$0xff]
        %v2136 = vld [vmem:[#allocation5 + $0xb0] sm:$0xff]
        %v2137 = vld [vmem:[#allocation5 + $0xb8] sm:$0xff]
        %v2138 = vld [vmem:[#allocation5 + $0xc0] sm:$0xff]
        %v2139 = vld [vmem:[#allocation5 + $0xc8] sm:$0xff]
        %v2140 = vld [vmem:[#allocation5 + $0xd0] sm:$0xff]
        %v2141 = vld [vmem:[#allocation5 + $0xd8] sm:$0xff]
        %v2142 = vld [vmem:[#allocation5 + $0xe0] sm:$0xff]
        %v2143 = vld [vmem:[#allocation5 + $0xe8] sm:$0xff]
        %v2144 = vld [vmem:[#allocation5 + $0xf0] sm:$0xff]
        %v2145 = vld [vmem:[#allocation5 + $0xf8] sm:$0xff]
        %v2146 = vld [vmem:[#allocation5 + $0x100] sm:$0xff]
        %v2147 = vld [vmem:[#allocation5 + $0x108] sm:$0xff]
        %v2148 = vld [vmem:[#allocation5 + $0x110] sm:$0xff]
        %v2149 = vld [vmem:[#allocation5 + $0x118] sm:$0xff]
        %v2150 = vld [vmem:[#allocation5 + $0x120] sm:$0xff]
        %v2151 = vld [vmem:[#allocation5 + $0x128] sm:$0xff]
        %v2152 = vld [vmem:[#allocation5 + $0x130] sm:$0xff]
        %v2153 = vld [vmem:[#allocation5 + $0x138] sm:$0xff]
        %v2154 = vld [vmem:[#allocation5 + $0x140] sm:$0xff]
        %v2155 = vld [vmem:[#allocation5 + $0x148] sm:$0xff]
        %v2156 = vld [vmem:[#allocation5 + $0x150] sm:$0xff]
        %v2157 = vld [vmem:[#allocation5 + $0x158] sm:$0xff]
        %v2158 = vld [vmem:[#allocation5 + $0x160] sm:$0xff]
        %v2159 = vld [vmem:[#allocation5 + $0x168] sm:$0xff]
        %v2160 = vld [vmem:[#allocation5 + $0x170] sm:$0xff]
        %v2161 = vld [vmem:[#allocation5 + $0x178] sm:$0xff]
        %v2162 = vld [vmem:[#allocation5 + $0x180] sm:$0xff]
        %v2163 = vld [vmem:[#allocation5 + $0x188] sm:$0xff]
        %v2164 = vld [vmem:[#allocation5 + $0x190] sm:$0xff]
        %v2165 = vld [vmem:[#allocation5 + $0x198] sm:$0xff]
        %v2166 = vld [vmem:[#allocation5 + $0x1a0] sm:$0xff]
        %v2167 = vld [vmem:[#allocation5 + $0x1a8] sm:$0xff]
        %v2168 = vld [vmem:[#allocation5 + $0x1b0] sm:$0xff]
        %v2169 = vld [vmem:[#allocation5 + $0x1b8] sm:$0xff]
        %v2170 = vld [vmem:[#allocation5 + $0x1c0] sm:$0xff]
        %v2171 = vld [vmem:[#allocation5 + $0x1c8] sm:$0xff]
        %v2172 = vld [vmem:[#allocation5 + $0x1d0] sm:$0xff]
        %v2173 = vld [vmem:[#allocation5 + $0x1d8] sm:$0xff]
        %v2174 = vld [vmem:[#allocation5 + $0x1e0] sm:$0xff]
        %v2175 = vld [vmem:[#allocation5 + $0x1e8] sm:$0xff]
        %v2176 = vld [vmem:[#allocation5 + $0x1f0] sm:$0xff]
        %v2177 = vld [vmem:[#allocation5 + $0x1f8] sm:$0xff]
        %v2178 = vld [vmem:[#allocation5 + $0x200] sm:$0xff]
        %v2179 = vld [vmem:[#allocation5 + $0x208] sm:$0xff]
        %v2180 = vld [vmem:[#allocation5 + $0x210] sm:$0xff]
        %v2181 = vld [vmem:[#allocation5 + $0x218] sm:$0xff]
        %v2182 = vld [vmem:[#allocation5 + $0x220] sm:$0xff]
        %v2183 = vld [vmem:[#allocation5 + $0x228] sm:$0xff]
        %v2184 = vld [vmem:[#allocation5 + $0x230] sm:$0xff]
        %v2185 = vld [vmem:[#allocation5 + $0x238] sm:$0xff]
        %v2186 = vld [vmem:[#allocation5 + $0x240] sm:$0xff]
        %v2187 = vld [vmem:[#allocation5 + $0x248] sm:$0xff]
        %v2188 = vld [vmem:[#allocation5 + $0x250] sm:$0xff]
        %v2189 = vld [vmem:[#allocation5 + $0x258] sm:$0xff]
        %v2190 = vld [vmem:[#allocation5 + $0x260] sm:$0xff]
        %v2191 = vld [vmem:[#allocation5 + $0x268] sm:$0xff]
        %v2192 = vld [vmem:[#allocation5 + $0x270] sm:$0xff]
        %v2193 = vld [vmem:[#allocation5 + $0x278] sm:$0xff]
        %v2194 = vld [vmem:[#allocation5 + $0x280] sm:$0xff]
        %v2195 = vld [vmem:[#allocation5 + $0x288] sm:$0xff]
        %v2196 = vld [vmem:[#allocation5 + $0x290] sm:$0xff]
        %v2197 = vld [vmem:[#allocation5 + $0x298] sm:$0xff]
        %v2198 = vld [vmem:[#allocation5 + $0x2a0] sm:$0xff]
        %v2199 = vld [vmem:[#allocation5 + $0x2a8] sm:$0xff]
        %v2200 = vld [vmem:[#allocation5 + $0x2b0] sm:$0xff]
        %v2201 = vld [vmem:[#allocation5 + $0x2b8] sm:$0xff]
        %v2202 = vld [vmem:[#allocation5 + $0x2c0] sm:$0xff]
        %v2203 = vld [vmem:[#allocation5 + $0x2c8] sm:$0xff]
        %v2204 = vld [vmem:[#allocation5 + $0x2d0] sm:$0xff]
        %v2205 = vld [vmem:[#allocation5 + $0x2d8] sm:$0xff]
        %v2206 = vld [vmem:[#allocation5 + $0x2e0] sm:$0xff]
        %v2207 = vld [vmem:[#allocation5 + $0x2e8] sm:$0xff]
        %v2208 = vld [vmem:[#allocation5 + $0x2f0] sm:$0xff]
        %v2209 = vld [vmem:[#allocation5 + $0x2f8] sm:$0xff]
        %v2210 = vld [vmem:[#allocation5 + $0x300] sm:$0xff]
        %v2211 = vld [vmem:[#allocation5 + $0x308] sm:$0xff]
        %v2212 = vld [vmem:[#allocation5 + $0x310] sm:$0xff]
        %v2213 = vld [vmem:[#allocation5 + $0x318] sm:$0xff]
        %v2214 = vld [vmem:[#allocation5 + $0x320] sm:$0xff]
        %v2215 = vld [vmem:[#allocation5 + $0x328] sm:$0xff]
        %v2216 = vld [vmem:[#allocation5 + $0x330] sm:$0xff]
        %v2217 = vld [vmem:[#allocation5 + $0x338] sm:$0xff]
        %v2218 = vld [vmem:[#allocation5 + $0x340] sm:$0xff]
        %v2219 = vld [vmem:[#allocation5 + $0x348] sm:$0xff]
        %v2220 = vld [vmem:[#allocation5 + $0x350] sm:$0xff]
        %v2221 = vld [vmem:[#allocation5 + $0x358] sm:$0xff]
        %v2222 = vld [vmem:[#allocation5 + $0x360] sm:$0xff]
        %v2223 = vld [vmem:[#allocation5 + $0x368] sm:$0xff]
        %v2224 = vld [vmem:[#allocation5 + $0x370] sm:$0xff]
        %v2225 = vld [vmem:[#allocation5 + $0x378] sm:$0xff]
        %v2226 = vld [vmem:[#allocation5 + $0x380] sm:$0xff]
        %v2227 = vld [vmem:[#allocation5 + $0x388] sm:$0xff]
        %v2228 = vld [vmem:[#allocation5 + $0x390] sm:$0xff]
        %v2229 = vld [vmem:[#allocation5 + $0x398] sm:$0xff]
        %v2230 = vld [vmem:[#allocation5 + $0x3a0] sm:$0xff]
        %v2231 = vld [vmem:[#allocation5 + $0x3a8] sm:$0xff]
        %v2232 = vld [vmem:[#allocation5 + $0x3b0] sm:$0xff]
        %v2233 = vld [vmem:[#allocation5 + $0x3b8] sm:$0xff]
        %v2234 = vld [vmem:[#allocation5 + $0x3c0] sm:$0xff]
        %v2235 = vld [vmem:[#allocation5 + $0x3c8] sm:$0xff]
        %v2236 = vld [vmem:[#allocation5 + $0x3d0] sm:$0xff]
        %v2237 = vld [vmem:[#allocation5 + $0x3d8] sm:$0xff]
        %v2238 = vld [vmem:[#allocation5 + $0x3e0] sm:$0xff]
        %v2239 = vld [vmem:[#allocation5 + $0x3e8] sm:$0xff]
        %v2240 = vld [vmem:[#allocation5 + $0x3f0] sm:$0xff]
        %v2241 = vld [vmem:[#allocation5 + $0x3f8] sm:$0xff]
        %v2242 = vld [vmem:[#allocation5 + $0x400] sm:$0xff]
        %v2243 = vld [vmem:[#allocation5 + $0x408] sm:$0xff]
        %v2244 = vld [vmem:[#allocation5 + $0x410] sm:$0xff]
        %v2245 = vld [vmem:[#allocation5 + $0x418] sm:$0xff]
        %v2246 = vld [vmem:[#allocation5 + $0x420] sm:$0xff]
        %v2247 = vld [vmem:[#allocation5 + $0x428] sm:$0xff]
        %v2248 = vld [vmem:[#allocation5 + $0x430] sm:$0xff]
        %v2249 = vld [vmem:[#allocation5 + $0x438] sm:$0xff]
        %v2250 = vld [vmem:[#allocation5 + $0x440] sm:$0xff]
        %v2251 = vld [vmem:[#allocation5 + $0x448] sm:$0xff]
        %v2252 = vld [vmem:[#allocation5 + $0x450] sm:$0xff]
        %v2253 = vld [vmem:[#allocation5 + $0x458] sm:$0xff]
        %v2254 = vld [vmem:[#allocation5 + $0x460] sm:$0xff]
        %v2255 = vld [vmem:[#allocation5 + $0x468] sm:$0xff]
        %v2256 = vld [vmem:[#allocation5 + $0x470] sm:$0xff]
        %v2257 = vld [vmem:[#allocation5 + $0x478] sm:$0xff]
        %v2258 = vld [vmem:[#allocation5 + $0x480] sm:$0xff]
        %v2259 = vld [vmem:[#allocation5 + $0x488] sm:$0xff]
        %v2260 = vld [vmem:[#allocation5 + $0x490] sm:$0xff]
        %v2261 = vld [vmem:[#allocation5 + $0x498] sm:$0xff]
        %v2262 = vld [vmem:[#allocation5 + $0x4a0] sm:$0xff]
        %v2263 = vld [vmem:[#allocation5 + $0x4a8] sm:$0xff]
        %v2264 = vld [vmem:[#allocation5 + $0x4b0] sm:$0xff]
        %v2265 = vld [vmem:[#allocation5 + $0x4b8] sm:$0xff]
        %v2266 = vld [vmem:[#allocation5 + $0x4c0] sm:$0xff]
        %v2267 = vld [vmem:[#allocation5 + $0x4c8] sm:$0xff]
        %v2268 = vld [vmem:[#allocation5 + $0x4d0] sm:$0xff]
        %v2269 = vld [vmem:[#allocation5 + $0x4d8] sm:$0xff]
        %v2270 = vld [vmem:[#allocation5 + $0x4e0] sm:$0xff]
        %v2271 = vld [vmem:[#allocation5 + $0x4e8] sm:$0xff]
        %v2272 = vld [vmem:[#allocation5 + $0x4f0] sm:$0xff]
        %v2273 = vld [vmem:[#allocation5 + $0x4f8] sm:$0xff]
        %v2274 = vld [vmem:[#allocation5 + $0x500] sm:$0xff]
        %v2275 = vld [vmem:[#allocation5 + $0x508] sm:$0xff]
        %v2276 = vld [vmem:[#allocation5 + $0x510] sm:$0xff]
        %v2277 = vld [vmem:[#allocation5 + $0x518] sm:$0xff]
        %v2278 = vld [vmem:[#allocation5 + $0x520] sm:$0xff]
        %v2279 = vld [vmem:[#allocation5 + $0x528] sm:$0xff]
        %v2280 = vld [vmem:[#allocation5 + $0x530] sm:$0xff]
        %v2281 = vld [vmem:[#allocation5 + $0x538] sm:$0xff]
        %v2282 = vld [vmem:[#allocation5 + $0x540] sm:$0xff]
        %v2283 = vld [vmem:[#allocation5 + $0x548] sm:$0xff]
        %v2284 = vld [vmem:[#allocation5 + $0x550] sm:$0xff]
        %v2285 = vld [vmem:[#allocation5 + $0x558] sm:$0xff]
        %v2286 = vld [vmem:[#allocation5 + $0x560] sm:$0xff]
        %v2287 = vld [vmem:[#allocation5 + $0x568] sm:$0xff]
        %v2288 = vld [vmem:[#allocation5 + $0x570] sm:$0xff]
        %v2289 = vld [vmem:[#allocation5 + $0x578] sm:$0xff]
        %v2290 = vld [vmem:[#allocation5 + $0x580] sm:$0xff]
        %v2291 = vld [vmem:[#allocation5 + $0x588] sm:$0xff]
        %v2292 = vld [vmem:[#allocation5 + $0x590] sm:$0xff]
        %v2293 = vld [vmem:[#allocation5 + $0x598] sm:$0xff]
        %v2294 = vld [vmem:[#allocation5 + $0x5a0] sm:$0xff]
        %v2295 = vld [vmem:[#allocation5 + $0x5a8] sm:$0xff]
        %v2296 = vld [vmem:[#allocation5 + $0x5b0] sm:$0xff]
        %v2297 = vld [vmem:[#allocation5 + $0x5b8] sm:$0xff]
        %v2298 = vld [vmem:[#allocation5 + $0x5c0] sm:$0xff]
        %v2299 = vld [vmem:[#allocation5 + $0x5c8] sm:$0xff]
        %v2300 = vld [vmem:[#allocation5 + $0x5d0] sm:$0xff]
        %v2301 = vld [vmem:[#allocation5 + $0x5d8] sm:$0xff]
        %v2302 = vld [vmem:[#allocation5 + $0x5e0] sm:$0xff]
        %v2303 = vld [vmem:[#allocation5 + $0x5e8] sm:$0xff]
        %v2304 = vld [vmem:[#allocation5 + $0x5f0] sm:$0xff]
        %v2305 = vld [vmem:[#allocation5 + $0x5f8] sm:$0xff]
        %v2306 = vld [vmem:[#allocation5 + $0x600] sm:$0xff]
        %v2307 = vld [vmem:[#allocation5 + $0x608] sm:$0xff]
        %v2308 = vld [vmem:[#allocation5 + $0x610] sm:$0xff]
        %v2309 = vld [vmem:[#allocation5 + $0x618] sm:$0xff]
        %v2310 = vld [vmem:[#allocation5 + $0x620] sm:$0xff]
        %v2311 = vld [vmem:[#allocation5 + $0x628] sm:$0xff]
        %v2312 = vld [vmem:[#allocation5 + $0x630] sm:$0xff]
        %v2313 = vld [vmem:[#allocation5 + $0x638] sm:$0xff]
        %v2314 = vld [vmem:[#allocation5 + $0x640] sm:$0xff]
        %v2315 = vld [vmem:[#allocation5 + $0x648] sm:$0xff]
        %v2316 = vld [vmem:[#allocation5 + $0x650] sm:$0xff]
        %v2317 = vld [vmem:[#allocation5 + $0x658] sm:$0xff]
        %v2318 = vld [vmem:[#allocation5 + $0x660] sm:$0xff]
        %v2319 = vld [vmem:[#allocation5 + $0x668] sm:$0xff]
        %v2320 = vld [vmem:[#allocation5 + $0x670] sm:$0xff]
        %v2321 = vld [vmem:[#allocation5 + $0x678] sm:$0xff]
        %v2322 = vld [vmem:[#allocation5 + $0x680] sm:$0xff]
        %v2323 = vld [vmem:[#allocation5 + $0x688] sm:$0xff]
        %v2324 = vld [vmem:[#allocation5 + $0x690] sm:$0xff]
        %v2325 = vld [vmem:[#allocation5 + $0x698] sm:$0xff]
        %v2326 = vld [vmem:[#allocation5 + $0x6a0] sm:$0xff]
        %v2327 = vld [vmem:[#allocation5 + $0x6a8] sm:$0xff]
        %v2328 = vld [vmem:[#allocation5 + $0x6b0] sm:$0xff]
        %v2329 = vld [vmem:[#allocation5 + $0x6b8] sm:$0xff]
        %v2330 = vld [vmem:[#allocation5 + $0x6c0] sm:$0xff]
        %v2331 = vld [vmem:[#allocation5 + $0x6c8] sm:$0xff]
        %v2332 = vld [vmem:[#allocation5 + $0x6d0] sm:$0xff]
        %v2333 = vld [vmem:[#allocation5 + $0x6d8] sm:$0xff]
        %v2334 = vld [vmem:[#allocation5 + $0x6e0] sm:$0xff]
        %v2335 = vld [vmem:[#allocation5 + $0x6e8] sm:$0xff]
        %v2336 = vld [vmem:[#allocation5 + $0x6f0] sm:$0xff]
        %v2337 = vld [vmem:[#allocation5 + $0x6f8] sm:$0xff]
        %v2338 = vld [vmem:[#allocation5 + $0x700] sm:$0xff]
        %v2339 = vld [vmem:[#allocation5 + $0x708] sm:$0xff]
        %v2340 = vld [vmem:[#allocation5 + $0x710] sm:$0xff]
        %v2341 = vld [vmem:[#allocation5 + $0x718] sm:$0xff]
        %v2342 = vld [vmem:[#allocation5 + $0x720] sm:$0xff]
        %v2343 = vld [vmem:[#allocation5 + $0x728] sm:$0xff]
        %v2344 = vld [vmem:[#allocation5 + $0x730] sm:$0xff]
        %v2345 = vld [vmem:[#allocation5 + $0x738] sm:$0xff]
        %v2346 = vld [vmem:[#allocation5 + $0x740] sm:$0xff]
        %v2347 = vld [vmem:[#allocation5 + $0x748] sm:$0xff]
        %v2348 = vld [vmem:[#allocation5 + $0x750] sm:$0xff]
        %v2349 = vld [vmem:[#allocation5 + $0x758] sm:$0xff]
        %v2350 = vld [vmem:[#allocation5 + $0x760] sm:$0xff]
        %v2351 = vld [vmem:[#allocation5 + $0x768] sm:$0xff]
        %v2352 = vld [vmem:[#allocation5 + $0x770] sm:$0xff]
        %v2353 = vld [vmem:[#allocation5 + $0x778] sm:$0xff]
        %v2354 = vld [vmem:[#allocation5 + $0x780] sm:$0xff]
        %v2355 = vld [vmem:[#allocation5 + $0x788] sm:$0xff]
        %v2356 = vld [vmem:[#allocation5 + $0x790] sm:$0xff]
        %v2357 = vld [vmem:[#allocation5 + $0x798] sm:$0xff]
        %v2358 = vld [vmem:[#allocation5 + $0x7a0] sm:$0xff]
        %v2359 = vld [vmem:[#allocation5 + $0x7a8] sm:$0xff]
        %v2360 = vld [vmem:[#allocation5 + $0x7b0] sm:$0xff]
        %v2361 = vld [vmem:[#allocation5 + $0x7b8] sm:$0xff]
        %v2362 = vld [vmem:[#allocation5 + $0x7c0] sm:$0xff]
        %v2363 = vld [vmem:[#allocation5 + $0x7c8] sm:$0xff]
        %v2364 = vld [vmem:[#allocation5 + $0x7d0] sm:$0xff]
        %v2365 = vld [vmem:[#allocation5 + $0x7d8] sm:$0xff]
        %v2366 = vld [vmem:[#allocation5 + $0x7e0] sm:$0xff]
        %v2367 = vld [vmem:[#allocation5 + $0x7e8] sm:$0xff]
        %v2368 = vld [vmem:[#allocation5 + $0x7f0] sm:$0xff]
        %v2369 = vld [vmem:[#allocation5 + $0x7f8] sm:$0xff]
        %v2370 = vld [vmem:[%s8] sm:$0xf]
        %v2627 = vunpack.c.l.b16 %v2114
        %v2628 = vunpack.c.h.b16 %v2114
        %v2629 = vunpack.c.l.b16 %v2115
        %v2630 = vunpack.c.h.b16 %v2115
        %v2631 = vunpack.c.l.b16 %v2116
        %v2632 = vunpack.c.h.b16 %v2116
        %v2633 = vunpack.c.l.b16 %v2117
        %v2634 = vunpack.c.h.b16 %v2117
        %v2635 = vunpack.c.l.b16 %v2118
        %v2636 = vunpack.c.h.b16 %v2118
        %v2637 = vunpack.c.l.b16 %v2119
        %v2638 = vunpack.c.h.b16 %v2119
        %v2639 = vunpack.c.l.b16 %v2120
        %v2640 = vunpack.c.h.b16 %v2120
        %v2641 = vunpack.c.l.b16 %v2121
        %v2642 = vunpack.c.h.b16 %v2121
        %v2643 = vunpack.c.l.b16 %v2122
        %v2644 = vunpack.c.h.b16 %v2122
        %v2645 = vunpack.c.l.b16 %v2123
        %v2646 = vunpack.c.h.b16 %v2123
        %v2647 = vunpack.c.l.b16 %v2124
        %v2648 = vunpack.c.h.b16 %v2124
        %v2649 = vunpack.c.l.b16 %v2125
        %v2650 = vunpack.c.h.b16 %v2125
        %v2651 = vunpack.c.l.b16 %v2126
        %v2652 = vunpack.c.h.b16 %v2126
        %v2653 = vunpack.c.l.b16 %v2127
        %v2654 = vunpack.c.h.b16 %v2127
        %v2655 = vunpack.c.l.b16 %v2128
        %v2656 = vunpack.c.h.b16 %v2128
        %v2657 = vunpack.c.l.b16 %v2129
        %v2658 = vunpack.c.h.b16 %v2129
        %v2659 = vunpack.c.l.b16 %v2130
        %v2660 = vunpack.c.h.b16 %v2130
        %v2661 = vunpack.c.l.b16 %v2131
        %v2662 = vunpack.c.h.b16 %v2131
        %v2663 = vunpack.c.l.b16 %v2132
        %v2664 = vunpack.c.h.b16 %v2132
        %v2665 = vunpack.c.l.b16 %v2133
        %v2666 = vunpack.c.h.b16 %v2133
        %v2667 = vunpack.c.l.b16 %v2134
        %v2668 = vunpack.c.h.b16 %v2134
        %v2669 = vunpack.c.l.b16 %v2135
        %v2670 = vunpack.c.h.b16 %v2135
        %v2671 = vunpack.c.l.b16 %v2136
        %v2672 = vunpack.c.h.b16 %v2136
        %v2673 = vunpack.c.l.b16 %v2137
        %v2674 = vunpack.c.h.b16 %v2137
        %v2675 = vunpack.c.l.b16 %v2138
        %v2676 = vunpack.c.h.b16 %v2138
        %v2677 = vunpack.c.l.b16 %v2139
        %v2678 = vunpack.c.h.b16 %v2139
        %v2679 = vunpack.c.l.b16 %v2140
        %v2680 = vunpack.c.h.b16 %v2140
        %v2681 = vunpack.c.l.b16 %v2141
        %v2682 = vunpack.c.h.b16 %v2141
        %v2683 = vunpack.c.l.b16 %v2142
        %v2684 = vunpack.c.h.b16 %v2142
        %v2685 = vunpack.c.l.b16 %v2143
        %v2686 = vunpack.c.h.b16 %v2143
        %v2687 = vunpack.c.l.b16 %v2144
        %v2688 = vunpack.c.h.b16 %v2144
        %v2689 = vunpack.c.l.b16 %v2145
        %v2690 = vunpack.c.h.b16 %v2145
        %v2691 = vunpack.c.l.b16 %v2146
        %v2692 = vunpack.c.h.b16 %v2146
        %v2693 = vunpack.c.l.b16 %v2147
        %v2694 = vunpack.c.h.b16 %v2147
        %v2695 = vunpack.c.l.b16 %v2148
        %v2696 = vunpack.c.h.b16 %v2148
        %v2697 = vunpack.c.l.b16 %v2149
        %v2698 = vunpack.c.h.b16 %v2149
        %v2699 = vunpack.c.l.b16 %v2150
        %v2700 = vunpack.c.h.b16 %v2150
        %v2701 = vunpack.c.l.b16 %v2151
        %v2702 = vunpack.c.h.b16 %v2151
        %v2703 = vunpack.c.l.b16 %v2152
        %v2704 = vunpack.c.h.b16 %v2152
        %v2705 = vunpack.c.l.b16 %v2153
        %v2706 = vunpack.c.h.b16 %v2153
        %v2707 = vunpack.c.l.b16 %v2154
        %v2708 = vunpack.c.h.b16 %v2154
        %v2709 = vunpack.c.l.b16 %v2155
        %v2710 = vunpack.c.h.b16 %v2155
        %v2711 = vunpack.c.l.b16 %v2156
        %v2712 = vunpack.c.h.b16 %v2156
        %v2713 = vunpack.c.l.b16 %v2157
        %v2714 = vunpack.c.h.b16 %v2157
        %v2715 = vunpack.c.l.b16 %v2158
        %v2716 = vunpack.c.h.b16 %v2158
        %v2717 = vunpack.c.l.b16 %v2159
        %v2718 = vunpack.c.h.b16 %v2159
        %v2719 = vunpack.c.l.b16 %v2160
        %v2720 = vunpack.c.h.b16 %v2160
        %v2721 = vunpack.c.l.b16 %v2161
        %v2722 = vunpack.c.h.b16 %v2161
        %v2723 = vunpack.c.l.b16 %v2162
        %v2724 = vunpack.c.h.b16 %v2162
        %v2725 = vunpack.c.l.b16 %v2163
        %v2726 = vunpack.c.h.b16 %v2163
        %v2727 = vunpack.c.l.b16 %v2164
        %v2728 = vunpack.c.h.b16 %v2164
        %v2729 = vunpack.c.l.b16 %v2165
        %v2730 = vunpack.c.h.b16 %v2165
        %v2731 = vunpack.c.l.b16 %v2166
        %v2732 = vunpack.c.h.b16 %v2166
        %v2733 = vunpack.c.l.b16 %v2167
        %v2734 = vunpack.c.h.b16 %v2167
        %v2735 = vunpack.c.l.b16 %v2168
        %v2736 = vunpack.c.h.b16 %v2168
        %v2737 = vunpack.c.l.b16 %v2169
        %v2738 = vunpack.c.h.b16 %v2169
        %v2739 = vunpack.c.l.b16 %v2170
        %v2740 = vunpack.c.h.b16 %v2170
        %v2741 = vunpack.c.l.b16 %v2171
        %v2742 = vunpack.c.h.b16 %v2171
        %v2743 = vunpack.c.l.b16 %v2172
        %v2744 = vunpack.c.h.b16 %v2172
        %v2745 = vunpack.c.l.b16 %v2173
        %v2746 = vunpack.c.h.b16 %v2173
        %v2747 = vunpack.c.l.b16 %v2174
        %v2748 = vunpack.c.h.b16 %v2174
        %v2749 = vunpack.c.l.b16 %v2175
        %v2750 = vunpack.c.h.b16 %v2175
        %v2751 = vunpack.c.l.b16 %v2176
        %v2752 = vunpack.c.h.b16 %v2176
        %v2753 = vunpack.c.l.b16 %v2177
        %v2754 = vunpack.c.h.b16 %v2177
        %v2755 = vunpack.c.l.b16 %v2178
        %v2756 = vunpack.c.h.b16 %v2178
        %v2757 = vunpack.c.l.b16 %v2179
        %v2758 = vunpack.c.h.b16 %v2179
        %v2759 = vunpack.c.l.b16 %v2180
        %v2760 = vunpack.c.h.b16 %v2180
        %v2761 = vunpack.c.l.b16 %v2181
        %v2762 = vunpack.c.h.b16 %v2181
        %v2763 = vunpack.c.l.b16 %v2182
        %v2764 = vunpack.c.h.b16 %v2182
        %v2765 = vunpack.c.l.b16 %v2183
        %v2766 = vunpack.c.h.b16 %v2183
        %v2767 = vunpack.c.l.b16 %v2184
        %v2768 = vunpack.c.h.b16 %v2184
        %v2769 = vunpack.c.l.b16 %v2185
        %v2770 = vunpack.c.h.b16 %v2185
        %v2771 = vunpack.c.l.b16 %v2186
        %v2772 = vunpack.c.h.b16 %v2186
        %v2773 = vunpack.c.l.b16 %v2187
        %v2774 = vunpack.c.h.b16 %v2187
        %v2775 = vunpack.c.l.b16 %v2188
        %v2776 = vunpack.c.h.b16 %v2188
        %v2777 = vunpack.c.l.b16 %v2189
        %v2778 = vunpack.c.h.b16 %v2189
        %v2779 = vunpack.c.l.b16 %v2190
        %v2780 = vunpack.c.h.b16 %v2190
        %v2781 = vunpack.c.l.b16 %v2191
        %v2782 = vunpack.c.h.b16 %v2191
        %v2783 = vunpack.c.l.b16 %v2192
        %v2784 = vunpack.c.h.b16 %v2192
        %v2785 = vunpack.c.l.b16 %v2193
        %v2786 = vunpack.c.h.b16 %v2193
        %v2787 = vunpack.c.l.b16 %v2194
        %v2788 = vunpack.c.h.b16 %v2194
        %v2789 = vunpack.c.l.b16 %v2195
        %v2790 = vunpack.c.h.b16 %v2195
        %v2791 = vunpack.c.l.b16 %v2196
        %v2792 = vunpack.c.h.b16 %v2196
        %v2793 = vunpack.c.l.b16 %v2197
        %v2794 = vunpack.c.h.b16 %v2197
        %v2795 = vunpack.c.l.b16 %v2198
        %v2796 = vunpack.c.h.b16 %v2198
        %v2797 = vunpack.c.l.b16 %v2199
        %v2798 = vunpack.c.h.b16 %v2199
        %v2799 = vunpack.c.l.b16 %v2200
        %v2800 = vunpack.c.h.b16 %v2200
        %v2801 = vunpack.c.l.b16 %v2201
        %v2802 = vunpack.c.h.b16 %v2201
        %v2803 = vunpack.c.l.b16 %v2202
        %v2804 = vunpack.c.h.b16 %v2202
        %v2805 = vunpack.c.l.b16 %v2203
        %v2806 = vunpack.c.h.b16 %v2203
        %v2807 = vunpack.c.l.b16 %v2204
        %v2808 = vunpack.c.h.b16 %v2204
        %v2809 = vunpack.c.l.b16 %v2205
        %v2810 = vunpack.c.h.b16 %v2205
        %v2811 = vunpack.c.l.b16 %v2206
        %v2812 = vunpack.c.h.b16 %v2206
        %v2813 = vunpack.c.l.b16 %v2207
        %v2814 = vunpack.c.h.b16 %v2207
        %v2815 = vunpack.c.l.b16 %v2208
        %v2816 = vunpack.c.h.b16 %v2208
        %v2817 = vunpack.c.l.b16 %v2209
        %v2818 = vunpack.c.h.b16 %v2209
        %v2819 = vunpack.c.l.b16 %v2210
        %v2820 = vunpack.c.h.b16 %v2210
        %v2821 = vunpack.c.l.b16 %v2211
        %v2822 = vunpack.c.h.b16 %v2211
        %v2823 = vunpack.c.l.b16 %v2212
        %v2824 = vunpack.c.h.b16 %v2212
        %v2825 = vunpack.c.l.b16 %v2213
        %v2826 = vunpack.c.h.b16 %v2213
        %v2827 = vunpack.c.l.b16 %v2214
        %v2828 = vunpack.c.h.b16 %v2214
        %v2829 = vunpack.c.l.b16 %v2215
        %v2830 = vunpack.c.h.b16 %v2215
        %v2831 = vunpack.c.l.b16 %v2216
        %v2832 = vunpack.c.h.b16 %v2216
        %v2833 = vunpack.c.l.b16 %v2217
        %v2834 = vunpack.c.h.b16 %v2217
        %v2835 = vunpack.c.l.b16 %v2218
        %v2836 = vunpack.c.h.b16 %v2218
        %v2837 = vunpack.c.l.b16 %v2219
        %v2838 = vunpack.c.h.b16 %v2219
        %v2839 = vunpack.c.l.b16 %v2220
        %v2840 = vunpack.c.h.b16 %v2220
        %v2841 = vunpack.c.l.b16 %v2221
        %v2842 = vunpack.c.h.b16 %v2221
        %v2843 = vunpack.c.l.b16 %v2222
        %v2844 = vunpack.c.h.b16 %v2222
        %v2845 = vunpack.c.l.b16 %v2223
        %v2846 = vunpack.c.h.b16 %v2223
        %v2847 = vunpack.c.l.b16 %v2224
        %v2848 = vunpack.c.h.b16 %v2224
        %v2849 = vunpack.c.l.b16 %v2225
        %v2850 = vunpack.c.h.b16 %v2225
        %v2851 = vunpack.c.l.b16 %v2226
        %v2852 = vunpack.c.h.b16 %v2226
        %v2853 = vunpack.c.l.b16 %v2227
        %v2854 = vunpack.c.h.b16 %v2227
        %v2855 = vunpack.c.l.b16 %v2228
        %v2856 = vunpack.c.h.b16 %v2228
        %v2857 = vunpack.c.l.b16 %v2229
        %v2858 = vunpack.c.h.b16 %v2229
        %v2859 = vunpack.c.l.b16 %v2230
        %v2860 = vunpack.c.h.b16 %v2230
        %v2861 = vunpack.c.l.b16 %v2231
        %v2862 = vunpack.c.h.b16 %v2231
        %v2863 = vunpack.c.l.b16 %v2232
        %v2864 = vunpack.c.h.b16 %v2232
        %v2865 = vunpack.c.l.b16 %v2233
        %v2866 = vunpack.c.h.b16 %v2233
        %v2867 = vunpack.c.l.b16 %v2234
        %v2868 = vunpack.c.h.b16 %v2234
        %v2869 = vunpack.c.l.b16 %v2235
        %v2870 = vunpack.c.h.b16 %v2235
        %v2871 = vunpack.c.l.b16 %v2236
        %v2872 = vunpack.c.h.b16 %v2236
        %v2873 = vunpack.c.l.b16 %v2237
        %v2874 = vunpack.c.h.b16 %v2237
        %v2875 = vunpack.c.l.b16 %v2238
        %v2876 = vunpack.c.h.b16 %v2238
        %v2877 = vunpack.c.l.b16 %v2239
        %v2878 = vunpack.c.h.b16 %v2239
        %v2879 = vunpack.c.l.b16 %v2240
        %v2880 = vunpack.c.h.b16 %v2240
        %v2881 = vunpack.c.l.b16 %v2241
        %v2882 = vunpack.c.h.b16 %v2241
        %v2883 = vunpack.c.l.b16 %v2242
        %v2884 = vunpack.c.h.b16 %v2242
        %v2885 = vunpack.c.l.b16 %v2243
        %v2886 = vunpack.c.h.b16 %v2243
        %v2887 = vunpack.c.l.b16 %v2244
        %v2888 = vunpack.c.h.b16 %v2244
        %v2889 = vunpack.c.l.b16 %v2245
        %v2890 = vunpack.c.h.b16 %v2245
        %v2891 = vunpack.c.l.b16 %v2246
        %v2892 = vunpack.c.h.b16 %v2246
        %v2893 = vunpack.c.l.b16 %v2247
        %v2894 = vunpack.c.h.b16 %v2247
        %v2895 = vunpack.c.l.b16 %v2248
        %v2896 = vunpack.c.h.b16 %v2248
        %v2897 = vunpack.c.l.b16 %v2249
        %v2898 = vunpack.c.h.b16 %v2249
        %v2899 = vunpack.c.l.b16 %v2250
        %v2900 = vunpack.c.h.b16 %v2250
        %v2901 = vunpack.c.l.b16 %v2251
        %v2902 = vunpack.c.h.b16 %v2251
        %v2903 = vunpack.c.l.b16 %v2252
        %v2904 = vunpack.c.h.b16 %v2252
        %v2905 = vunpack.c.l.b16 %v2253
        %v2906 = vunpack.c.h.b16 %v2253
        %v2907 = vunpack.c.l.b16 %v2254
        %v2908 = vunpack.c.h.b16 %v2254
        %v2909 = vunpack.c.l.b16 %v2255
        %v2910 = vunpack.c.h.b16 %v2255
        %v2911 = vunpack.c.l.b16 %v2256
        %v2912 = vunpack.c.h.b16 %v2256
        %v2913 = vunpack.c.l.b16 %v2257
        %v2914 = vunpack.c.h.b16 %v2257
        %v2915 = vunpack.c.l.b16 %v2258
        %v2916 = vunpack.c.h.b16 %v2258
        %v2917 = vunpack.c.l.b16 %v2259
        %v2918 = vunpack.c.h.b16 %v2259
        %v2919 = vunpack.c.l.b16 %v2260
        %v2920 = vunpack.c.h.b16 %v2260
        %v2921 = vunpack.c.l.b16 %v2261
        %v2922 = vunpack.c.h.b16 %v2261
        %v2923 = vunpack.c.l.b16 %v2262
        %v2924 = vunpack.c.h.b16 %v2262
        %v2925 = vunpack.c.l.b16 %v2263
        %v2926 = vunpack.c.h.b16 %v2263
        %v2927 = vunpack.c.l.b16 %v2264
        %v2928 = vunpack.c.h.b16 %v2264
        %v2929 = vunpack.c.l.b16 %v2265
        %v2930 = vunpack.c.h.b16 %v2265
        %v2931 = vunpack.c.l.b16 %v2266
        %v2932 = vunpack.c.h.b16 %v2266
        %v2933 = vunpack.c.l.b16 %v2267
        %v2934 = vunpack.c.h.b16 %v2267
        %v2935 = vunpack.c.l.b16 %v2268
        %v2936 = vunpack.c.h.b16 %v2268
        %v2937 = vunpack.c.l.b16 %v2269
        %v2938 = vunpack.c.h.b16 %v2269
        %v2939 = vunpack.c.l.b16 %v2270
        %v2940 = vunpack.c.h.b16 %v2270
        %v2941 = vunpack.c.l.b16 %v2271
        %v2942 = vunpack.c.h.b16 %v2271
        %v2943 = vunpack.c.l.b16 %v2272
        %v2944 = vunpack.c.h.b16 %v2272
        %v2945 = vunpack.c.l.b16 %v2273
        %v2946 = vunpack.c.h.b16 %v2273
        %v2947 = vunpack.c.l.b16 %v2274
        %v2948 = vunpack.c.h.b16 %v2274
        %v2949 = vunpack.c.l.b16 %v2275
        %v2950 = vunpack.c.h.b16 %v2275
        %v2951 = vunpack.c.l.b16 %v2276
        %v2952 = vunpack.c.h.b16 %v2276
        %v2953 = vunpack.c.l.b16 %v2277
        %v2954 = vunpack.c.h.b16 %v2277
        %v2955 = vunpack.c.l.b16 %v2278
        %v2956 = vunpack.c.h.b16 %v2278
        %v2957 = vunpack.c.l.b16 %v2279
        %v2958 = vunpack.c.h.b16 %v2279
        %v2959 = vunpack.c.l.b16 %v2280
        %v2960 = vunpack.c.h.b16 %v2280
        %v2961 = vunpack.c.l.b16 %v2281
        %v2962 = vunpack.c.h.b16 %v2281
        %v2963 = vunpack.c.l.b16 %v2282
        %v2964 = vunpack.c.h.b16 %v2282
        %v2965 = vunpack.c.l.b16 %v2283
        %v2966 = vunpack.c.h.b16 %v2283
        %v2967 = vunpack.c.l.b16 %v2284
        %v2968 = vunpack.c.h.b16 %v2284
        %v2969 = vunpack.c.l.b16 %v2285
        %v2970 = vunpack.c.h.b16 %v2285
        %v2971 = vunpack.c.l.b16 %v2286
        %v2972 = vunpack.c.h.b16 %v2286
        %v2973 = vunpack.c.l.b16 %v2287
        %v2974 = vunpack.c.h.b16 %v2287
        %v2975 = vunpack.c.l.b16 %v2288
        %v2976 = vunpack.c.h.b16 %v2288
        %v2977 = vunpack.c.l.b16 %v2289
        %v2978 = vunpack.c.h.b16 %v2289
        %v2979 = vunpack.c.l.b16 %v2290
        %v2980 = vunpack.c.h.b16 %v2290
        %v2981 = vunpack.c.l.b16 %v2291
        %v2982 = vunpack.c.h.b16 %v2291
        %v2983 = vunpack.c.l.b16 %v2292
        %v2984 = vunpack.c.h.b16 %v2292
        %v2985 = vunpack.c.l.b16 %v2293
        %v2986 = vunpack.c.h.b16 %v2293
        %v2987 = vunpack.c.l.b16 %v2294
        %v2988 = vunpack.c.h.b16 %v2294
        %v2989 = vunpack.c.l.b16 %v2295
        %v2990 = vunpack.c.h.b16 %v2295
        %v2991 = vunpack.c.l.b16 %v2296
        %v2992 = vunpack.c.h.b16 %v2296
        %v2993 = vunpack.c.l.b16 %v2297
        %v2994 = vunpack.c.h.b16 %v2297
        %v2995 = vunpack.c.l.b16 %v2298
        %v2996 = vunpack.c.h.b16 %v2298
        %v2997 = vunpack.c.l.b16 %v2299
        %v2998 = vunpack.c.h.b16 %v2299
        %v2999 = vunpack.c.l.b16 %v2300
        %v3000 = vunpack.c.h.b16 %v2300
        %v3001 = vunpack.c.l.b16 %v2301
        %v3002 = vunpack.c.h.b16 %v2301
        %v3003 = vunpack.c.l.b16 %v2302
        %v3004 = vunpack.c.h.b16 %v2302
        %v3005 = vunpack.c.l.b16 %v2303
        %v3006 = vunpack.c.h.b16 %v2303
        %v3007 = vunpack.c.l.b16 %v2304
        %v3008 = vunpack.c.h.b16 %v2304
        %v3009 = vunpack.c.l.b16 %v2305
        %v3010 = vunpack.c.h.b16 %v2305
        %v3011 = vunpack.c.l.b16 %v2306
        %v3012 = vunpack.c.h.b16 %v2306
        %v3013 = vunpack.c.l.b16 %v2307
        %v3014 = vunpack.c.h.b16 %v2307
        %v3015 = vunpack.c.l.b16 %v2308
        %v3016 = vunpack.c.h.b16 %v2308
        %v3017 = vunpack.c.l.b16 %v2309
        %v3018 = vunpack.c.h.b16 %v2309
        %v3019 = vunpack.c.l.b16 %v2310
        %v3020 = vunpack.c.h.b16 %v2310
        %v3021 = vunpack.c.l.b16 %v2311
        %v3022 = vunpack.c.h.b16 %v2311
        %v3023 = vunpack.c.l.b16 %v2312
        %v3024 = vunpack.c.h.b16 %v2312
        %v3025 = vunpack.c.l.b16 %v2313
        %v3026 = vunpack.c.h.b16 %v2313
        %v3027 = vunpack.c.l.b16 %v2314
        %v3028 = vunpack.c.h.b16 %v2314
        %v3029 = vunpack.c.l.b16 %v2315
        %v3030 = vunpack.c.h.b16 %v2315
        %v3031 = vunpack.c.l.b16 %v2316
        %v3032 = vunpack.c.h.b16 %v2316
        %v3033 = vunpack.c.l.b16 %v2317
        %v3034 = vunpack.c.h.b16 %v2317
        %v3035 = vunpack.c.l.b16 %v2318
        %v3036 = vunpack.c.h.b16 %v2318
        %v3037 = vunpack.c.l.b16 %v2319
        %v3038 = vunpack.c.h.b16 %v2319
        %v3039 = vunpack.c.l.b16 %v2320
        %v3040 = vunpack.c.h.b16 %v2320
        %v3041 = vunpack.c.l.b16 %v2321
        %v3042 = vunpack.c.h.b16 %v2321
        %v3043 = vunpack.c.l.b16 %v2322
        %v3044 = vunpack.c.h.b16 %v2322
        %v3045 = vunpack.c.l.b16 %v2323
        %v3046 = vunpack.c.h.b16 %v2323
        %v3047 = vunpack.c.l.b16 %v2324
        %v3048 = vunpack.c.h.b16 %v2324
        %v3049 = vunpack.c.l.b16 %v2325
        %v3050 = vunpack.c.h.b16 %v2325
        %v3051 = vunpack.c.l.b16 %v2326
        %v3052 = vunpack.c.h.b16 %v2326
        %v3053 = vunpack.c.l.b16 %v2327
        %v3054 = vunpack.c.h.b16 %v2327
        %v3055 = vunpack.c.l.b16 %v2328
        %v3056 = vunpack.c.h.b16 %v2328
        %v3057 = vunpack.c.l.b16 %v2329
        %v3058 = vunpack.c.h.b16 %v2329
        %v3059 = vunpack.c.l.b16 %v2330
        %v3060 = vunpack.c.h.b16 %v2330
        %v3061 = vunpack.c.l.b16 %v2331
        %v3062 = vunpack.c.h.b16 %v2331
        %v3063 = vunpack.c.l.b16 %v2332
        %v3064 = vunpack.c.h.b16 %v2332
        %v3065 = vunpack.c.l.b16 %v2333
        %v3066 = vunpack.c.h.b16 %v2333
        %v3067 = vunpack.c.l.b16 %v2334
        %v3068 = vunpack.c.h.b16 %v2334
        %v3069 = vunpack.c.l.b16 %v2335
        %v3070 = vunpack.c.h.b16 %v2335
        %v3071 = vunpack.c.l.b16 %v2336
        %v3072 = vunpack.c.h.b16 %v2336
        %v3073 = vunpack.c.l.b16 %v2337
        %v3074 = vunpack.c.h.b16 %v2337
        %v3075 = vunpack.c.l.b16 %v2338
        %v3076 = vunpack.c.h.b16 %v2338
        %v3077 = vunpack.c.l.b16 %v2339
        %v3078 = vunpack.c.h.b16 %v2339
        %v3079 = vunpack.c.l.b16 %v2340
        %v3080 = vunpack.c.h.b16 %v2340
        %v3081 = vunpack.c.l.b16 %v2341
        %v3082 = vunpack.c.h.b16 %v2341
        %v3083 = vunpack.c.l.b16 %v2342
        %v3084 = vunpack.c.h.b16 %v2342
        %v3085 = vunpack.c.l.b16 %v2343
        %v3086 = vunpack.c.h.b16 %v2343
        %v3087 = vunpack.c.l.b16 %v2344
        %v3088 = vunpack.c.h.b16 %v2344
        %v3089 = vunpack.c.l.b16 %v2345
        %v3090 = vunpack.c.h.b16 %v2345
        %v3091 = vunpack.c.l.b16 %v2346
        %v3092 = vunpack.c.h.b16 %v2346
        %v3093 = vunpack.c.l.b16 %v2347
        %v3094 = vunpack.c.h.b16 %v2347
        %v3095 = vunpack.c.l.b16 %v2348
        %v3096 = vunpack.c.h.b16 %v2348
        %v3097 = vunpack.c.l.b16 %v2349
        %v3098 = vunpack.c.h.b16 %v2349
        %v3099 = vunpack.c.l.b16 %v2350
        %v3100 = vunpack.c.h.b16 %v2350
        %v3101 = vunpack.c.l.b16 %v2351
        %v3102 = vunpack.c.h.b16 %v2351
        %v3103 = vunpack.c.l.b16 %v2352
        %v3104 = vunpack.c.h.b16 %v2352
        %v3105 = vunpack.c.l.b16 %v2353
        %v3106 = vunpack.c.h.b16 %v2353
        %v3107 = vunpack.c.l.b16 %v2354
        %v3108 = vunpack.c.h.b16 %v2354
        %v3109 = vunpack.c.l.b16 %v2355
        %v3110 = vunpack.c.h.b16 %v2355
        %v3111 = vunpack.c.l.b16 %v2356
        %v3112 = vunpack.c.h.b16 %v2356
        %v3113 = vunpack.c.l.b16 %v2357
        %v3114 = vunpack.c.h.b16 %v2357
        %v3115 = vunpack.c.l.b16 %v2358
        %v3116 = vunpack.c.h.b16 %v2358
        %v3117 = vunpack.c.l.b16 %v2359
        %v3118 = vunpack.c.h.b16 %v2359
        %v3119 = vunpack.c.l.b16 %v2360
        %v3120 = vunpack.c.h.b16 %v2360
        %v3121 = vunpack.c.l.b16 %v2361
        %v3122 = vunpack.c.h.b16 %v2361
        %v3123 = vunpack.c.l.b16 %v2362
        %v3124 = vunpack.c.h.b16 %v2362
        %v3125 = vunpack.c.l.b16 %v2363
        %v3126 = vunpack.c.h.b16 %v2363
        %v3127 = vunpack.c.l.b16 %v2364
        %v3128 = vunpack.c.h.b16 %v2364
        %v3129 = vunpack.c.l.b16 %v2365
        %v3130 = vunpack.c.h.b16 %v2365
        %v3131 = vunpack.c.l.b16 %v2366
        %v3132 = vunpack.c.h.b16 %v2366
        %v3133 = vunpack.c.l.b16 %v2367
        %v3134 = vunpack.c.h.b16 %v2367
        %v3135 = vunpack.c.l.b16 %v2368
        %v3136 = vunpack.c.h.b16 %v2368
        %v3137 = vunpack.c.l.b16 %v2369
        %v3138 = vunpack.c.h.b16 %v2369
        %v3139 = vpack.c.b16 %v2631, %v2627
        %v3140 = vpack.c.b16 %v2632, %v2628
        %v3141 = vpack.c.b16 %v2633, %v2629
        %v3142 = vpack.c.b16 %v2634, %v2630
        %v3143 = vpack.c.b16 %v2639, %v2635
        %v3144 = vpack.c.b16 %v2640, %v2636
        %v3145 = vpack.c.b16 %v2641, %v2637
        %v3146 = vpack.c.b16 %v2642, %v2638
        %v3147 = vpack.c.b16 %v2647, %v2643
        %v3148 = vpack.c.b16 %v2648, %v2644
        %v3149 = vpack.c.b16 %v2649, %v2645
        %v3150 = vpack.c.b16 %v2650, %v2646
        %v3151 = vpack.c.b16 %v2655, %v2651
        %v3152 = vpack.c.b16 %v2656, %v2652
        %v3153 = vpack.c.b16 %v2657, %v2653
        %v3154 = vpack.c.b16 %v2658, %v2654
        %v3155 = vpack.c.b16 %v2663, %v2659
        %v3156 = vpack.c.b16 %v2664, %v2660
        %v3157 = vpack.c.b16 %v2665, %v2661
        %v3158 = vpack.c.b16 %v2666, %v2662
        %v3159 = vpack.c.b16 %v2671, %v2667
        %v3160 = vpack.c.b16 %v2672, %v2668
        %v3161 = vpack.c.b16 %v2673, %v2669
        %v3162 = vpack.c.b16 %v2674, %v2670
        %v3163 = vpack.c.b16 %v2679, %v2675
        %v3164 = vpack.c.b16 %v2680, %v2676
        %v3165 = vpack.c.b16 %v2681, %v2677
        %v3166 = vpack.c.b16 %v2682, %v2678
        %v3167 = vpack.c.b16 %v2687, %v2683
        %v3168 = vpack.c.b16 %v2688, %v2684
        %v3169 = vpack.c.b16 %v2689, %v2685
        %v3170 = vpack.c.b16 %v2690, %v2686
        %v3171 = vpack.c.b16 %v2695, %v2691
        %v3172 = vpack.c.b16 %v2696, %v2692
        %v3173 = vpack.c.b16 %v2697, %v2693
        %v3174 = vpack.c.b16 %v2698, %v2694
        %v3175 = vpack.c.b16 %v2703, %v2699
        %v3176 = vpack.c.b16 %v2704, %v2700
        %v3177 = vpack.c.b16 %v2705, %v2701
        %v3178 = vpack.c.b16 %v2706, %v2702
        %v3179 = vpack.c.b16 %v2711, %v2707
        %v3180 = vpack.c.b16 %v2712, %v2708
        %v3181 = vpack.c.b16 %v2713, %v2709
        %v3182 = vpack.c.b16 %v2714, %v2710
        %v3183 = vpack.c.b16 %v2719, %v2715
        %v3184 = vpack.c.b16 %v2720, %v2716
        %v3185 = vpack.c.b16 %v2721, %v2717
        %v3186 = vpack.c.b16 %v2722, %v2718
        %v3187 = vpack.c.b16 %v2727, %v2723
        %v3188 = vpack.c.b16 %v2728, %v2724
        %v3189 = vpack.c.b16 %v2729, %v2725
        %v3190 = vpack.c.b16 %v2730, %v2726
        %v3191 = vpack.c.b16 %v2735, %v2731
        %v3192 = vpack.c.b16 %v2736, %v2732
        %v3193 = vpack.c.b16 %v2737, %v2733
        %v3194 = vpack.c.b16 %v2738, %v2734
        %v3195 = vpack.c.b16 %v2743, %v2739
        %v3196 = vpack.c.b16 %v2744, %v2740
        %v3197 = vpack.c.b16 %v2745, %v2741
        %v3198 = vpack.c.b16 %v2746, %v2742
        %v3199 = vpack.c.b16 %v2751, %v2747
        %v3200 = vpack.c.b16 %v2752, %v2748
        %v3201 = vpack.c.b16 %v2753, %v2749
        %v3202 = vpack.c.b16 %v2754, %v2750
        %v3203 = vpack.c.b16 %v2759, %v2755
        %v3204 = vpack.c.b16 %v2760, %v2756
        %v3205 = vpack.c.b16 %v2761, %v2757
        %v3206 = vpack.c.b16 %v2762, %v2758
        %v3207 = vpack.c.b16 %v2767, %v2763
        %v3208 = vpack.c.b16 %v2768, %v2764
        %v3209 = vpack.c.b16 %v2769, %v2765
        %v3210 = vpack.c.b16 %v2770, %v2766
        %v3211 = vpack.c.b16 %v2775, %v2771
        %v3212 = vpack.c.b16 %v2776, %v2772
        %v3213 = vpack.c.b16 %v2777, %v2773
        %v3214 = vpack.c.b16 %v2778, %v2774
        %v3215 = vpack.c.b16 %v2783, %v2779
        %v3216 = vpack.c.b16 %v2784, %v2780
        %v3217 = vpack.c.b16 %v2785, %v2781
        %v3218 = vpack.c.b16 %v2786, %v2782
        %v3219 = vpack.c.b16 %v2791, %v2787
        %v3220 = vpack.c.b16 %v2792, %v2788
        %v3221 = vpack.c.b16 %v2793, %v2789
        %v3222 = vpack.c.b16 %v2794, %v2790
        %v3223 = vpack.c.b16 %v2799, %v2795
        %v3224 = vpack.c.b16 %v2800, %v2796
        %v3225 = vpack.c.b16 %v2801, %v2797
        %v3226 = vpack.c.b16 %v2802, %v2798
        %v3227 = vpack.c.b16 %v2807, %v2803
        %v3228 = vpack.c.b16 %v2808, %v2804
        %v3229 = vpack.c.b16 %v2809, %v2805
        %v3230 = vpack.c.b16 %v2810, %v2806
        %v3231 = vpack.c.b16 %v2815, %v2811
        %v3232 = vpack.c.b16 %v2816, %v2812
        %v3233 = vpack.c.b16 %v2817, %v2813
        %v3234 = vpack.c.b16 %v2818, %v2814
        %v3235 = vpack.c.b16 %v2823, %v2819
        %v3236 = vpack.c.b16 %v2824, %v2820
        %v3237 = vpack.c.b16 %v2825, %v2821
        %v3238 = vpack.c.b16 %v2826, %v2822
        %v3239 = vpack.c.b16 %v2831, %v2827
        %v3240 = vpack.c.b16 %v2832, %v2828
        %v3241 = vpack.c.b16 %v2833, %v2829
        %v3242 = vpack.c.b16 %v2834, %v2830
        %v3243 = vpack.c.b16 %v2839, %v2835
        %v3244 = vpack.c.b16 %v2840, %v2836
        %v3245 = vpack.c.b16 %v2841, %v2837
        %v3246 = vpack.c.b16 %v2842, %v2838
        %v3247 = vpack.c.b16 %v2847, %v2843
        %v3248 = vpack.c.b16 %v2848, %v2844
        %v3249 = vpack.c.b16 %v2849, %v2845
        %v3250 = vpack.c.b16 %v2850, %v2846
        %v3251 = vpack.c.b16 %v2855, %v2851
        %v3252 = vpack.c.b16 %v2856, %v2852
        %v3253 = vpack.c.b16 %v2857, %v2853
        %v3254 = vpack.c.b16 %v2858, %v2854
        %v3255 = vpack.c.b16 %v2863, %v2859
        %v3256 = vpack.c.b16 %v2864, %v2860
        %v3257 = vpack.c.b16 %v2865, %v2861
        %v3258 = vpack.c.b16 %v2866, %v2862
        %v3259 = vpack.c.b16 %v2871, %v2867
        %v3260 = vpack.c.b16 %v2872, %v2868
        %v3261 = vpack.c.b16 %v2873, %v2869
        %v3262 = vpack.c.b16 %v2874, %v2870
        %v3263 = vpack.c.b16 %v2879, %v2875
        %v3264 = vpack.c.b16 %v2880, %v2876
        %v3265 = vpack.c.b16 %v2881, %v2877
        %v3266 = vpack.c.b16 %v2882, %v2878
        %v3267 = vpack.c.b16 %v2887, %v2883
        %v3268 = vpack.c.b16 %v2888, %v2884
        %v3269 = vpack.c.b16 %v2889, %v2885
        %v3270 = vpack.c.b16 %v2890, %v2886
        %v3271 = vpack.c.b16 %v2895, %v2891
        %v3272 = vpack.c.b16 %v2896, %v2892
        %v3273 = vpack.c.b16 %v2897, %v2893
        %v3274 = vpack.c.b16 %v2898, %v2894
        %v3275 = vpack.c.b16 %v2903, %v2899
        %v3276 = vpack.c.b16 %v2904, %v2900
        %v3277 = vpack.c.b16 %v2905, %v2901
        %v3278 = vpack.c.b16 %v2906, %v2902
        %v3279 = vpack.c.b16 %v2911, %v2907
        %v3280 = vpack.c.b16 %v2912, %v2908
        %v3281 = vpack.c.b16 %v2913, %v2909
        %v3282 = vpack.c.b16 %v2914, %v2910
        %v3283 = vpack.c.b16 %v2919, %v2915
        %v3284 = vpack.c.b16 %v2920, %v2916
        %v3285 = vpack.c.b16 %v2921, %v2917
        %v3286 = vpack.c.b16 %v2922, %v2918
        %v3287 = vpack.c.b16 %v2927, %v2923
        %v3288 = vpack.c.b16 %v2928, %v2924
        %v3289 = vpack.c.b16 %v2929, %v2925
        %v3290 = vpack.c.b16 %v2930, %v2926
        %v3291 = vpack.c.b16 %v2935, %v2931
        %v3292 = vpack.c.b16 %v2936, %v2932
        %v3293 = vpack.c.b16 %v2937, %v2933
        %v3294 = vpack.c.b16 %v2938, %v2934
        %v3295 = vpack.c.b16 %v2943, %v2939
        %v3296 = vpack.c.b16 %v2944, %v2940
        %v3297 = vpack.c.b16 %v2945, %v2941
        %v3298 = vpack.c.b16 %v2946, %v2942
        %v3299 = vpack.c.b16 %v2951, %v2947
        %v3300 = vpack.c.b16 %v2952, %v2948
        %v3301 = vpack.c.b16 %v2953, %v2949
        %v3302 = vpack.c.b16 %v2954, %v2950
        %v3303 = vpack.c.b16 %v2959, %v2955
        %v3304 = vpack.c.b16 %v2960, %v2956
        %v3305 = vpack.c.b16 %v2961, %v2957
        %v3306 = vpack.c.b16 %v2962, %v2958
        %v3307 = vpack.c.b16 %v2967, %v2963
        %v3308 = vpack.c.b16 %v2968, %v2964
        %v3309 = vpack.c.b16 %v2969, %v2965
        %v3310 = vpack.c.b16 %v2970, %v2966
        %v3311 = vpack.c.b16 %v2975, %v2971
        %v3312 = vpack.c.b16 %v2976, %v2972
        %v3313 = vpack.c.b16 %v2977, %v2973
        %v3314 = vpack.c.b16 %v2978, %v2974
        %v3315 = vpack.c.b16 %v2983, %v2979
        %v3316 = vpack.c.b16 %v2984, %v2980
        %v3317 = vpack.c.b16 %v2985, %v2981
        %v3318 = vpack.c.b16 %v2986, %v2982
        %v3319 = vpack.c.b16 %v2991, %v2987
        %v3320 = vpack.c.b16 %v2992, %v2988
        %v3321 = vpack.c.b16 %v2993, %v2989
        %v3322 = vpack.c.b16 %v2994, %v2990
        %v3323 = vpack.c.b16 %v2999, %v2995
        %v3324 = vpack.c.b16 %v3000, %v2996
        %v3325 = vpack.c.b16 %v3001, %v2997
        %v3326 = vpack.c.b16 %v3002, %v2998
        %v3327 = vpack.c.b16 %v3007, %v3003
        %v3328 = vpack.c.b16 %v3008, %v3004
        %v3329 = vpack.c.b16 %v3009, %v3005
        %v3330 = vpack.c.b16 %v3010, %v3006
        %v3331 = vpack.c.b16 %v3015, %v3011
        %v3332 = vpack.c.b16 %v3016, %v3012
        %v3333 = vpack.c.b16 %v3017, %v3013
        %v3334 = vpack.c.b16 %v3018, %v3014
        %v3335 = vpack.c.b16 %v3023, %v3019
        %v3336 = vpack.c.b16 %v3024, %v3020
        %v3337 = vpack.c.b16 %v3025, %v3021
        %v3338 = vpack.c.b16 %v3026, %v3022
        %v3339 = vpack.c.b16 %v3031, %v3027
        %v3340 = vpack.c.b16 %v3032, %v3028
        %v3341 = vpack.c.b16 %v3033, %v3029
        %v3342 = vpack.c.b16 %v3034, %v3030
        %v3343 = vpack.c.b16 %v3039, %v3035
        %v3344 = vpack.c.b16 %v3040, %v3036
        %v3345 = vpack.c.b16 %v3041, %v3037
        %v3346 = vpack.c.b16 %v3042, %v3038
        %v3347 = vpack.c.b16 %v3047, %v3043
        %v3348 = vpack.c.b16 %v3048, %v3044
        %v3349 = vpack.c.b16 %v3049, %v3045
        %v3350 = vpack.c.b16 %v3050, %v3046
        %v3351 = vpack.c.b16 %v3055, %v3051
        %v3352 = vpack.c.b16 %v3056, %v3052
        %v3353 = vpack.c.b16 %v3057, %v3053
        %v3354 = vpack.c.b16 %v3058, %v3054
        %v3355 = vpack.c.b16 %v3063, %v3059
        %v3356 = vpack.c.b16 %v3064, %v3060
        %v3357 = vpack.c.b16 %v3065, %v3061
        %v3358 = vpack.c.b16 %v3066, %v3062
        %v3359 = vpack.c.b16 %v3071, %v3067
        %v3360 = vpack.c.b16 %v3072, %v3068
        %v3361 = vpack.c.b16 %v3073, %v3069
        %v3362 = vpack.c.b16 %v3074, %v3070
        %v3363 = vpack.c.b16 %v3079, %v3075
        %v3364 = vpack.c.b16 %v3080, %v3076
        %v3365 = vpack.c.b16 %v3081, %v3077
        %v3366 = vpack.c.b16 %v3082, %v3078
        %v3367 = vpack.c.b16 %v3087, %v3083
        %v3368 = vpack.c.b16 %v3088, %v3084
        %v3369 = vpack.c.b16 %v3089, %v3085
        %v3370 = vpack.c.b16 %v3090, %v3086
        %v3371 = vpack.c.b16 %v3095, %v3091
        %v3372 = vpack.c.b16 %v3096, %v3092
        %v3373 = vpack.c.b16 %v3097, %v3093
        %v3374 = vpack.c.b16 %v3098, %v3094
        %v3375 = vpack.c.b16 %v3103, %v3099
        %v3376 = vpack.c.b16 %v3104, %v3100
        %v3377 = vpack.c.b16 %v3105, %v3101
        %v3378 = vpack.c.b16 %v3106, %v3102
        %v3379 = vpack.c.b16 %v3111, %v3107
        %v3380 = vpack.c.b16 %v3112, %v3108
        %v3381 = vpack.c.b16 %v3113, %v3109
        %v3382 = vpack.c.b16 %v3114, %v3110
        %v3383 = vpack.c.b16 %v3119, %v3115
        %v3384 = vpack.c.b16 %v3120, %v3116
        %v3385 = vpack.c.b16 %v3121, %v3117
        %v3386 = vpack.c.b16 %v3122, %v3118
        %v3387 = vpack.c.b16 %v3127, %v3123
        %v3388 = vpack.c.b16 %v3128, %v3124
        %v3389 = vpack.c.b16 %v3129, %v3125
        %v3390 = vpack.c.b16 %v3130, %v3126
        %v3391 = vpack.c.b16 %v3135, %v3131
        %v3392 = vpack.c.b16 %v3136, %v3132
        %v3393 = vpack.c.b16 %v3137, %v3133
        %v3394 = vpack.c.b16 %v3138, %v3134
        %v3652 = vperm.slane %v2370, 0
        %v3653 = vperm.slane %v2370, 1
        %v3654 = vperm.slane %v2370, 2
        %v3655 = vperm.slane %v2370, 3
        %3660 = vmatpush.bf16.msra.mxu0 %v3167
        %3661 = vmatpush.bf16.msra.mxu0 %v3163
        %3662 = vmatpush.bf16.msra.mxu0 %v3159
        %3663 = vmatpush.bf16.msra.mxu0 %v3155
        %3664 = vmatpush.bf16.msra.mxu0 %v3151
        %3665 = vmatpush.bf16.msra.mxu0 %v3147
        %3666 = vmatpush.bf16.msra.mxu0 %v3143
        %3667 = vmatpush.bf16.msra.mxu0 %v3139
        %3668 = vmatmul.bf16.gmra.mxu0 %v2106
        %v3669 = vpop.f32.mrf.mxu0
        %v3670 = vadd.f32 %v3652, %v3669
        %v3671 = vpop.f32.mrf.mxu0
        %3672 = vdwg.mxu0
        %3673 = vmatpush.bf16.msra.mxu0 %v3199
        %3674 = vmatpush.bf16.msra.mxu0 %v3195
        %3675 = vmatpush.bf16.msra.mxu0 %v3191
        %3676 = vmatpush.bf16.msra.mxu0 %v3187
        %3677 = vmatpush.bf16.msra.mxu0 %v3183
        %3678 = vmatpush.bf16.msra.mxu0 %v3179
        %3679 = vmatpush.bf16.msra.mxu0 %v3175
        %3680 = vmatpush.bf16.msra.mxu0 %v3171
        %3681 = vmatmul.bf16.gmra.mxu0 %v2107
        %v3682 = vpop.f32.mrf.mxu0
        %v3683 = vadd.f32 %v3670, %v3682
        %v3684 = vpop.f32.mrf.mxu0
        %3685 = vdwg.mxu0
        %3686 = vmatpush.bf16.msra.mxu0 %v3231
        %3687 = vmatpush.bf16.msra.mxu0 %v3227
        %3688 = vmatpush.bf16.msra.mxu0 %v3223
        %3689 = vmatpush.bf16.msra.mxu0 %v3219
        %3690 = vmatpush.bf16.msra.mxu0 %v3215
        %3691 = vmatpush.bf16.msra.mxu0 %v3211
        %3692 = vmatpush.bf16.msra.mxu0 %v3207
        %3693 = vmatpush.bf16.msra.mxu0 %v3203
        %3694 = vmatmul.bf16.gmra.mxu0 %v2108
        %v3695 = vpop.f32.mrf.mxu0
        %v3696 = vadd.f32 %v3683, %v3695
        %v3697 = vpop.f32.mrf.mxu0
        %3698 = vdwg.mxu0
        %3699 = vmatpush.bf16.msra.mxu0 %v3263
        %3700 = vmatpush.bf16.msra.mxu0 %v3259
        %3701 = vmatpush.bf16.msra.mxu0 %v3255
        %3702 = vmatpush.bf16.msra.mxu0 %v3251
        %3703 = vmatpush.bf16.msra.mxu0 %v3247
        %3704 = vmatpush.bf16.msra.mxu0 %v3243
        %3705 = vmatpush.bf16.msra.mxu0 %v3239
        %3706 = vmatpush.bf16.msra.mxu0 %v3235
        %3707 = vmatmul.bf16.gmra.mxu0 %v2109
        %v3708 = vpop.f32.mrf.mxu0
        %v3709 = vadd.f32 %v3696, %v3708
        %v3710 = vpop.f32.mrf.mxu0
        %3711 = vdwg.mxu0
        %3712 = vmatpush.bf16.msra.mxu0 %v3295
        %3713 = vmatpush.bf16.msra.mxu0 %v3291
        %3714 = vmatpush.bf16.msra.mxu0 %v3287
        %3715 = vmatpush.bf16.msra.mxu0 %v3283
        %3716 = vmatpush.bf16.msra.mxu0 %v3279
        %3717 = vmatpush.bf16.msra.mxu0 %v3275
        %3718 = vmatpush.bf16.msra.mxu0 %v3271
        %3719 = vmatpush.bf16.msra.mxu0 %v3267
        %3720 = vmatmul.bf16.gmra.mxu0 %v2110
        %v3721 = vpop.f32.mrf.mxu0
        %v3722 = vadd.f32 %v3709, %v3721
        %v3723 = vpop.f32.mrf.mxu0
        %3724 = vdwg.mxu0
        %3725 = vmatpush.bf16.msra.mxu0 %v3327
        %3726 = vmatpush.bf16.msra.mxu0 %v3323
        %3727 = vmatpush.bf16.msra.mxu0 %v3319
        %3728 = vmatpush.bf16.msra.mxu0 %v3315
        %3729 = vmatpush.bf16.msra.mxu0 %v3311
        %3730 = vmatpush.bf16.msra.mxu0 %v3307
        %3731 = vmatpush.bf16.msra.mxu0 %v3303
        %3732 = vmatpush.bf16.msra.mxu0 %v3299
        %3733 = vmatmul.bf16.gmra.mxu0 %v2111
        %v3734 = vpop.f32.mrf.mxu0
        %v3735 = vadd.f32 %v3722, %v3734
        %v3736 = vpop.f32.mrf.mxu0
        %3737 = vdwg.mxu0
        %3738 = vmatpush.bf16.msra.mxu0 %v3359
        %3739 = vmatpush.bf16.msra.mxu0 %v3355
        %3740 = vmatpush.bf16.msra.mxu0 %v3351
        %3741 = vmatpush.bf16.msra.mxu0 %v3347
        %3742 = vmatpush.bf16.msra.mxu0 %v3343
        %3743 = vmatpush.bf16.msra.mxu0 %v3339
        %3744 = vmatpush.bf16.msra.mxu0 %v3335
        %3745 = vmatpush.bf16.msra.mxu0 %v3331
        %3746 = vmatmul.bf16.gmra.mxu0 %v2112
        %v3747 = vpop.f32.mrf.mxu0
        %v3748 = vadd.f32 %v3735, %v3747
        %v3749 = vpop.f32.mrf.mxu0
        %3750 = vdwg.mxu0
        %3751 = vmatpush.bf16.msra.mxu0 %v3391
        %3752 = vmatpush.bf16.msra.mxu0 %v3387
        %3753 = vmatpush.bf16.msra.mxu0 %v3383
        %3754 = vmatpush.bf16.msra.mxu0 %v3379
        %3755 = vmatpush.bf16.msra.mxu0 %v3375
        %3756 = vmatpush.bf16.msra.mxu0 %v3371
        %3757 = vmatpush.bf16.msra.mxu0 %v3367
        %3758 = vmatpush.bf16.msra.mxu0 %v3363
        %3759 = vmatmul.bf16.gmra.mxu0 %v2113
        %v3760 = vpop.f32.mrf.mxu0
        %v3761 = vadd.f32 %v3748, %v3760
        %v3762 = vpop.f32.mrf.mxu0
        %3763 = vdwg.mxu0
        %3764 = vmatpush.bf16.msra.mxu0 %v3168
        %3765 = vmatpush.bf16.msra.mxu0 %v3164
        %3766 = vmatpush.bf16.msra.mxu0 %v3160
        %3767 = vmatpush.bf16.msra.mxu0 %v3156
        %3768 = vmatpush.bf16.msra.mxu0 %v3152
        %3769 = vmatpush.bf16.msra.mxu0 %v3148
        %3770 = vmatpush.bf16.msra.mxu0 %v3144
        %3771 = vmatpush.bf16.msra.mxu0 %v3140
        %3772 = vmatmul.bf16.gmra.mxu0 %v2106
        %v3773 = vpop.f32.mrf.mxu0
        %v3774 = vadd.f32 %v3653, %v3773
        %v3775 = vpop.f32.mrf.mxu0
        %3776 = vdwg.mxu0
        %3777 = vmatpush.bf16.msra.mxu0 %v3200
        %3778 = vmatpush.bf16.msra.mxu0 %v3196
        %3779 = vmatpush.bf16.msra.mxu0 %v3192
        %3780 = vmatpush.bf16.msra.mxu0 %v3188
        %3781 = vmatpush.bf16.msra.mxu0 %v3184
        %3782 = vmatpush.bf16.msra.mxu0 %v3180
        %3783 = vmatpush.bf16.msra.mxu0 %v3176
        %3784 = vmatpush.bf16.msra.mxu0 %v3172
        %3785 = vmatmul.bf16.gmra.mxu0 %v2107
        %v3786 = vpop.f32.mrf.mxu0
        %v3787 = vadd.f32 %v3774, %v3786
        %v3788 = vpop.f32.mrf.mxu0
        %3789 = vdwg.mxu0
        %3790 = vmatpush.bf16.msra.mxu0 %v3232
        %3791 = vmatpush.bf16.msra.mxu0 %v3228
        %3792 = vmatpush.bf16.msra.mxu0 %v3224
        %3793 = vmatpush.bf16.msra.mxu0 %v3220
        %3794 = vmatpush.bf16.msra.mxu0 %v3216
        %3795 = vmatpush.bf16.msra.mxu0 %v3212
        %3796 = vmatpush.bf16.msra.mxu0 %v3208
        %3797 = vmatpush.bf16.msra.mxu0 %v3204
        %3798 = vmatmul.bf16.gmra.mxu0 %v2108
        %v3799 = vpop.f32.mrf.mxu0
        %v3800 = vadd.f32 %v3787, %v3799
        %v3801 = vpop.f32.mrf.mxu0
        %3802 = vdwg.mxu0
        %3803 = vmatpush.bf16.msra.mxu0 %v3264
        %3804 = vmatpush.bf16.msra.mxu0 %v3260
        %3805 = vmatpush.bf16.msra.mxu0 %v3256
        %3806 = vmatpush.bf16.msra.mxu0 %v3252
        %3807 = vmatpush.bf16.msra.mxu0 %v3248
        %3808 = vmatpush.bf16.msra.mxu0 %v3244
        %3809 = vmatpush.bf16.msra.mxu0 %v3240
        %3810 = vmatpush.bf16.msra.mxu0 %v3236
        %3811 = vmatmul.bf16.gmra.mxu0 %v2109
        %v3812 = vpop.f32.mrf.mxu0
        %v3813 = vadd.f32 %v3800, %v3812
        %v3814 = vpop.f32.mrf.mxu0
        %3815 = vdwg.mxu0
        %3816 = vmatpush.bf16.msra.mxu0 %v3296
        %3817 = vmatpush.bf16.msra.mxu0 %v3292
        %3818 = vmatpush.bf16.msra.mxu0 %v3288
        %3819 = vmatpush.bf16.msra.mxu0 %v3284
        %3820 = vmatpush.bf16.msra.mxu0 %v3280
        %3821 = vmatpush.bf16.msra.mxu0 %v3276
        %3822 = vmatpush.bf16.msra.mxu0 %v3272
        %3823 = vmatpush.bf16.msra.mxu0 %v3268
        %3824 = vmatmul.bf16.gmra.mxu0 %v2110
        %v3825 = vpop.f32.mrf.mxu0
        %v3826 = vadd.f32 %v3813, %v3825
        %v3827 = vpop.f32.mrf.mxu0
        %3828 = vdwg.mxu0
        %3829 = vmatpush.bf16.msra.mxu0 %v3328
        %3830 = vmatpush.bf16.msra.mxu0 %v3324
        %3831 = vmatpush.bf16.msra.mxu0 %v3320
        %3832 = vmatpush.bf16.msra.mxu0 %v3316
        %3833 = vmatpush.bf16.msra.mxu0 %v3312
        %3834 = vmatpush.bf16.msra.mxu0 %v3308
        %3835 = vmatpush.bf16.msra.mxu0 %v3304
        %3836 = vmatpush.bf16.msra.mxu0 %v3300
        %3837 = vmatmul.bf16.gmra.mxu0 %v2111
        %v3838 = vpop.f32.mrf.mxu0
        %v3839 = vadd.f32 %v3826, %v3838
        %v3840 = vpop.f32.mrf.mxu0
        %3841 = vdwg.mxu0
        %3842 = vmatpush.bf16.msra.mxu0 %v3360
        %3843 = vmatpush.bf16.msra.mxu0 %v3356
        %3844 = vmatpush.bf16.msra.mxu0 %v3352
        %3845 = vmatpush.bf16.msra.mxu0 %v3348
        %3846 = vmatpush.bf16.msra.mxu0 %v3344
        %3847 = vmatpush.bf16.msra.mxu0 %v3340
        %3848 = vmatpush.bf16.msra.mxu0 %v3336
        %3849 = vmatpush.bf16.msra.mxu0 %v3332
        %3850 = vmatmul.bf16.gmra.mxu0 %v2112
        %v3851 = vpop.f32.mrf.mxu0
        %v3852 = vadd.f32 %v3839, %v3851
        %v3853 = vpop.f32.mrf.mxu0
        %3854 = vdwg.mxu0
        %3855 = vmatpush.bf16.msra.mxu0 %v3392
        %3856 = vmatpush.bf16.msra.mxu0 %v3388
        %3857 = vmatpush.bf16.msra.mxu0 %v3384
        %3858 = vmatpush.bf16.msra.mxu0 %v3380
        %3859 = vmatpush.bf16.msra.mxu0 %v3376
        %3860 = vmatpush.bf16.msra.mxu0 %v3372
        %3861 = vmatpush.bf16.msra.mxu0 %v3368
        %3862 = vmatpush.bf16.msra.mxu0 %v3364
        %3863 = vmatmul.bf16.gmra.mxu0 %v2113
        %v3864 = vpop.f32.mrf.mxu0
        %v3865 = vadd.f32 %v3852, %v3864
        %v3866 = vpop.f32.mrf.mxu0
        %3867 = vdwg.mxu0
        %3868 = vmatpush.bf16.msra.mxu0 %v3169
        %3869 = vmatpush.bf16.msra.mxu0 %v3165
        %3870 = vmatpush.bf16.msra.mxu0 %v3161
        %3871 = vmatpush.bf16.msra.mxu0 %v3157
        %3872 = vmatpush.bf16.msra.mxu0 %v3153
        %3873 = vmatpush.bf16.msra.mxu0 %v3149
        %3874 = vmatpush.bf16.msra.mxu0 %v3145
        %3875 = vmatpush.bf16.msra.mxu0 %v3141
        %3876 = vmatmul.bf16.gmra.mxu0 %v2106
        %v3877 = vpop.f32.mrf.mxu0
        %v3878 = vadd.f32 %v3654, %v3877
        %v3879 = vpop.f32.mrf.mxu0
        %3880 = vdwg.mxu0
        %3881 = vmatpush.bf16.msra.mxu0 %v3201
        %3882 = vmatpush.bf16.msra.mxu0 %v3197
        %3883 = vmatpush.bf16.msra.mxu0 %v3193
        %3884 = vmatpush.bf16.msra.mxu0 %v3189
        %3885 = vmatpush.bf16.msra.mxu0 %v3185
        %3886 = vmatpush.bf16.msra.mxu0 %v3181
        %3887 = vmatpush.bf16.msra.mxu0 %v3177
        %3888 = vmatpush.bf16.msra.mxu0 %v3173
        %3889 = vmatmul.bf16.gmra.mxu0 %v2107
        %v3890 = vpop.f32.mrf.mxu0
        %v3891 = vadd.f32 %v3878, %v3890
        %v3892 = vpop.f32.mrf.mxu0
        %3893 = vdwg.mxu0
        %3894 = vmatpush.bf16.msra.mxu0 %v3233
        %3895 = vmatpush.bf16.msra.mxu0 %v3229
        %3896 = vmatpush.bf16.msra.mxu0 %v3225
        %3897 = vmatpush.bf16.msra.mxu0 %v3221
        %3898 = vmatpush.bf16.msra.mxu0 %v3217
        %3899 = vmatpush.bf16.msra.mxu0 %v3213
        %3900 = vmatpush.bf16.msra.mxu0 %v3209
        %3901 = vmatpush.bf16.msra.mxu0 %v3205
        %3902 = vmatmul.bf16.gmra.mxu0 %v2108
        %v3903 = vpop.f32.mrf.mxu0
        %v3904 = vadd.f32 %v3891, %v3903
        %v3905 = vpop.f32.mrf.mxu0
        %3906 = vdwg.mxu0
        %3907 = vmatpush.bf16.msra.mxu0 %v3265
        %3908 = vmatpush.bf16.msra.mxu0 %v3261
        %3909 = vmatpush.bf16.msra.mxu0 %v3257
        %3910 = vmatpush.bf16.msra.mxu0 %v3253
        %3911 = vmatpush.bf16.msra.mxu0 %v3249
        %3912 = vmatpush.bf16.msra.mxu0 %v3245
        %3913 = vmatpush.bf16.msra.mxu0 %v3241
        %3914 = vmatpush.bf16.msra.mxu0 %v3237
        %3915 = vmatmul.bf16.gmra.mxu0 %v2109
        %v3916 = vpop.f32.mrf.mxu0
        %v3917 = vadd.f32 %v3904, %v3916
        %v3918 = vpop.f32.mrf.mxu0
        %3919 = vdwg.mxu0
        %3920 = vmatpush.bf16.msra.mxu0 %v3297
        %3921 = vmatpush.bf16.msra.mxu0 %v3293
        %3922 = vmatpush.bf16.msra.mxu0 %v3289
        %3923 = vmatpush.bf16.msra.mxu0 %v3285
        %3924 = vmatpush.bf16.msra.mxu0 %v3281
        %3925 = vmatpush.bf16.msra.mxu0 %v3277
        %3926 = vmatpush.bf16.msra.mxu0 %v3273
        %3927 = vmatpush.bf16.msra.mxu0 %v3269
        %3928 = vmatmul.bf16.gmra.mxu0 %v2110
        %v3929 = vpop.f32.mrf.mxu0
        %v3930 = vadd.f32 %v3917, %v3929
        %v3931 = vpop.f32.mrf.mxu0
        %3932 = vdwg.mxu0
        %3933 = vmatpush.bf16.msra.mxu0 %v3329
        %3934 = vmatpush.bf16.msra.mxu0 %v3325
        %3935 = vmatpush.bf16.msra.mxu0 %v3321
        %3936 = vmatpush.bf16.msra.mxu0 %v3317
        %3937 = vmatpush.bf16.msra.mxu0 %v3313
        %3938 = vmatpush.bf16.msra.mxu0 %v3309
        %3939 = vmatpush.bf16.msra.mxu0 %v3305
        %3940 = vmatpush.bf16.msra.mxu0 %v3301
        %3941 = vmatmul.bf16.gmra.mxu0 %v2111
        %v3942 = vpop.f32.mrf.mxu0
        %v3943 = vadd.f32 %v3930, %v3942
        %v3944 = vpop.f32.mrf.mxu0
        %3945 = vdwg.mxu0
        %3946 = vmatpush.bf16.msra.mxu0 %v3361
        %3947 = vmatpush.bf16.msra.mxu0 %v3357
        %3948 = vmatpush.bf16.msra.mxu0 %v3353
        %3949 = vmatpush.bf16.msra.mxu0 %v3349
        %3950 = vmatpush.bf16.msra.mxu0 %v3345
        %3951 = vmatpush.bf16.msra.mxu0 %v3341
        %3952 = vmatpush.bf16.msra.mxu0 %v3337
        %3953 = vmatpush.bf16.msra.mxu0 %v3333
        %3954 = vmatmul.bf16.gmra.mxu0 %v2112
        %v3955 = vpop.f32.mrf.mxu0
        %v3956 = vadd.f32 %v3943, %v3955
        %v3957 = vpop.f32.mrf.mxu0
        %3958 = vdwg.mxu0
        %3959 = vmatpush.bf16.msra.mxu0 %v3393
        %3960 = vmatpush.bf16.msra.mxu0 %v3389
        %3961 = vmatpush.bf16.msra.mxu0 %v3385
        %3962 = vmatpush.bf16.msra.mxu0 %v3381
        %3963 = vmatpush.bf16.msra.mxu0 %v3377
        %3964 = vmatpush.bf16.msra.mxu0 %v3373
        %3965 = vmatpush.bf16.msra.mxu0 %v3369
        %3966 = vmatpush.bf16.msra.mxu0 %v3365
        %3967 = vmatmul.bf16.gmra.mxu0 %v2113
        %v3968 = vpop.f32.mrf.mxu0
        %v3969 = vadd.f32 %v3956, %v3968
        %v3970 = vpop.f32.mrf.mxu0
        %3971 = vdwg.mxu0
        %3972 = vmatpush.bf16.msra.mxu0 %v3170
        %3973 = vmatpush.bf16.msra.mxu0 %v3166
        %3974 = vmatpush.bf16.msra.mxu0 %v3162
        %3975 = vmatpush.bf16.msra.mxu0 %v3158
        %3976 = vmatpush.bf16.msra.mxu0 %v3154
        %3977 = vmatpush.bf16.msra.mxu0 %v3150
        %3978 = vmatpush.bf16.msra.mxu0 %v3146
        %3979 = vmatpush.bf16.msra.mxu0 %v3142
        %3980 = vmatmul.bf16.gmra.mxu0 %v2106
        %v3981 = vpop.f32.mrf.mxu0
        %v3982 = vadd.f32 %v3655, %v3981
        %v3983 = vpop.f32.mrf.mxu0
        %3984 = vdwg.mxu0
        %3985 = vmatpush.bf16.msra.mxu0 %v3202
        %3986 = vmatpush.bf16.msra.mxu0 %v3198
        %3987 = vmatpush.bf16.msra.mxu0 %v3194
        %3988 = vmatpush.bf16.msra.mxu0 %v3190
        %3989 = vmatpush.bf16.msra.mxu0 %v3186
        %3990 = vmatpush.bf16.msra.mxu0 %v3182
        %3991 = vmatpush.bf16.msra.mxu0 %v3178
        %3992 = vmatpush.bf16.msra.mxu0 %v3174
        %3993 = vmatmul.bf16.gmra.mxu0 %v2107
        %v3994 = vpop.f32.mrf.mxu0
        %v3995 = vadd.f32 %v3982, %v3994
        %v3996 = vpop.f32.mrf.mxu0
        %3997 = vdwg.mxu0
        %3998 = vmatpush.bf16.msra.mxu0 %v3234
        %3999 = vmatpush.bf16.msra.mxu0 %v3230
        %4000 = vmatpush.bf16.msra.mxu0 %v3226
        %4001 = vmatpush.bf16.msra.mxu0 %v3222
        %4002 = vmatpush.bf16.msra.mxu0 %v3218
        %4003 = vmatpush.bf16.msra.mxu0 %v3214
        %4004 = vmatpush.bf16.msra.mxu0 %v3210
        %4005 = vmatpush.bf16.msra.mxu0 %v3206
        %4006 = vmatmul.bf16.gmra.mxu0 %v2108
        %v4007 = vpop.f32.mrf.mxu0
        %v4008 = vadd.f32 %v3995, %v4007
        %v4009 = vpop.f32.mrf.mxu0
        %4010 = vdwg.mxu0
        %4011 = vmatpush.bf16.msra.mxu0 %v3266
        %4012 = vmatpush.bf16.msra.mxu0 %v3262
        %4013 = vmatpush.bf16.msra.mxu0 %v3258
        %4014 = vmatpush.bf16.msra.mxu0 %v3254
        %4015 = vmatpush.bf16.msra.mxu0 %v3250
        %4016 = vmatpush.bf16.msra.mxu0 %v3246
        %4017 = vmatpush.bf16.msra.mxu0 %v3242
        %4018 = vmatpush.bf16.msra.mxu0 %v3238
        %4019 = vmatmul.bf16.gmra.mxu0 %v2109
        %v4020 = vpop.f32.mrf.mxu0
        %v4021 = vadd.f32 %v4008, %v4020
        %v4022 = vpop.f32.mrf.mxu0
        %4023 = vdwg.mxu0
        %4024 = vmatpush.bf16.msra.mxu0 %v3298
        %4025 = vmatpush.bf16.msra.mxu0 %v3294
        %4026 = vmatpush.bf16.msra.mxu0 %v3290
        %4027 = vmatpush.bf16.msra.mxu0 %v3286
        %4028 = vmatpush.bf16.msra.mxu0 %v3282
        %4029 = vmatpush.bf16.msra.mxu0 %v3278
        %4030 = vmatpush.bf16.msra.mxu0 %v3274
        %4031 = vmatpush.bf16.msra.mxu0 %v3270
        %4032 = vmatmul.bf16.gmra.mxu0 %v2110
        %v4033 = vpop.f32.mrf.mxu0
        %v4034 = vadd.f32 %v4021, %v4033
        %v4035 = vpop.f32.mrf.mxu0
        %4036 = vdwg.mxu0
        %4037 = vmatpush.bf16.msra.mxu0 %v3330
        %4038 = vmatpush.bf16.msra.mxu0 %v3326
        %4039 = vmatpush.bf16.msra.mxu0 %v3322
        %4040 = vmatpush.bf16.msra.mxu0 %v3318
        %4041 = vmatpush.bf16.msra.mxu0 %v3314
        %4042 = vmatpush.bf16.msra.mxu0 %v3310
        %4043 = vmatpush.bf16.msra.mxu0 %v3306
        %4044 = vmatpush.bf16.msra.mxu0 %v3302
        %4045 = vmatmul.bf16.gmra.mxu0 %v2111
        %v4046 = vpop.f32.mrf.mxu0
        %v4047 = vadd.f32 %v4034, %v4046
        %v4048 = vpop.f32.mrf.mxu0
        %4049 = vdwg.mxu0
        %4050 = vmatpush.bf16.msra.mxu0 %v3362
        %4051 = vmatpush.bf16.msra.mxu0 %v3358
        %4052 = vmatpush.bf16.msra.mxu0 %v3354
        %4053 = vmatpush.bf16.msra.mxu0 %v3350
        %4054 = vmatpush.bf16.msra.mxu0 %v3346
        %4055 = vmatpush.bf16.msra.mxu0 %v3342
        %4056 = vmatpush.bf16.msra.mxu0 %v3338
        %4057 = vmatpush.bf16.msra.mxu0 %v3334
        %4058 = vmatmul.bf16.gmra.mxu0 %v2112
        %v4059 = vpop.f32.mrf.mxu0
        %v4060 = vadd.f32 %v4047, %v4059
        %v4061 = vpop.f32.mrf.mxu0
        %4062 = vdwg.mxu0
        %4063 = vmatpush.bf16.msra.mxu0 %v3394
        %4064 = vmatpush.bf16.msra.mxu0 %v3390
        %4065 = vmatpush.bf16.msra.mxu0 %v3386
        %4066 = vmatpush.bf16.msra.mxu0 %v3382
        %4067 = vmatpush.bf16.msra.mxu0 %v3378
        %4068 = vmatpush.bf16.msra.mxu0 %v3374
        %4069 = vmatpush.bf16.msra.mxu0 %v3370
        %4070 = vmatpush.bf16.msra.mxu0 %v3366
        %4071 = vmatmul.bf16.gmra.mxu0 %v2113
        %v4072 = vpop.f32.mrf.mxu0
        %v4073 = vadd.f32 %v4060, %v4072
        %v4074 = vpop.f32.mrf.mxu0
        %4075 = vdwg.mxu0
        %v4076 = vmax.f32 %v3761, 0.0
        %v4077 = vmax.f32 %v3865, 0.0
        %v4078 = vmax.f32 %v3969, 0.0
        %v4079 = vmax.f32 %v4073, 0.0
        %v4080 = vpack.c.bf16 %v4076, %v4076
        %v4081 = vpack.c.bf16 %v4077, %v4077
        %v4082 = vpack.c.bf16 %v4078, %v4078
        %v4083 = vpack.c.bf16 %v4079, %v4079
        %v4084 = vld [vmem:[#allocation7] sm:$0xff]
        %v4085 = vld [vmem:[#allocation7 + $0x8] sm:$0xff]
        %v4086 = vld [vmem:[#allocation7 + $0x10] sm:$0xff]
        %v4087 = vld [vmem:[#allocation7 + $0x18] sm:$0xff]
        %v4088 = vld [vmem:[#allocation7 + $0x20] sm:$0xff]
        %v4089 = vld [vmem:[#allocation7 + $0x28] sm:$0xff]
        %v4090 = vld [vmem:[#allocation7 + $0x30] sm:$0xff]
        %v4091 = vld [vmem:[#allocation7 + $0x38] sm:$0xff]
        %v4092 = vld [vmem:[#allocation7 + $0x40] sm:$0xff]
        %v4093 = vld [vmem:[#allocation7 + $0x48] sm:$0xff]
        %v4094 = vld [vmem:[#allocation7 + $0x50] sm:$0xff]
        %v4095 = vld [vmem:[#allocation7 + $0x58] sm:$0xff]
        %v4096 = vld [vmem:[#allocation7 + $0x60] sm:$0xff]
        %v4097 = vld [vmem:[#allocation7 + $0x68] sm:$0xff]
        %v4098 = vld [vmem:[#allocation7 + $0x70] sm:$0xff]
        %v4099 = vld [vmem:[#allocation7 + $0x78] sm:$0xff]
        %v4100 = vld [vmem:[#allocation7 + $0x80] sm:$0xff]
        %v4101 = vld [vmem:[#allocation7 + $0x88] sm:$0xff]
        %v4102 = vld [vmem:[#allocation7 + $0x90] sm:$0xff]
        %v4103 = vld [vmem:[#allocation7 + $0x98] sm:$0xff]
        %v4104 = vld [vmem:[#allocation7 + $0xa0] sm:$0xff]
        %v4105 = vld [vmem:[#allocation7 + $0xa8] sm:$0xff]
        %v4106 = vld [vmem:[#allocation7 + $0xb0] sm:$0xff]
        %v4107 = vld [vmem:[#allocation7 + $0xb8] sm:$0xff]
        %v4108 = vld [vmem:[#allocation7 + $0xc0] sm:$0xff]
        %v4109 = vld [vmem:[#allocation7 + $0xc8] sm:$0xff]
        %v4110 = vld [vmem:[#allocation7 + $0xd0] sm:$0xff]
        %v4111 = vld [vmem:[#allocation7 + $0xd8] sm:$0xff]
        %v4112 = vld [vmem:[#allocation7 + $0xe0] sm:$0xff]
        %v4113 = vld [vmem:[#allocation7 + $0xe8] sm:$0xff]
        %v4114 = vld [vmem:[#allocation7 + $0xf0] sm:$0xff]
        %v4115 = vld [vmem:[#allocation7 + $0xf8] sm:$0xff]
        %v4116 = vld [vmem:[#allocation7 + $0x100] sm:$0xff]
        %v4117 = vld [vmem:[#allocation7 + $0x108] sm:$0xff]
        %v4118 = vld [vmem:[#allocation7 + $0x110] sm:$0xff]
        %v4119 = vld [vmem:[#allocation7 + $0x118] sm:$0xff]
        %v4120 = vld [vmem:[#allocation7 + $0x120] sm:$0xff]
        %v4121 = vld [vmem:[#allocation7 + $0x128] sm:$0xff]
        %v4122 = vld [vmem:[#allocation7 + $0x130] sm:$0xff]
        %v4123 = vld [vmem:[#allocation7 + $0x138] sm:$0xff]
        %v4124 = vld [vmem:[#allocation7 + $0x140] sm:$0xff]
        %v4125 = vld [vmem:[#allocation7 + $0x148] sm:$0xff]
        %v4126 = vld [vmem:[#allocation7 + $0x150] sm:$0xff]
        %v4127 = vld [vmem:[#allocation7 + $0x158] sm:$0xff]
        %v4128 = vld [vmem:[#allocation7 + $0x160] sm:$0xff]
        %v4129 = vld [vmem:[#allocation7 + $0x168] sm:$0xff]
        %v4130 = vld [vmem:[#allocation7 + $0x170] sm:$0xff]
        %v4131 = vld [vmem:[#allocation7 + $0x178] sm:$0xff]
        %v4132 = vld [vmem:[#allocation7 + $0x180] sm:$0xff]
        %v4133 = vld [vmem:[#allocation7 + $0x188] sm:$0xff]
        %v4134 = vld [vmem:[#allocation7 + $0x190] sm:$0xff]
        %v4135 = vld [vmem:[#allocation7 + $0x198] sm:$0xff]
        %v4136 = vld [vmem:[#allocation7 + $0x1a0] sm:$0xff]
        %v4137 = vld [vmem:[#allocation7 + $0x1a8] sm:$0xff]
        %v4138 = vld [vmem:[#allocation7 + $0x1b0] sm:$0xff]
        %v4139 = vld [vmem:[#allocation7 + $0x1b8] sm:$0xff]
        %v4140 = vld [vmem:[#allocation7 + $0x1c0] sm:$0xff]
        %v4141 = vld [vmem:[#allocation7 + $0x1c8] sm:$0xff]
        %v4142 = vld [vmem:[#allocation7 + $0x1d0] sm:$0xff]
        %v4143 = vld [vmem:[#allocation7 + $0x1d8] sm:$0xff]
        %v4144 = vld [vmem:[#allocation7 + $0x1e0] sm:$0xff]
        %v4145 = vld [vmem:[#allocation7 + $0x1e8] sm:$0xff]
        %v4146 = vld [vmem:[#allocation7 + $0x1f0] sm:$0xff]
        %v4147 = vld [vmem:[#allocation7 + $0x1f8] sm:$0xff]
        %v4148 = vld [vmem:[%s10] sm:$0x3]
        %v4213 = vunpack.c.l.b16 %v4084
        %v4214 = vunpack.c.h.b16 %v4084
        %v4215 = vunpack.c.l.b16 %v4085
        %v4216 = vunpack.c.h.b16 %v4085
        %v4217 = vunpack.c.l.b16 %v4086
        %v4218 = vunpack.c.h.b16 %v4086
        %v4219 = vunpack.c.l.b16 %v4087
        %v4220 = vunpack.c.h.b16 %v4087
        %v4221 = vunpack.c.l.b16 %v4088
        %v4222 = vunpack.c.h.b16 %v4088
        %v4223 = vunpack.c.l.b16 %v4089
        %v4224 = vunpack.c.h.b16 %v4089
        %v4225 = vunpack.c.l.b16 %v4090
        %v4226 = vunpack.c.h.b16 %v4090
        %v4227 = vunpack.c.l.b16 %v4091
        %v4228 = vunpack.c.h.b16 %v4091
        %v4229 = vunpack.c.l.b16 %v4092
        %v4230 = vunpack.c.h.b16 %v4092
        %v4231 = vunpack.c.l.b16 %v4093
        %v4232 = vunpack.c.h.b16 %v4093
        %v4233 = vunpack.c.l.b16 %v4094
        %v4234 = vunpack.c.h.b16 %v4094
        %v4235 = vunpack.c.l.b16 %v4095
        %v4236 = vunpack.c.h.b16 %v4095
        %v4237 = vunpack.c.l.b16 %v4096
        %v4238 = vunpack.c.h.b16 %v4096
        %v4239 = vunpack.c.l.b16 %v4097
        %v4240 = vunpack.c.h.b16 %v4097
        %v4241 = vunpack.c.l.b16 %v4098
        %v4242 = vunpack.c.h.b16 %v4098
        %v4243 = vunpack.c.l.b16 %v4099
        %v4244 = vunpack.c.h.b16 %v4099
        %v4245 = vunpack.c.l.b16 %v4100
        %v4246 = vunpack.c.h.b16 %v4100
        %v4247 = vunpack.c.l.b16 %v4101
        %v4248 = vunpack.c.h.b16 %v4101
        %v4249 = vunpack.c.l.b16 %v4102
        %v4250 = vunpack.c.h.b16 %v4102
        %v4251 = vunpack.c.l.b16 %v4103
        %v4252 = vunpack.c.h.b16 %v4103
        %v4253 = vunpack.c.l.b16 %v4104
        %v4254 = vunpack.c.h.b16 %v4104
        %v4255 = vunpack.c.l.b16 %v4105
        %v4256 = vunpack.c.h.b16 %v4105
        %v4257 = vunpack.c.l.b16 %v4106
        %v4258 = vunpack.c.h.b16 %v4106
        %v4259 = vunpack.c.l.b16 %v4107
        %v4260 = vunpack.c.h.b16 %v4107
        %v4261 = vunpack.c.l.b16 %v4108
        %v4262 = vunpack.c.h.b16 %v4108
        %v4263 = vunpack.c.l.b16 %v4109
        %v4264 = vunpack.c.h.b16 %v4109
        %v4265 = vunpack.c.l.b16 %v4110
        %v4266 = vunpack.c.h.b16 %v4110
        %v4267 = vunpack.c.l.b16 %v4111
        %v4268 = vunpack.c.h.b16 %v4111
        %v4269 = vunpack.c.l.b16 %v4112
        %v4270 = vunpack.c.h.b16 %v4112
        %v4271 = vunpack.c.l.b16 %v4113
        %v4272 = vunpack.c.h.b16 %v4113
        %v4273 = vunpack.c.l.b16 %v4114
        %v4274 = vunpack.c.h.b16 %v4114
        %v4275 = vunpack.c.l.b16 %v4115
        %v4276 = vunpack.c.h.b16 %v4115
        %v4277 = vunpack.c.l.b16 %v4116
        %v4278 = vunpack.c.h.b16 %v4116
        %v4279 = vunpack.c.l.b16 %v4117
        %v4280 = vunpack.c.h.b16 %v4117
        %v4281 = vunpack.c.l.b16 %v4118
        %v4282 = vunpack.c.h.b16 %v4118
        %v4283 = vunpack.c.l.b16 %v4119
        %v4284 = vunpack.c.h.b16 %v4119
        %v4285 = vunpack.c.l.b16 %v4120
        %v4286 = vunpack.c.h.b16 %v4120
        %v4287 = vunpack.c.l.b16 %v4121
        %v4288 = vunpack.c.h.b16 %v4121
        %v4289 = vunpack.c.l.b16 %v4122
        %v4290 = vunpack.c.h.b16 %v4122
        %v4291 = vunpack.c.l.b16 %v4123
        %v4292 = vunpack.c.h.b16 %v4123
        %v4293 = vunpack.c.l.b16 %v4124
        %v4294 = vunpack.c.h.b16 %v4124
        %v4295 = vunpack.c.l.b16 %v4125
        %v4296 = vunpack.c.h.b16 %v4125
        %v4297 = vunpack.c.l.b16 %v4126
        %v4298 = vunpack.c.h.b16 %v4126
        %v4299 = vunpack.c.l.b16 %v4127
        %v4300 = vunpack.c.h.b16 %v4127
        %v4301 = vunpack.c.l.b16 %v4128
        %v4302 = vunpack.c.h.b16 %v4128
        %v4303 = vunpack.c.l.b16 %v4129
        %v4304 = vunpack.c.h.b16 %v4129
        %v4305 = vunpack.c.l.b16 %v4130
        %v4306 = vunpack.c.h.b16 %v4130
        %v4307 = vunpack.c.l.b16 %v4131
        %v4308 = vunpack.c.h.b16 %v4131
        %v4309 = vunpack.c.l.b16 %v4132
        %v4310 = vunpack.c.h.b16 %v4132
        %v4311 = vunpack.c.l.b16 %v4133
        %v4312 = vunpack.c.h.b16 %v4133
        %v4313 = vunpack.c.l.b16 %v4134
        %v4314 = vunpack.c.h.b16 %v4134
        %v4315 = vunpack.c.l.b16 %v4135
        %v4316 = vunpack.c.h.b16 %v4135
        %v4317 = vunpack.c.l.b16 %v4136
        %v4318 = vunpack.c.h.b16 %v4136
        %v4319 = vunpack.c.l.b16 %v4137
        %v4320 = vunpack.c.h.b16 %v4137
        %v4321 = vunpack.c.l.b16 %v4138
        %v4322 = vunpack.c.h.b16 %v4138
        %v4323 = vunpack.c.l.b16 %v4139
        %v4324 = vunpack.c.h.b16 %v4139
        %v4325 = vunpack.c.l.b16 %v4140
        %v4326 = vunpack.c.h.b16 %v4140
        %v4327 = vunpack.c.l.b16 %v4141
        %v4328 = vunpack.c.h.b16 %v4141
        %v4329 = vunpack.c.l.b16 %v4142
        %v4330 = vunpack.c.h.b16 %v4142
        %v4331 = vunpack.c.l.b16 %v4143
        %v4332 = vunpack.c.h.b16 %v4143
        %v4333 = vunpack.c.l.b16 %v4144
        %v4334 = vunpack.c.h.b16 %v4144
        %v4335 = vunpack.c.l.b16 %v4145
        %v4336 = vunpack.c.h.b16 %v4145
        %v4337 = vunpack.c.l.b16 %v4146
        %v4338 = vunpack.c.h.b16 %v4146
        %v4339 = vunpack.c.l.b16 %v4147
        %v4340 = vunpack.c.h.b16 %v4147
        %v4341 = vpack.c.b16 %v4215, %v4213
        %v4342 = vpack.c.b16 %v4216, %v4214
        %v4343 = vpack.c.b16 %v4219, %v4217
        %v4344 = vpack.c.b16 %v4220, %v4218
        %v4345 = vpack.c.b16 %v4223, %v4221
        %v4346 = vpack.c.b16 %v4224, %v4222
        %v4347 = vpack.c.b16 %v4227, %v4225
        %v4348 = vpack.c.b16 %v4228, %v4226
        %v4349 = vpack.c.b16 %v4231, %v4229
        %v4350 = vpack.c.b16 %v4232, %v4230
        %v4351 = vpack.c.b16 %v4235, %v4233
        %v4352 = vpack.c.b16 %v4236, %v4234
        %v4353 = vpack.c.b16 %v4239, %v4237
        %v4354 = vpack.c.b16 %v4240, %v4238
        %v4355 = vpack.c.b16 %v4243, %v4241
        %v4356 = vpack.c.b16 %v4244, %v4242
        %v4357 = vpack.c.b16 %v4247, %v4245
        %v4358 = vpack.c.b16 %v4248, %v4246
        %v4359 = vpack.c.b16 %v4251, %v4249
        %v4360 = vpack.c.b16 %v4252, %v4250
        %v4361 = vpack.c.b16 %v4255, %v4253
        %v4362 = vpack.c.b16 %v4256, %v4254
        %v4363 = vpack.c.b16 %v4259, %v4257
        %v4364 = vpack.c.b16 %v4260, %v4258
        %v4365 = vpack.c.b16 %v4263, %v4261
        %v4366 = vpack.c.b16 %v4264, %v4262
        %v4367 = vpack.c.b16 %v4267, %v4265
        %v4368 = vpack.c.b16 %v4268, %v4266
        %v4369 = vpack.c.b16 %v4271, %v4269
        %v4370 = vpack.c.b16 %v4272, %v4270
        %v4371 = vpack.c.b16 %v4275, %v4273
        %v4372 = vpack.c.b16 %v4276, %v4274
        %v4373 = vpack.c.b16 %v4279, %v4277
        %v4374 = vpack.c.b16 %v4280, %v4278
        %v4375 = vpack.c.b16 %v4283, %v4281
        %v4376 = vpack.c.b16 %v4284, %v4282
        %v4377 = vpack.c.b16 %v4287, %v4285
        %v4378 = vpack.c.b16 %v4288, %v4286
        %v4379 = vpack.c.b16 %v4291, %v4289
        %v4380 = vpack.c.b16 %v4292, %v4290
        %v4381 = vpack.c.b16 %v4295, %v4293
        %v4382 = vpack.c.b16 %v4296, %v4294
        %v4383 = vpack.c.b16 %v4299, %v4297
        %v4384 = vpack.c.b16 %v4300, %v4298
        %v4385 = vpack.c.b16 %v4303, %v4301
        %v4386 = vpack.c.b16 %v4304, %v4302
        %v4387 = vpack.c.b16 %v4307, %v4305
        %v4388 = vpack.c.b16 %v4308, %v4306
        %v4389 = vpack.c.b16 %v4311, %v4309
        %v4390 = vpack.c.b16 %v4312, %v4310
        %v4391 = vpack.c.b16 %v4315, %v4313
        %v4392 = vpack.c.b16 %v4316, %v4314
        %v4393 = vpack.c.b16 %v4319, %v4317
        %v4394 = vpack.c.b16 %v4320, %v4318
        %v4395 = vpack.c.b16 %v4323, %v4321
        %v4396 = vpack.c.b16 %v4324, %v4322
        %v4397 = vpack.c.b16 %v4327, %v4325
        %v4398 = vpack.c.b16 %v4328, %v4326
        %v4399 = vpack.c.b16 %v4331, %v4329
        %v4400 = vpack.c.b16 %v4332, %v4330
        %v4401 = vpack.c.b16 %v4335, %v4333
        %v4402 = vpack.c.b16 %v4336, %v4334
        %v4403 = vpack.c.b16 %v4339, %v4337
        %v4404 = vpack.c.b16 %v4340, %v4338
        %v4470 = vperm.slane %v4148, 0
        %v4471 = vperm.slane %v4148, 1
        %4474 = vmatpush.bf16.msra.mxu0 %v4355
        %4475 = vmatpush.bf16.msra.mxu0 %v4353
        %4476 = vmatpush.bf16.msra.mxu0 %v4351
        %4477 = vmatpush.bf16.msra.mxu0 %v4349
        %4478 = vmatpush.bf16.msra.mxu0 %v4347
        %4479 = vmatpush.bf16.msra.mxu0 %v4345
        %4480 = vmatpush.bf16.msra.mxu0 %v4343
        %4481 = vmatpush.bf16.msra.mxu0 %v4341
        %4482 = vmatmul.bf16.gmra.mxu0 %v4080
        %v4483 = vpop.f32.mrf.mxu0
        %v4484 = vadd.f32 %v4470, %v4483
        %v4485 = vpop.f32.mrf.mxu0
        %4486 = vdwg.mxu0
        %4487 = vmatpush.bf16.msra.mxu0 %v4371
        %4488 = vmatpush.bf16.msra.mxu0 %v4369
        %4489 = vmatpush.bf16.msra.mxu0 %v4367
        %4490 = vmatpush.bf16.msra.mxu0 %v4365
        %4491 = vmatpush.bf16.msra.mxu0 %v4363
        %4492 = vmatpush.bf16.msra.mxu0 %v4361
        %4493 = vmatpush.bf16.msra.mxu0 %v4359
        %4494 = vmatpush.bf16.msra.mxu0 %v4357
        %4495 = vmatmul.bf16.gmra.mxu0 %v4081
        %v4496 = vpop.f32.mrf.mxu0
        %v4497 = vadd.f32 %v4484, %v4496
        %v4498 = vpop.f32.mrf.mxu0
        %4499 = vdwg.mxu0
        %4500 = vmatpush.bf16.msra.mxu0 %v4387
        %4501 = vmatpush.bf16.msra.mxu0 %v4385
        %4502 = vmatpush.bf16.msra.mxu0 %v4383
        %4503 = vmatpush.bf16.msra.mxu0 %v4381
        %4504 = vmatpush.bf16.msra.mxu0 %v4379
        %4505 = vmatpush.bf16.msra.mxu0 %v4377
        %4506 = vmatpush.bf16.msra.mxu0 %v4375
        %4507 = vmatpush.bf16.msra.mxu0 %v4373
        %4508 = vmatmul.bf16.gmra.mxu0 %v4082
        %v4509 = vpop.f32.mrf.mxu0
        %v4510 = vadd.f32 %v4497, %v4509
        %v4511 = vpop.f32.mrf.mxu0
        %4512 = vdwg.mxu0
        %4513 = vmatpush.bf16.msra.mxu0 %v4403
        %4514 = vmatpush.bf16.msra.mxu0 %v4401
        %4515 = vmatpush.bf16.msra.mxu0 %v4399
        %4516 = vmatpush.bf16.msra.mxu0 %v4397
        %4517 = vmatpush.bf16.msra.mxu0 %v4395
        %4518 = vmatpush.bf16.msra.mxu0 %v4393
        %4519 = vmatpush.bf16.msra.mxu0 %v4391
        %4520 = vmatpush.bf16.msra.mxu0 %v4389
        %4521 = vmatmul.bf16.gmra.mxu0 %v4083
        %v4522 = vpop.f32.mrf.mxu0
        %v4523 = vadd.f32 %v4510, %v4522
        %v4524 = vpop.f32.mrf.mxu0
        %4525 = vdwg.mxu0
        %4526 = vmatpush.bf16.msra.mxu0 %v4356
        %4527 = vmatpush.bf16.msra.mxu0 %v4354
        %4528 = vmatpush.bf16.msra.mxu0 %v4352
        %4529 = vmatpush.bf16.msra.mxu0 %v4350
        %4530 = vmatpush.bf16.msra.mxu0 %v4348
        %4531 = vmatpush.bf16.msra.mxu0 %v4346
        %4532 = vmatpush.bf16.msra.mxu0 %v4344
        %4533 = vmatpush.bf16.msra.mxu0 %v4342
        %4534 = vmatmul.bf16.gmra.mxu0 %v4080
        %v4535 = vpop.f32.mrf.mxu0
        %v4536 = vadd.f32 %v4471, %v4535
        %v4537 = vpop.f32.mrf.mxu0
        %4538 = vdwg.mxu0
        %4539 = vmatpush.bf16.msra.mxu0 %v4372
        %4540 = vmatpush.bf16.msra.mxu0 %v4370
        %4541 = vmatpush.bf16.msra.mxu0 %v4368
        %4542 = vmatpush.bf16.msra.mxu0 %v4366
        %4543 = vmatpush.bf16.msra.mxu0 %v4364
        %4544 = vmatpush.bf16.msra.mxu0 %v4362
        %4545 = vmatpush.bf16.msra.mxu0 %v4360
        %4546 = vmatpush.bf16.msra.mxu0 %v4358
        %4547 = vmatmul.bf16.gmra.mxu0 %v4081
        %v4548 = vpop.f32.mrf.mxu0
        %v4549 = vadd.f32 %v4536, %v4548
        %v4550 = vpop.f32.mrf.mxu0
        %4551 = vdwg.mxu0
        %4552 = vmatpush.bf16.msra.mxu0 %v4388
        %4553 = vmatpush.bf16.msra.mxu0 %v4386
        %4554 = vmatpush.bf16.msra.mxu0 %v4384
        %4555 = vmatpush.bf16.msra.mxu0 %v4382
        %4556 = vmatpush.bf16.msra.mxu0 %v4380
        %4557 = vmatpush.bf16.msra.mxu0 %v4378
        %4558 = vmatpush.bf16.msra.mxu0 %v4376
        %4559 = vmatpush.bf16.msra.mxu0 %v4374
        %4560 = vmatmul.bf16.gmra.mxu0 %v4082
        %v4561 = vpop.f32.mrf.mxu0
        %v4562 = vadd.f32 %v4549, %v4561
        %v4563 = vpop.f32.mrf.mxu0
        %4564 = vdwg.mxu0
        %4565 = vmatpush.bf16.msra.mxu0 %v4404
        %4566 = vmatpush.bf16.msra.mxu0 %v4402
        %4567 = vmatpush.bf16.msra.mxu0 %v4400
        %4568 = vmatpush.bf16.msra.mxu0 %v4398
        %4569 = vmatpush.bf16.msra.mxu0 %v4396
        %4570 = vmatpush.bf16.msra.mxu0 %v4394
        %4571 = vmatpush.bf16.msra.mxu0 %v4392
        %4572 = vmatpush.bf16.msra.mxu0 %v4390
        %4573 = vmatmul.bf16.gmra.mxu0 %v4083
        %v4574 = vpop.f32.mrf.mxu0
        %v4575 = vadd.f32 %v4562, %v4574
        %v4576 = vpop.f32.mrf.mxu0
        %4577 = vdwg.mxu0
        %v4578 = vmax.f32 %v4523, 0.0
        %v4579 = vmax.f32 %v4575, 0.0
        %v4580 = vpack.c.bf16 %v4578, %v4578
        %v4581 = vpack.c.bf16 %v4579, %v4579
        %v4582 = vld [vmem:[%s11] sm:$0xf]
        %v4583 = vld [vmem:[%s11 + $0x4] sm:$0xf]
        %v4584 = vld [vmem:[%s11 + $0x8] sm:$0xf]
        %v4585 = vld [vmem:[%s11 + $0xc] sm:$0xf]
        %v4586 = vld [vmem:[%s11 + $0x10] sm:$0xf]
        %v4587 = vld [vmem:[%s11 + $0x14] sm:$0xf]
        %v4588 = vld [vmem:[%s11 + $0x18] sm:$0xf]
        %v4589 = vld [vmem:[%s11 + $0x1c] sm:$0xf]
        %v4590 = vld [vmem:[%s11 + $0x20] sm:$0xf]
        %v4591 = vld [vmem:[%s11 + $0x24] sm:$0xf]
        %v4592 = vld [vmem:[%s11 + $0x28] sm:$0xf]
        %v4593 = vld [vmem:[%s11 + $0x2c] sm:$0xf]
        %v4594 = vld [vmem:[%s11 + $0x30] sm:$0xf]
        %v4595 = vld [vmem:[%s11 + $0x34] sm:$0xf]
        %v4596 = vld [vmem:[%s11 + $0x38] sm:$0xf]
        %v4597 = vld [vmem:[%s11 + $0x3c] sm:$0xf]
        %v4598 = vld [vmem:[%s11 + $0x40] sm:$0xf]
        %v4599 = vld [vmem:[%s11 + $0x44] sm:$0xf]
        %v4600 = vld [vmem:[%s11 + $0x48] sm:$0xf]
        %v4601 = vld [vmem:[%s11 + $0x4c] sm:$0xf]
        %v4602 = vld [vmem:[%s11 + $0x50] sm:$0xf]
        %v4603 = vld [vmem:[%s11 + $0x54] sm:$0xf]
        %v4604 = vld [vmem:[%s11 + $0x58] sm:$0xf]
        %v4605 = vld [vmem:[%s11 + $0x5c] sm:$0xf]
        %v4606 = vld [vmem:[%s11 + $0x60] sm:$0xf]
        %v4607 = vld [vmem:[%s11 + $0x64] sm:$0xf]
        %v4608 = vld [vmem:[%s11 + $0x68] sm:$0xf]
        %v4609 = vld [vmem:[%s11 + $0x6c] sm:$0xf]
        %v4610 = vld [vmem:[%s11 + $0x70] sm:$0xf]
        %v4611 = vld [vmem:[%s11 + $0x74] sm:$0xf]
        %v4612 = vld [vmem:[%s11 + $0x78] sm:$0xf]
        %v4613 = vld [vmem:[%s11 + $0x7c] sm:$0xf]
        %v4614 = vld [vmem:[%s12] sm:$0x1]
        %v4647 = vunpack.c.l.b16 %v4582
        %v4648 = vunpack.c.l.b16 %v4583
        %v4649 = vunpack.c.l.b16 %v4584
        %v4650 = vunpack.c.l.b16 %v4585
        %v4651 = vunpack.c.l.b16 %v4586
        %v4652 = vunpack.c.l.b16 %v4587
        %v4653 = vunpack.c.l.b16 %v4588
        %v4654 = vunpack.c.l.b16 %v4589
        %v4655 = vunpack.c.l.b16 %v4590
        %v4656 = vunpack.c.l.b16 %v4591
        %v4657 = vunpack.c.l.b16 %v4592
        %v4658 = vunpack.c.l.b16 %v4593
        %v4659 = vunpack.c.l.b16 %v4594
        %v4660 = vunpack.c.l.b16 %v4595
        %v4661 = vunpack.c.l.b16 %v4596
        %v4662 = vunpack.c.l.b16 %v4597
        %v4663 = vunpack.c.l.b16 %v4598
        %v4664 = vunpack.c.l.b16 %v4599
        %v4665 = vunpack.c.l.b16 %v4600
        %v4666 = vunpack.c.l.b16 %v4601
        %v4667 = vunpack.c.l.b16 %v4602
        %v4668 = vunpack.c.l.b16 %v4603
        %v4669 = vunpack.c.l.b16 %v4604
        %v4670 = vunpack.c.l.b16 %v4605
        %v4671 = vunpack.c.l.b16 %v4606
        %v4672 = vunpack.c.l.b16 %v4607
        %v4673 = vunpack.c.l.b16 %v4608
        %v4674 = vunpack.c.l.b16 %v4609
        %v4675 = vunpack.c.l.b16 %v4610
        %v4676 = vunpack.c.l.b16 %v4611
        %v4677 = vunpack.c.l.b16 %v4612
        %v4678 = vunpack.c.l.b16 %v4613
        %v4679 = vpack.c.b16 %v4648, %v4647
        %v4680 = vpack.c.b16 %v4650, %v4649
        %v4681 = vpack.c.b16 %v4652, %v4651
        %v4682 = vpack.c.b16 %v4654, %v4653
        %v4683 = vpack.c.b16 %v4656, %v4655
        %v4684 = vpack.c.b16 %v4658, %v4657
        %v4685 = vpack.c.b16 %v4660, %v4659
        %v4686 = vpack.c.b16 %v4662, %v4661
        %v4687 = vpack.c.b16 %v4664, %v4663
        %v4688 = vpack.c.b16 %v4666, %v4665
        %v4689 = vpack.c.b16 %v4668, %v4667
        %v4690 = vpack.c.b16 %v4670, %v4669
        %v4691 = vpack.c.b16 %v4672, %v4671
        %v4692 = vpack.c.b16 %v4674, %v4673
        %v4693 = vpack.c.b16 %v4676, %v4675
        %v4694 = vpack.c.b16 %v4678, %v4677
        %4711 = vmatpush.bf16.msra.mxu0 %v4686
        %4712 = vmatpush.bf16.msra.mxu0 %v4685
        %4713 = vmatpush.bf16.msra.mxu0 %v4684
        %4714 = vmatpush.bf16.msra.mxu0 %v4683
        %4715 = vmatpush.bf16.msra.mxu0 %v4682
        %4716 = vmatpush.bf16.msra.mxu0 %v4681
        %4717 = vmatpush.bf16.msra.mxu0 %v4680
        %4718 = vmatpush.bf16.msra.mxu0 %v4679
        %4719 = vmatmul.bf16.gmra.mxu0 %v4580
        %v4720 = vpop.f32.mrf.mxu0
        %v4721 = vadd.f32 %v4614, %v4720
        %v4722 = vpop.f32.mrf.mxu0
        %4723 = vdwg.mxu0
        %4724 = vmatpush.bf16.msra.mxu0 %v4694
        %4725 = vmatpush.bf16.msra.mxu0 %v4693
        %4726 = vmatpush.bf16.msra.mxu0 %v4692
        %4727 = vmatpush.bf16.msra.mxu0 %v4691
        %4728 = vmatpush.bf16.msra.mxu0 %v4690
        %4729 = vmatpush.bf16.msra.mxu0 %v4689
        %4730 = vmatpush.bf16.msra.mxu0 %v4688
        %4731 = vmatpush.bf16.msra.mxu0 %v4687
        %4732 = vmatmul.bf16.gmra.mxu0 %v4581
        %v4733 = vpop.f32.mrf.mxu0
        %v4734 = vadd.f32 %v4721, %v4733
        %v4735 = vpop.f32.mrf.mxu0
        %4736 = vdwg.mxu0
        %4737 = vst [vmem:[%s510] sm:$0x1] %v4734
        %v4738 = vld [vmem:[%s522] sm:$0xff]
        %v4739 = vld [vmem:[%s522 + $0x8] sm:$0xff]
        %v4740 = vld [vmem:[%s522 + $0x10] sm:$0xff]
        %v4741 = vld [vmem:[%s522 + $0x18] sm:$0xff]
        %v4742 = vld [vmem:[%s522 + $0x20] sm:$0xff]
        %v4743 = vld [vmem:[%s522 + $0x28] sm:$0xff]
        %v4744 = vld [vmem:[%s522 + $0x30] sm:$0xff]
        %v4745 = vld [vmem:[%s522 + $0x38] sm:$0xff]
        %v4746 = vld [vmem:[%s522 + $0x40] sm:$0xff]
        %v4747 = vld [vmem:[%s522 + $0x48] sm:$0xff]
        %v4748 = vld [vmem:[%s522 + $0x50] sm:$0xff]
        %v4749 = vld [vmem:[%s522 + $0x58] sm:$0xff]
        %v4750 = vld [vmem:[%s522 + $0x60] sm:$0xff]
        %v4751 = vld [vmem:[%s522 + $0x68] sm:$0xff]
        %v4752 = vld [vmem:[%s522 + $0x70] sm:$0xff]
        %v4753 = vld [vmem:[%s522 + $0x78] sm:$0xff]
        %4755 = vset.pattern.permute.xlu0 0
        %4756 = vperm.xlu0 %4755, %v4738
        %v4757 = vpop.permute.xlu0 %4756
        %4760 = vset.pattern.permute.xlu0 0
        %4761 = vperm.xlu0 %4760, %v4739
        %v4762 = vpop.permute.xlu0 %4761
        %4765 = vset.pattern.permute.xlu0 0
        %4766 = vperm.xlu0 %4765, %v4740
        %v4767 = vpop.permute.xlu0 %4766
        %4770 = vset.pattern.permute.xlu0 0
        %4771 = vperm.xlu0 %4770, %v4741
        %v4772 = vpop.permute.xlu0 %4771
        %4775 = vset.pattern.permute.xlu0 0
        %4776 = vperm.xlu0 %4775, %v4742
        %v4777 = vpop.permute.xlu0 %4776
        %4780 = vset.pattern.permute.xlu0 0
        %4781 = vperm.xlu0 %4780, %v4743
        %v4782 = vpop.permute.xlu0 %4781
        %4785 = vset.pattern.permute.xlu0 0
        %4786 = vperm.xlu0 %4785, %v4744
        %v4787 = vpop.permute.xlu0 %4786
        %4790 = vset.pattern.permute.xlu0 0
        %4791 = vperm.xlu0 %4790, %v4745
        %v4792 = vpop.permute.xlu0 %4791
        %4795 = vset.pattern.permute.xlu0 0
        %4796 = vperm.xlu0 %4795, %v4746
        %v4797 = vpop.permute.xlu0 %4796
        %4800 = vset.pattern.permute.xlu0 0
        %4801 = vperm.xlu0 %4800, %v4747
        %v4802 = vpop.permute.xlu0 %4801
        %4805 = vset.pattern.permute.xlu0 0
        %4806 = vperm.xlu0 %4805, %v4748
        %v4807 = vpop.permute.xlu0 %4806
        %4810 = vset.pattern.permute.xlu0 0
        %4811 = vperm.xlu0 %4810, %v4749
        %v4812 = vpop.permute.xlu0 %4811
        %4815 = vset.pattern.permute.xlu0 0
        %4816 = vperm.xlu0 %4815, %v4750
        %v4817 = vpop.permute.xlu0 %4816
        %4820 = vset.pattern.permute.xlu0 0
        %4821 = vperm.xlu0 %4820, %v4751
        %v4822 = vpop.permute.xlu0 %4821
        %4825 = vset.pattern.permute.xlu0 0
        %4826 = vperm.xlu0 %4825, %v4752
        %v4827 = vpop.permute.xlu0 %4826
        %4830 = vset.pattern.permute.xlu0 0
        %4831 = vperm.xlu0 %4830, %v4753
        %v4832 = vpop.permute.xlu0 %4831
        %v4834 = vperm.slane %v4734, 0
        %v4835 = vmul.f32 %v4757, %v4834
        %v4836 = vmul.f32 %v4762, %v4834
        %v4837 = vmul.f32 %v4767, %v4834
        %v4838 = vmul.f32 %v4772, %v4834
        %v4839 = vmul.f32 %v4777, %v4834
        %v4840 = vmul.f32 %v4782, %v4834
        %v4841 = vmul.f32 %v4787, %v4834
        %v4842 = vmul.f32 %v4792, %v4834
        %v4843 = vmul.f32 %v4797, %v4834
        %v4844 = vmul.f32 %v4802, %v4834
        %v4845 = vmul.f32 %v4807, %v4834
        %v4846 = vmul.f32 %v4812, %v4834
        %v4847 = vmul.f32 %v4817, %v4834
        %v4848 = vmul.f32 %v4822, %v4834
        %v4849 = vmul.f32 %v4827, %v4834
        %v4850 = vmul.f32 %v4832, %v4834
        %4851 = vset.pattern.permute.xlu0 1
        %4852 = vperm.xlu0 %4851, %v4738
        %v4853 = vpop.permute.xlu0 %4852
        %4855 = vset.pattern.permute.xlu0 1
        %4856 = vperm.xlu0 %4855, %v4739
        %v4857 = vpop.permute.xlu0 %4856
        %4859 = vset.pattern.permute.xlu0 1
        %4860 = vperm.xlu0 %4859, %v4740
        %v4861 = vpop.permute.xlu0 %4860
        %4863 = vset.pattern.permute.xlu0 1
        %4864 = vperm.xlu0 %4863, %v4741
        %v4865 = vpop.permute.xlu0 %4864
        %4867 = vset.pattern.permute.xlu0 1
        %4868 = vperm.xlu0 %4867, %v4742
        %v4869 = vpop.permute.xlu0 %4868
        %4871 = vset.pattern.permute.xlu0 1
        %4872 = vperm.xlu0 %4871, %v4743
        %v4873 = vpop.permute.xlu0 %4872
        %4875 = vset.pattern.permute.xlu0 1
        %4876 = vperm.xlu0 %4875, %v4744
        %v4877 = vpop.permute.xlu0 %4876
        %4879 = vset.pattern.permute.xlu0 1
        %4880 = vperm.xlu0 %4879, %v4745
        %v4881 = vpop.permute.xlu0 %4880
        %4883 = vset.pattern.permute.xlu0 1
        %4884 = vperm.xlu0 %4883, %v4746
        %v4885 = vpop.permute.xlu0 %4884
        %4887 = vset.pattern.permute.xlu0 1
        %4888 = vperm.xlu0 %4887, %v4747
        %v4889 = vpop.permute.xlu0 %4888
        %4891 = vset.pattern.permute.xlu0 1
        %4892 = vperm.xlu0 %4891, %v4748
        %v4893 = vpop.permute.xlu0 %4892
        %4895 = vset.pattern.permute.xlu0 1
        %4896 = vperm.xlu0 %4895, %v4749
        %v4897 = vpop.permute.xlu0 %4896
        %4899 = vset.pattern.permute.xlu0 1
        %4900 = vperm.xlu0 %4899, %v4750
        %v4901 = vpop.permute.xlu0 %4900
        %4903 = vset.pattern.permute.xlu0 1
        %4904 = vperm.xlu0 %4903, %v4751
        %v4905 = vpop.permute.xlu0 %4904
        %4907 = vset.pattern.permute.xlu0 1
        %4908 = vperm.xlu0 %4907, %v4752
        %v4909 = vpop.permute.xlu0 %4908
        %4911 = vset.pattern.permute.xlu0 1
        %4912 = vperm.xlu0 %4911, %v4753
        %v4913 = vpop.permute.xlu0 %4912
        %v4915 = vmul.f32 %v4853, %v4834
        %v4916 = vmul.f32 %v4857, %v4834
        %v4917 = vmul.f32 %v4861, %v4834
        %v4918 = vmul.f32 %v4865, %v4834
        %v4919 = vmul.f32 %v4869, %v4834
        %v4920 = vmul.f32 %v4873, %v4834
        %v4921 = vmul.f32 %v4877, %v4834
        %v4922 = vmul.f32 %v4881, %v4834
        %v4923 = vmul.f32 %v4885, %v4834
        %v4924 = vmul.f32 %v4889, %v4834
        %v4925 = vmul.f32 %v4893, %v4834
        %v4926 = vmul.f32 %v4897, %v4834
        %v4927 = vmul.f32 %v4901, %v4834
        %v4928 = vmul.f32 %v4905, %v4834
        %v4929 = vmul.f32 %v4909, %v4834
        %v4930 = vmul.f32 %v4913, %v4834
        %4947 = vrot.lane.b32.xlu0 %v4915, 125
        %v4948 = vpop.permute.xlu0 %4947
        %4949 = vrot.lane.b32.xlu0 %v4916, 125
        %v4950 = vpop.permute.xlu0 %4949
        %4951 = vrot.lane.b32.xlu0 %v4917, 125
        %v4952 = vpop.permute.xlu0 %4951
        %4953 = vrot.lane.b32.xlu0 %v4918, 125
        %v4954 = vpop.permute.xlu0 %4953
        %4955 = vrot.lane.b32.xlu0 %v4919, 125
        %v4956 = vpop.permute.xlu0 %4955
        %4957 = vrot.lane.b32.xlu0 %v4920, 125
        %v4958 = vpop.permute.xlu0 %4957
        %4959 = vrot.lane.b32.xlu0 %v4921, 125
        %v4960 = vpop.permute.xlu0 %4959
        %4961 = vrot.lane.b32.xlu0 %v4922, 125
        %v4962 = vpop.permute.xlu0 %4961
        %4963 = vrot.lane.b32.xlu0 %v4923, 125
        %v4964 = vpop.permute.xlu0 %4963
        %4965 = vrot.lane.b32.xlu0 %v4924, 125
        %v4966 = vpop.permute.xlu0 %4965
        %4967 = vrot.lane.b32.xlu0 %v4925, 125
        %v4968 = vpop.permute.xlu0 %4967
        %4969 = vrot.lane.b32.xlu0 %v4926, 125
        %v4970 = vpop.permute.xlu0 %4969
        %4971 = vrot.lane.b32.xlu0 %v4927, 125
        %v4972 = vpop.permute.xlu0 %4971
        %4973 = vrot.lane.b32.xlu0 %v4928, 125
        %v4974 = vpop.permute.xlu0 %4973
        %4975 = vrot.lane.b32.xlu0 %v4929, 125
        %v4976 = vpop.permute.xlu0 %4975
        %4977 = vrot.lane.b32.xlu0 %v4930, 125
        %v4978 = vpop.permute.xlu0 %4977
        %v4995 = vadd.f32 %v4835, %v4948
        %v4996 = vadd.f32 %v4836, %v4950
        %v4997 = vadd.f32 %v4837, %v4952
        %v4998 = vadd.f32 %v4838, %v4954
        %v4999 = vadd.f32 %v4839, %v4956
        %v5000 = vadd.f32 %v4840, %v4958
        %v5001 = vadd.f32 %v4841, %v4960
        %v5002 = vadd.f32 %v4842, %v4962
        %v5003 = vadd.f32 %v4843, %v4964
        %v5004 = vadd.f32 %v4844, %v4966
        %v5005 = vadd.f32 %v4845, %v4968
        %v5006 = vadd.f32 %v4846, %v4970
        %v5007 = vadd.f32 %v4847, %v4972
        %v5008 = vadd.f32 %v4848, %v4974
        %v5009 = vadd.f32 %v4849, %v4976
        %v5010 = vadd.f32 %v4850, %v4978
        %5011 = vset.pattern.permute.xlu0 2
        %5012 = vperm.xlu0 %5011, %v4738
        %v5013 = vpop.permute.xlu0 %5012
        %5015 = vset.pattern.permute.xlu0 2
        %5016 = vperm.xlu0 %5015, %v4739
        %v5017 = vpop.permute.xlu0 %5016
        %5019 = vset.pattern.permute.xlu0 2
        %5020 = vperm.xlu0 %5019, %v4740
        %v5021 = vpop.permute.xlu0 %5020
        %5023 = vset.pattern.permute.xlu0 2
        %5024 = vperm.xlu0 %5023, %v4741
        %v5025 = vpop.permute.xlu0 %5024
        %5027 = vset.pattern.permute.xlu0 2
        %5028 = vperm.xlu0 %5027, %v4742
        %v5029 = vpop.permute.xlu0 %5028
        %5031 = vset.pattern.permute.xlu0 2
        %5032 = vperm.xlu0 %5031, %v4743
        %v5033 = vpop.permute.xlu0 %5032
        %5035 = vset.pattern.permute.xlu0 2
        %5036 = vperm.xlu0 %5035, %v4744
        %v5037 = vpop.permute.xlu0 %5036
        %5039 = vset.pattern.permute.xlu0 2
        %5040 = vperm.xlu0 %5039, %v4745
        %v5041 = vpop.permute.xlu0 %5040
        %5043 = vset.pattern.permute.xlu0 2
        %5044 = vperm.xlu0 %5043, %v4746
        %v5045 = vpop.permute.xlu0 %5044
        %5047 = vset.pattern.permute.xlu0 2
        %5048 = vperm.xlu0 %5047, %v4747
        %v5049 = vpop.permute.xlu0 %5048
        %5051 = vset.pattern.permute.xlu0 2
        %5052 = vperm.xlu0 %5051, %v4748
        %v5053 = vpop.permute.xlu0 %5052
        %5055 = vset.pattern.permute.xlu0 2
        %5056 = vperm.xlu0 %5055, %v4749
        %v5057 = vpop.permute.xlu0 %5056
        %5059 = vset.pattern.permute.xlu0 2
        %5060 = vperm.xlu0 %5059, %v4750
        %v5061 = vpop.permute.xlu0 %5060
        %5063 = vset.pattern.permute.xlu0 2
        %5064 = vperm.xlu0 %5063, %v4751
        %v5065 = vpop.permute.xlu0 %5064
        %5067 = vset.pattern.permute.xlu0 2
        %5068 = vperm.xlu0 %5067, %v4752
        %v5069 = vpop.permute.xlu0 %5068
        %5071 = vset.pattern.permute.xlu0 2
        %5072 = vperm.xlu0 %5071, %v4753
        %v5073 = vpop.permute.xlu0 %5072
        %v5075 = vmul.f32 %v5013, %v4834
        %v5076 = vmul.f32 %v5017, %v4834
        %v5077 = vmul.f32 %v5021, %v4834
        %v5078 = vmul.f32 %v5025, %v4834
        %v5079 = vmul.f32 %v5029, %v4834
        %v5080 = vmul.f32 %v5033, %v4834
        %v5081 = vmul.f32 %v5037, %v4834
        %v5082 = vmul.f32 %v5041, %v4834
        %v5083 = vmul.f32 %v5045, %v4834
        %v5084 = vmul.f32 %v5049, %v4834
        %v5085 = vmul.f32 %v5053, %v4834
        %v5086 = vmul.f32 %v5057, %v4834
        %v5087 = vmul.f32 %v5061, %v4834
        %v5088 = vmul.f32 %v5065, %v4834
        %v5089 = vmul.f32 %v5069, %v4834
        %v5090 = vmul.f32 %v5073, %v4834
        %5107 = vrot.lane.b32.xlu0 %v5075, 122
        %v5108 = vpop.permute.xlu0 %5107
        %5109 = vrot.lane.b32.xlu0 %v5076, 122
        %v5110 = vpop.permute.xlu0 %5109
        %5111 = vrot.lane.b32.xlu0 %v5077, 122
        %v5112 = vpop.permute.xlu0 %5111
        %5113 = vrot.lane.b32.xlu0 %v5078, 122
        %v5114 = vpop.permute.xlu0 %5113
        %5115 = vrot.lane.b32.xlu0 %v5079, 122
        %v5116 = vpop.permute.xlu0 %5115
        %5117 = vrot.lane.b32.xlu0 %v5080, 122
        %v5118 = vpop.permute.xlu0 %5117
        %5119 = vrot.lane.b32.xlu0 %v5081, 122
        %v5120 = vpop.permute.xlu0 %5119
        %5121 = vrot.lane.b32.xlu0 %v5082, 122
        %v5122 = vpop.permute.xlu0 %5121
        %5123 = vrot.lane.b32.xlu0 %v5083, 122
        %v5124 = vpop.permute.xlu0 %5123
        %5125 = vrot.lane.b32.xlu0 %v5084, 122
        %v5126 = vpop.permute.xlu0 %5125
        %5127 = vrot.lane.b32.xlu0 %v5085, 122
        %v5128 = vpop.permute.xlu0 %5127
        %5129 = vrot.lane.b32.xlu0 %v5086, 122
        %v5130 = vpop.permute.xlu0 %5129
        %5131 = vrot.lane.b32.xlu0 %v5087, 122
        %v5132 = vpop.permute.xlu0 %5131
        %5133 = vrot.lane.b32.xlu0 %v5088, 122
        %v5134 = vpop.permute.xlu0 %5133
        %5135 = vrot.lane.b32.xlu0 %v5089, 122
        %v5136 = vpop.permute.xlu0 %5135
        %5137 = vrot.lane.b32.xlu0 %v5090, 122
        %v5138 = vpop.permute.xlu0 %5137
        %v5155 = vadd.f32 %v4995, %v5108
        %v5156 = vadd.f32 %v4996, %v5110
        %v5157 = vadd.f32 %v4997, %v5112
        %v5158 = vadd.f32 %v4998, %v5114
        %v5159 = vadd.f32 %v4999, %v5116
        %v5160 = vadd.f32 %v5000, %v5118
        %v5161 = vadd.f32 %v5001, %v5120
        %v5162 = vadd.f32 %v5002, %v5122
        %v5163 = vadd.f32 %v5003, %v5124
        %v5164 = vadd.f32 %v5004, %v5126
        %v5165 = vadd.f32 %v5005, %v5128
        %v5166 = vadd.f32 %v5006, %v5130
        %v5167 = vadd.f32 %v5007, %v5132
        %v5168 = vadd.f32 %v5008, %v5134
        %v5169 = vadd.f32 %v5009, %v5136
        %v5170 = vadd.f32 %v5010, %v5138
        %vm5171 = vcmask 23552
        %5172 = vst.msk [vmem:[%s527] sm:$0xff] %vm5171, %v5155
        %5173 = vst.msk [vmem:[%s527 + $0x8] sm:$0xff] %vm5171, %v5156
        %5174 = vst.msk [vmem:[%s527 + $0x10] sm:$0xff] %vm5171, %v5157
        %5175 = vst.msk [vmem:[%s527 + $0x18] sm:$0xff] %vm5171, %v5158
        %5176 = vst.msk [vmem:[%s527 + $0x20] sm:$0xff] %vm5171, %v5159
        %5177 = vst.msk [vmem:[%s527 + $0x28] sm:$0xff] %vm5171, %v5160
        %5178 = vst.msk [vmem:[%s527 + $0x30] sm:$0xff] %vm5171, %v5161
        %5179 = vst.msk [vmem:[%s527 + $0x38] sm:$0xff] %vm5171, %v5162
        %5180 = vst.msk [vmem:[%s527 + $0x40] sm:$0xff] %vm5171, %v5163
        %5181 = vst.msk [vmem:[%s527 + $0x48] sm:$0xff] %vm5171, %v5164
        %5182 = vst.msk [vmem:[%s527 + $0x50] sm:$0xff] %vm5171, %v5165
        %5183 = vst.msk [vmem:[%s527 + $0x58] sm:$0xff] %vm5171, %v5166
        %5184 = vst.msk [vmem:[%s527 + $0x60] sm:$0xff] %vm5171, %v5167
        %5185 = vst.msk [vmem:[%s527 + $0x68] sm:$0xff] %vm5171, %v5168
        %5186 = vst.msk [vmem:[%s527 + $0x70] sm:$0xff] %vm5171, %v5169
        %5187 = vst.msk [vmem:[%s527 + $0x78] sm:$0xff] %vm5171, %v5170
        %s5188 = sand.u32 %s317, 1
        %s5189 = scalar_lea.sflag [#allocation4], %s5188
        %s5190 = sand.u32 %s317, 1
        %s5191 = scalar_lea.vmem [#allocation8], %s5190
        %p5192 = scmp.lt.s32.totalorder %s31, 1
        %s5193 = scalar_select %p5192, %s31, 1
        %s5194 = smul.addr %s5193, 16
        %s5195 = smul.addr %s5194, 8
        %s5196 = scalar_lea.vmem %s14, %s5195
        // Predicated region
        $region85: #{tpu_custom_call.1} parent=71 // pred_check
          %p5197 = pneg %p327
        $region86: #{tpu_custom_call.1} parent=71 // pred_check_branch
          %5199 = sbr.rel (%p5197) target = $region88
        $region87: #{tpu_custom_call.1} parent=71 // pred_region
          %5201 = vsyncadd %s5189, 0
          %s5202 = scalar_lea.hbm %s13, %s31
          %s5204 = sshll.u32 %s5191, 4
          %s5205 = int_to_ptr.vmem [resolvable:$true] %s5204
          %s5206 = sshll.u32 %s5202, 4
          %s5207 = int_to_ptr.hbm [resolvable:$true] %s5206
          %5209 = dma.vmem_to_hbm [thread:$0]  %s5205, 16, %s5207, %s5189
        $region88: #{tpu_custom_call.1} parent=71 // pred_fallthru
          _
        // Predicated region
        $region89: #{tpu_custom_call.1} parent=71 // pred_check
          %p5210 = pneg %p353
        $region90: #{tpu_custom_call.1} parent=71 // pred_check_branch
          %5212 = sbr.rel (%p5210) target = $region92
        $region91: #{tpu_custom_call.1} parent=71 // pred_region
          _
        $region92: #{tpu_custom_call.1} parent=71 // pred_fallthru
          _
      $region72: #{tpu_custom_call.1} parent=5 // pred_fallthru
        _
      %p5213 = scmp.le.s32.totalorder 2, %s26
      // Predicated region
      $region93: #{tpu_custom_call.1} parent=5 // pred_check
        %p5214 = pneg %p5213
      $region94: #{tpu_custom_call.1} parent=5 // pred_check_branch
        %5216 = sbr.rel (%p5214) target = $region96
      $region95: #{tpu_custom_call.1} parent=5 // pred_region
        %s5217 = ssub.s32 %s26, 2
        // Predicated region
        $region97: #{tpu_custom_call.1} parent=95 // pred_check
          %p5218 = pneg %p333
        $region98: #{tpu_custom_call.1} parent=95 // pred_check_branch
          %5220 = sbr.rel (%p5218) target = $region100
        $region99: #{tpu_custom_call.1} parent=95 // pred_region
          %s5221 = sand.u32 %s318, 1
          %s5222 = scalar_lea.sflag [#allocation4], %s5221
          %s5223 = sand.u32 %s318, 1
          %s5224 = scalar_lea.vmem [#allocation8], %s5223
          %5226 = dma.done %s5222, 16
        $region100: #{tpu_custom_call.1} parent=95 // pred_fallthru
          _
        // Predicated region
        $region101: #{tpu_custom_call.1} parent=95 // pred_check
          %p5227 = pneg %p359
        $region102: #{tpu_custom_call.1} parent=95 // pred_check_branch
          %5229 = sbr.rel (%p5227) target = $region104
        $region103: #{tpu_custom_call.1} parent=95 // pred_region
          %p5230 = scmp.lt.s32.totalorder %s32, 1
          %s5231 = scalar_select %p5230, %s32, 1
          %s5232 = smul.addr %s5231, 16
          %s5233 = smul.addr %s5232, 8
          %s5234 = scalar_lea.vmem %s14, %s5233
        $region104: #{tpu_custom_call.1} parent=95 // pred_fallthru
          _
      $region96: #{tpu_custom_call.1} parent=5 // pred_fallthru
        _
    $region6: #{tpu_custom_call.1} parent=1 // loop_footer
      %s30 = sadd.s32 1, %s26
    $region7: #{tpu_custom_call.1} parent=1 // loop_footer_branch
      %25 = sbr.rel target = $region3
    $region8: #{tpu_custom_call.1} parent=1 // loop_exit
      _
    %5235 = vsyncpa [#allocation3], 1
    %s5236 = scalar_lea.sflag [#allocation3], 1
    %5237 = vsyncpa %s5236, 1
    %5238 = vsyncpa [#allocation6], 1
    %5239 = vsyncpa [#allocation4], 1
    %s5240 = scalar_lea.sflag [#allocation4], 1
    %5241 = vsyncpa %s5240, 1

</llo_original>
